<compile_context>
chip_gen: v6e
topology: v6e:2x2x1
jax: 0.10.0
libtpu: 0.0.40
codegen_flags: <defaults>
</compile_context>

<pallas_src>
import functools

import jax
import jax.numpy as jnp
from jax import lax
from jax.experimental import pallas as pl
from jax.experimental.pallas import tpu as pltpu

BN_EPS = 1e-5
TANH_TM = 128          # row tile for the (largest-M) final tanh layer


# ------------------------------ Pallas kernels -------------------------------

def _bn_relu_layer_kernel(a_ref, w_ref, gb_ref, o_ref, *, eps, n_valid):
    """One BN decoder layer, fused in a single invocation.

    a_ref:  (P, M, K) patch tensor (P = #sub-pixel phases, 1 for stride-1)
    w_ref:  (P, K, C) weights
    gb_ref: (2, C)    stacked [gamma; beta]
    o_ref:  (P, M, C) activated output

    matmul -> per-channel batch statistics (over all P*M rows) -> BN affine
    -> ReLU.  The phase loop is unrolled; each phase's raw output is parked in
    o_ref (VMEM) so only one phase is live in vregs at a time.
    """
    nph = a_ref.shape[0]
    c = o_ref.shape[-1]
    s = jnp.zeros((1, c), jnp.float32)
    sq = jnp.zeros((1, c), jnp.float32)
    for p in range(nph):                       # static, unrolled
        y = jnp.dot(a_ref[p], w_ref[p], preferred_element_type=jnp.float32)
        o_ref[p] = y                           # park raw activations in VMEM
        s = s + jnp.sum(y, axis=0, keepdims=True)
        sq = sq + jnp.sum(y * y, axis=0, keepdims=True)
    inv_n = 1.0 / n_valid
    mean = s * inv_n
    var = jnp.maximum(sq * inv_n - mean * mean, 0.0)
    scale = gb_ref[0:1, :] * lax.rsqrt(var + eps)
    shift = gb_ref[1:2, :] - mean * scale
    for p in range(nph):                       # in-place BN + ReLU epilogue
        o_ref[p] = jnp.maximum(o_ref[p] * scale + shift, 0.0)


def _matmul_tanh_kernel(a_ref, w_ref, o_ref):
    """Final layer tile: matmul + tanh epilogue."""
    o_ref[...] = jnp.tanh(
        jnp.dot(a_ref[...], w_ref[...], preferred_element_type=jnp.float32))


# ------------------------------ layer wrappers --------------------------------

def bn_relu_layer(a, w, gamma, beta, *, n_valid):
    """a: [P, M, K], w: [P, K, C] -> BatchNorm(batch stats) + ReLU of a@w.

    Single grid step; full-dimension (unpadded) blocks.  NOTE: assumes the
    whole layer (patches + weights + output) fits in VMEM, which holds by a
    wide margin at these shapes; larger configs would need a tiled grid.
    """
    P, M, K = a.shape
    C = w.shape[-1]
    gb = jnp.stack([gamma, beta]).astype(jnp.float32)          # (2, C)
    kern = functools.partial(_bn_relu_layer_kernel, eps=BN_EPS,
                             n_valid=float(n_valid))
    return pl.pallas_call(
        kern,
        out_shape=jax.ShapeDtypeStruct((P, M, C), jnp.float32),
        grid_spec=pltpu.PrefetchScalarGridSpec(
            num_scalar_prefetch=0,
            grid=(1,),
            in_specs=[pl.BlockSpec((P, M, K), lambda i: (0, 0, 0)),
                      pl.BlockSpec((P, K, C), lambda i: (0, 0, 0)),
                      pl.BlockSpec((2, C), lambda i: (0, 0))],
            out_specs=pl.BlockSpec((P, M, C), lambda i: (0, 0, 0))),
        compiler_params=pltpu.CompilerParams(
            dimension_semantics=("arbitrary",)),
    )(a, w, gb)


def matmul_tanh(a, w):
    """a: [M, K], w: [K, C] -> tanh(a @ w), row-tiled with a parallel grid."""
    M, K = a.shape
    C = w.shape[-1]
    tm = TANH_TM if (M % TANH_TM == 0 and M > TANH_TM) else M
    return pl.pallas_call(
        _matmul_tanh_kernel,
        out_shape=jax.ShapeDtypeStruct((M, C), jnp.float32),
        grid_spec=pltpu.PrefetchScalarGridSpec(
            num_scalar_prefetch=0,
            grid=(M // tm,),
            in_specs=[pl.BlockSpec((tm, K), lambda i: (i, 0)),
                      pl.BlockSpec((K, C), lambda i: (0, 0))],
            out_specs=pl.BlockSpec((tm, C), lambda i: (i, 0))),
        compiler_params=pltpu.CompilerParams(
            dimension_semantics=("parallel",)),
    )(a, w)


# --------------------------------- JAX glue ----------------------------------

def _ct_stride1_im2col(x, w, pad):
    """ConvTranspose2d, stride=1: im2col over the (k-1-pad)-padded input.
    x: NHWC, w: (Cin, Cout, kH, kW) (PyTorch ConvTranspose2d layout)."""
    N, H, W, Cin = x.shape
    _, Cout, kH, kW = w.shape
    ph, pw = kH - 1 - pad, kW - 1 - pad
    Hout, Wout = H + kH - 1 - 2 * pad, W + kW - 1 - 2 * pad
    xp = jnp.pad(x, ((0, 0), (ph, ph), (pw, pw), (0, 0)))
    cols = [xp[:, kh:kh + Hout, kw:kw + Wout, :]
            for kh in range(kH) for kw in range(kW)]
    patches = jnp.concatenate(cols, axis=-1).reshape(N * Hout * Wout,
                                                     kH * kW * Cin)
    w_mat = jnp.flip(w, axis=(2, 3)).transpose(2, 3, 0, 1).reshape(
        kH * kW * Cin, Cout)
    return patches[None], w_mat[None], (N, Hout, Wout, Cout)


def _ct_stride2_phases(x, w):
    """ConvTranspose2d(k=4, s=2, p=1) sub-pixel decomposition.

    out[2m+rh, 2n+rw] = sum_{a,b in {0,1}} x[m+rh-1+a, n+rw-1+b]
                        * w[..., 3-rh-2a, 3-rw-2b]
    -> 4 output phases, each an exact 2x2 convolution of the 1-padded input
    (no structurally-zero patch columns)."""
    N, H, W, Cin = x.shape
    _, Cout, _, _ = w.shape
    xp = jnp.pad(x, ((0, 0), (1, 1), (1, 1), (0, 0)))
    a_list, w_list = [], []
    for rh in range(2):
        for rw in range(2):
            cols, rows = [], []
            for da in range(2):
                for db in range(2):
                    cols.append(xp[:, rh + da:rh + da + H,
                                   rw + db:rw + db + W, :])
                    rows.append(w[:, :, 3 - rh - 2 * da, 3 - rw - 2 * db])
            a_list.append(jnp.concatenate(cols, axis=-1)
                          .reshape(N * H * W, 4 * Cin))
            w_list.append(jnp.concatenate(rows, axis=0))        # (4*Cin, Cout)
    return jnp.stack(a_list), jnp.stack(w_list), (N, H, W, Cout)


def decoder_forward_pallas(z, convs, bns):
    """Forward pass of `decoder` (NCHW in / NCHW out); NHWC inside."""
    x = jnp.transpose(z.astype(jnp.float32), (0, 2, 3, 1))      # -> NHWC once

    # layers 1-2: ConvT(k=4, s=1, p=1) + BN + ReLU
    for li in range(2):
        a, wm, (N, Ho, Wo, Cout) = _ct_stride1_im2col(x, convs[li], pad=1)
        gamma, beta = bns[li]
        y = bn_relu_layer(a, wm, gamma, beta, n_valid=N * Ho * Wo)
        x = y[0].reshape(N, Ho, Wo, Cout)

    # layers 3-4: ConvT(k=4, s=2, p=1) + BN + ReLU  (4-phase sub-pixel)
    for li in range(2, 4):
        a, wm, (N, H, W, Cout) = _ct_stride2_phases(x, convs[li])
        gamma, beta = bns[li]
        y = bn_relu_layer(a, wm, gamma, beta, n_valid=4 * N * H * W)
        # pixel-shuffle: phase p = rh*2 + rw  ->  out[2m+rh, 2n+rw]
        x = (y.reshape(2, 2, N, H, W, Cout)
              .transpose(2, 3, 0, 4, 1, 5)
              .reshape(N, 2 * H, 2 * W, Cout))

    # layer 5: ConvT(k=5, s=5, p=0) + Tanh  (non-overlapping -> plain matmul)
    w5 = convs[4]
    Cin, Cout, k, _ = w5.shape
    N, H, W, _ = x.shape
    a = x.reshape(N * H * W, Cin)
    wm = w5.transpose(0, 2, 3, 1).reshape(Cin, k * k * Cout)   # cols (r,c,co)
    y = matmul_tanh(a, wm)
    x = (y.reshape(N, H, W, k, k, Cout)
          .transpose(0, 1, 3, 2, 4, 5)
          .reshape(N, k * H, k * W, Cout))

    return jnp.transpose(x, (0, 3, 1, 2))       # NHWC -> NCHW only at the end


# ---------------------- pure-JAX reference (for checking) --------------------

def decoder_forward_reference(z, convs, bns):
    strides = [1, 1, 2, 2, 5]
    pads = [1, 1, 1, 1, 0]
    x = z.astype(jnp.float32)
    for li in range(5):
        w = convs[li]
        k = w.shape[2]
        s, p = strides[li], pads[li]
        w_conv = jnp.flip(w, axis=(2, 3)).transpose(1, 0, 2, 3)  # (Cout,Cin,k,k)
        x = lax.conv_general_dilated(
            x, w_conv, window_strides=(1, 1),
            padding=[(k - 1 - p, k - 1 - p)] * 2,
            lhs_dilation=(s, s),
            dimension_numbers=('NCHW', 'OIHW', 'NCHW'))
        if li < 4:
            gamma, beta = bns[li]
            mean = x.mean(axis=(0, 2, 3), keepdims=True)
            var = ((x - mean) ** 2).mean(axis=(0, 2, 3), keepdims=True)
            x = (x - mean) * lax.rsqrt(var + BN_EPS)
            x = x * gamma.reshape(1, -1, 1, 1) + beta.reshape(1, -1, 1, 1)
            x = jnp.maximum(x, 0.0)
        else:
            x = jnp.tanh(x)
    return x


# ------------------------- deterministic parameters --------------------------

def init_params(key, z_size=2, channel=3, nf=8):
    """Synthetic deterministic init mirroring weight_init (xavier_normal_ for
    convs, N(1, 0.02) weight / zero bias for BatchNorm)."""
    layer_io = [(z_size, nf * 8, 4), (nf * 8, nf * 4, 4), (nf * 4, nf * 2, 4),
                (nf * 2, nf, 4), (nf, channel, 5)]
    convs, bns = [], []
    for cin, cout, k in layer_io:
        key, k1 = jax.random.split(key)
        std = (2.0 / ((cin + cout) * k * k)) ** 0.5      # xavier_normal_
        convs.append(std * jax.random.normal(k1, (cin, cout, k, k), jnp.float32))
    for cout in [nf * 8, nf * 4, nf * 2, nf]:
        key, k1 = jax.random.split(key)
        gamma = 1.0 + 0.02 * jax.random.normal(k1, (cout,), jnp.float32)
        beta = jnp.zeros((cout,), jnp.float32)
        bns.append((gamma, beta))
    return convs, bns


if __name__ == "__main__":
    key = jax.random.PRNGKey(0)
    kp, kz = jax.random.split(key)
    # small config: z_size=2, channel=3, num_filters=8, batch=2, spatial 2x2
    convs, bns = init_params(kp, z_size=2, channel=3, nf=8)
    z = jax.random.normal(kz, (2, 2, 2, 2), jnp.float32)   # (N, z_size, H, W)

    fwd = jax.jit(decoder_forward_pallas)
    out = jax.block_until_ready(fwd(z, convs, bns))

    ref = jax.block_until_ready(decoder_forward_reference(z, convs, bns))

    assert out.shape == (2, 3, 80, 80), out.shape
    max_err = float(jnp.max(jnp.abs(out - ref)))
    assert max_err < 2e-3, f"max abs error vs reference: {max_err}"
    print("KERNEL_OK")
</pallas_src>

<mosaic_0001>
module attributes {stable_mosaic.version = 11 : i64} {
  func.func @_bn_relu_layer_kernel(%arg0: i32, %arg1: memref<1x18x32xf32, #tpu.memory_space<vmem>>, %arg2: memref<1x32x64xf32, #tpu.memory_space<vmem>>, %arg3: memref<2x64xf32, #tpu.memory_space<vmem>>, %arg4: memref<1x18x64xf32, #tpu.memory_space<vmem>>) attributes {dimension_semantics = [#tpu.dimension_semantics<arbitrary>], iteration_bounds = array<i64: 1>, scalar_prefetch = 0 : i64, scratch_operands = 0 : i64, tpu.core_type = #tpu.core_type<tc>, window_params = [{pipeline_mode = #tpu.pipeline_mode<synchronous>, transform_indices = @transform_0, window_bounds = array<i64: 1, 18, 32>}, {pipeline_mode = #tpu.pipeline_mode<synchronous>, transform_indices = @transform_1, window_bounds = array<i64: 1, 32, 64>}, {pipeline_mode = #tpu.pipeline_mode<synchronous>, transform_indices = @transform_2, window_bounds = array<i64: 2, 64>}, {pipeline_mode = #tpu.pipeline_mode<synchronous>, transform_indices = @transform_3, window_bounds = array<i64: 1, 18, 64>}]} {
    %cst = arith.constant 0.000000e+00 : f32
    %0 = vector.broadcast %cst : f32 to vector<1x64xf32>
    %cst_0 = arith.constant 0.000000e+00 : f32
    %1 = vector.broadcast %cst_0 : f32 to vector<1x64xf32>
    %c0 = arith.constant 0 : index
    %c0_1 = arith.constant 0 : index
    %c0_2 = arith.constant 0 : index
    %2 = vector.load %arg1[%c0, %c0_1, %c0_2] : memref<1x18x32xf32, #tpu.memory_space<vmem>>, vector<1x18x32xf32>
    %3 = vector.shape_cast %2 : vector<1x18x32xf32> to vector<18x32xf32>
    %c0_3 = arith.constant 0 : index
    %c0_4 = arith.constant 0 : index
    %c0_5 = arith.constant 0 : index
    %4 = vector.load %arg2[%c0_3, %c0_4, %c0_5] : memref<1x32x64xf32, #tpu.memory_space<vmem>>, vector<1x32x64xf32>
    %5 = vector.shape_cast %4 : vector<1x32x64xf32> to vector<32x64xf32>
    %cst_6 = arith.constant dense<0.000000e+00> : vector<18x64xf32>
    %6 = tpu.matmul %3, %5, %cst_6 {dimension_numbers = #tpu.dot_dimension_numbers<[1], [0], [0], [1], [0, 0, 1, 1], [], []>} : vector<18x32xf32>, vector<32x64xf32>, vector<18x64xf32> -> vector<18x64xf32>
    %c0_7 = arith.constant 0 : index
    %c0_8 = arith.constant 0 : index
    %c0_9 = arith.constant 0 : index
    %7 = vector.load %arg4[%c0_7, %c0_8, %c0_9] : memref<1x18x64xf32, #tpu.memory_space<vmem>>, vector<1x18x64xf32>
    %8 = vector.shape_cast %7 : vector<1x18x64xf32> to vector<18x64xf32>
    %9 = vector.shape_cast %6 : vector<18x64xf32> to vector<1x18x64xf32>
    tpu.vector_store %arg4[%c0_7, %c0_8, %c0_9], %9 {strides = array<i32>} : memref<1x18x64xf32, #tpu.memory_space<vmem>>, vector<1x18x64xf32>,
    %cst_10 = arith.constant dense<0.000000e+00> : vector<64xf32>
    %10 = vector.multi_reduction <add>, %6, %cst_10 [0] : vector<18x64xf32> to vector<64xf32>
    %11 = vector.shape_cast %10 : vector<64xf32> to vector<1x64xf32>
    %12 = arith.addf %0, %11 : vector<1x64xf32>
    %13 = arith.mulf %6, %6 : vector<18x64xf32>
    %cst_11 = arith.constant dense<0.000000e+00> : vector<64xf32>
    %14 = vector.multi_reduction <add>, %13, %cst_11 [0] : vector<18x64xf32> to vector<64xf32>
    %15 = vector.shape_cast %14 : vector<64xf32> to vector<1x64xf32>
    %16 = arith.addf %1, %15 : vector<1x64xf32>
    %cst_12 = arith.constant 0.055555556 : f32
    %17 = vector.broadcast %cst_12 : f32 to vector<1x64xf32>
    %18 = arith.mulf %12, %17 : vector<1x64xf32>
    %cst_13 = arith.constant 0.055555556 : f32
    %19 = vector.broadcast %cst_13 : f32 to vector<1x64xf32>
    %20 = arith.mulf %16, %19 : vector<1x64xf32>
    %21 = arith.mulf %18, %18 : vector<1x64xf32>
    %22 = arith.subf %20, %21 : vector<1x64xf32>
    %cst_14 = arith.constant 0.000000e+00 : f32
    %23 = vector.broadcast %cst_14 : f32 to vector<1x64xf32>
    %24 = arith.maximumf %22, %23 : vector<1x64xf32>
    %c0_15 = arith.constant 0 : index
    %c0_16 = arith.constant 0 : index
    %25 = vector.load %arg3[%c0_15, %c0_16] : memref<2x64xf32, #tpu.memory_space<vmem>>, vector<1x64xf32>
    %cst_17 = arith.constant 9.99999974E-6 : f32
    %26 = vector.broadcast %cst_17 : f32 to vector<1x64xf32>
    %27 = arith.addf %24, %26 : vector<1x64xf32>
    %28 = math.rsqrt %27 : vector<1x64xf32>
    %29 = arith.mulf %25, %28 : vector<1x64xf32>
    %c1 = arith.constant 1 : index
    %c0_18 = arith.constant 0 : index
    %30 = vector.load %arg3[%c1, %c0_18] : memref<2x64xf32, #tpu.memory_space<vmem>>, vector<1x64xf32>
    %31 = arith.mulf %18, %29 : vector<1x64xf32>
    %32 = arith.subf %30, %31 : vector<1x64xf32>
    %c0_19 = arith.constant 0 : index
    %c0_20 = arith.constant 0 : index
    %c0_21 = arith.constant 0 : index
    %33 = vector.load %arg4[%c0_19, %c0_20, %c0_21] : memref<1x18x64xf32, #tpu.memory_space<vmem>>, vector<1x18x64xf32>
    %34 = vector.shape_cast %33 : vector<1x18x64xf32> to vector<18x64xf32>
    %35 = vector.broadcast %29 : vector<1x64xf32> to vector<18x64xf32>
    %36 = arith.mulf %34, %35 : vector<18x64xf32>
    %37 = vector.broadcast %32 : vector<1x64xf32> to vector<18x64xf32>
    %38 = arith.addf %36, %37 : vector<18x64xf32>
    %cst_22 = arith.constant 0.000000e+00 : f32
    %39 = vector.broadcast %cst_22 : f32 to vector<18x64xf32>
    %40 = arith.maximumf %38, %39 : vector<18x64xf32>
    %c0_23 = arith.constant 0 : index
    %c0_24 = arith.constant 0 : index
    %c0_25 = arith.constant 0 : index
    %41 = vector.load %arg4[%c0_23, %c0_24, %c0_25] : memref<1x18x64xf32, #tpu.memory_space<vmem>>, vector<1x18x64xf32>
    %42 = vector.shape_cast %41 : vector<1x18x64xf32> to vector<18x64xf32>
    %43 = vector.shape_cast %40 : vector<18x64xf32> to vector<1x18x64xf32>
    tpu.vector_store %arg4[%c0_23, %c0_24, %c0_25], %43 {strides = array<i32>} : memref<1x18x64xf32, #tpu.memory_space<vmem>>, vector<1x18x64xf32>,
    return
  }
  func.func @transform_0(%arg0: i32) -> (i32, i32, i32) {
    %c0_i32 = arith.constant 0 : i32
    %c0_i32_0 = arith.constant 0 : i32
    %c0_i32_1 = arith.constant 0 : i32
    %c0_i32_2 = arith.constant 0 : i32
    return %c0_i32, %c0_i32_0, %c0_i32_1 : i32, i32, i32
  }
  func.func @transform_1(%arg0: i32) -> (i32, i32, i32) {
    %c0_i32 = arith.constant 0 : i32
    %c0_i32_0 = arith.constant 0 : i32
    %c0_i32_1 = arith.constant 0 : i32
    %c0_i32_2 = arith.constant 0 : i32
    return %c0_i32, %c0_i32_0, %c0_i32_1 : i32, i32, i32
  }
  func.func @transform_2(%arg0: i32) -> (i32, i32) {
    %c0_i32 = arith.constant 0 : i32
    %c0_i32_0 = arith.constant 0 : i32
    %c0_i32_1 = arith.constant 0 : i32
    return %c0_i32, %c0_i32_0 : i32, i32
  }
  func.func @transform_3(%arg0: i32) -> (i32, i32, i32) {
    %c0_i32 = arith.constant 0 : i32
    %c0_i32_0 = arith.constant 0 : i32
    %c0_i32_1 = arith.constant 0 : i32
    %c0_i32_2 = arith.constant 0 : i32
    return %c0_i32, %c0_i32_0, %c0_i32_1 : i32, i32, i32
  }
}

module attributes {stable_mosaic.version = 11 : i64} {
  func.func @_bn_relu_layer_kernel(%arg0: i32, %arg1: memref<1x32x1024xf32, #tpu.memory_space<vmem>>, %arg2: memref<1x1024x32xf32, #tpu.memory_space<vmem>>, %arg3: memref<2x32xf32, #tpu.memory_space<vmem>>, %arg4: memref<1x32x32xf32, #tpu.memory_space<vmem>>) attributes {dimension_semantics = [#tpu.dimension_semantics<arbitrary>], iteration_bounds = array<i64: 1>, scalar_prefetch = 0 : i64, scratch_operands = 0 : i64, tpu.core_type = #tpu.core_type<tc>, window_params = [{pipeline_mode = #tpu.pipeline_mode<synchronous>, transform_indices = @transform_0, window_bounds = array<i64: 1, 32, 1024>}, {pipeline_mode = #tpu.pipeline_mode<synchronous>, transform_indices = @transform_1, window_bounds = array<i64: 1, 1024, 32>}, {pipeline_mode = #tpu.pipeline_mode<synchronous>, transform_indices = @transform_2, window_bounds = array<i64: 2, 32>}, {pipeline_mode = #tpu.pipeline_mode<synchronous>, transform_indices = @transform_3, window_bounds = array<i64: 1, 32, 32>}]} {
    %cst = arith.constant 0.000000e+00 : f32
    %0 = vector.broadcast %cst : f32 to vector<1x32xf32>
    %cst_0 = arith.constant 0.000000e+00 : f32
    %1 = vector.broadcast %cst_0 : f32 to vector<1x32xf32>
    %c0 = arith.constant 0 : index
    %c0_1 = arith.constant 0 : index
    %c0_2 = arith.constant 0 : index
    %2 = vector.load %arg1[%c0, %c0_1, %c0_2] : memref<1x32x1024xf32, #tpu.memory_space<vmem>>, vector<1x32x1024xf32>
    %3 = vector.shape_cast %2 : vector<1x32x1024xf32> to vector<32x1024xf32>
    %c0_3 = arith.constant 0 : index
    %c0_4 = arith.constant 0 : index
    %c0_5 = arith.constant 0 : index
    %4 = vector.load %arg2[%c0_3, %c0_4, %c0_5] : memref<1x1024x32xf32, #tpu.memory_space<vmem>>, vector<1x1024x32xf32>
    %5 = vector.shape_cast %4 : vector<1x1024x32xf32> to vector<1024x32xf32>
    %cst_6 = arith.constant dense<0.000000e+00> : vector<32x32xf32>
    %6 = tpu.matmul %3, %5, %cst_6 {dimension_numbers = #tpu.dot_dimension_numbers<[1], [0], [0], [1], [0, 0, 1, 1], [], []>} : vector<32x1024xf32>, vector<1024x32xf32>, vector<32x32xf32> -> vector<32x32xf32>
    %c0_7 = arith.constant 0 : index
    %c0_8 = arith.constant 0 : index
    %c0_9 = arith.constant 0 : index
    %7 = vector.load %arg4[%c0_7, %c0_8, %c0_9] : memref<1x32x32xf32, #tpu.memory_space<vmem>>, vector<1x32x32xf32>
    %8 = vector.shape_cast %7 : vector<1x32x32xf32> to vector<32x32xf32>
    %9 = vector.shape_cast %6 : vector<32x32xf32> to vector<1x32x32xf32>
    tpu.vector_store %arg4[%c0_7, %c0_8, %c0_9], %9 {strides = array<i32>} : memref<1x32x32xf32, #tpu.memory_space<vmem>>, vector<1x32x32xf32>,
    %cst_10 = arith.constant dense<0.000000e+00> : vector<32xf32>
    %10 = vector.multi_reduction <add>, %6, %cst_10 [0] : vector<32x32xf32> to vector<32xf32>
    %11 = vector.shape_cast %10 : vector<32xf32> to vector<1x32xf32>
    %12 = arith.addf %0, %11 : vector<1x32xf32>
    %13 = arith.mulf %6, %6 : vector<32x32xf32>
    %cst_11 = arith.constant dense<0.000000e+00> : vector<32xf32>
    %14 = vector.multi_reduction <add>, %13, %cst_11 [0] : vector<32x32xf32> to vector<32xf32>
    %15 = vector.shape_cast %14 : vector<32xf32> to vector<1x32xf32>
    %16 = arith.addf %1, %15 : vector<1x32xf32>
    %cst_12 = arith.constant 3.125000e-02 : f32
    %17 = vector.broadcast %cst_12 : f32 to vector<1x32xf32>
    %18 = arith.mulf %12, %17 : vector<1x32xf32>
    %cst_13 = arith.constant 3.125000e-02 : f32
    %19 = vector.broadcast %cst_13 : f32 to vector<1x32xf32>
    %20 = arith.mulf %16, %19 : vector<1x32xf32>
    %21 = arith.mulf %18, %18 : vector<1x32xf32>
    %22 = arith.subf %20, %21 : vector<1x32xf32>
    %cst_14 = arith.constant 0.000000e+00 : f32
    %23 = vector.broadcast %cst_14 : f32 to vector<1x32xf32>
    %24 = arith.maximumf %22, %23 : vector<1x32xf32>
    %c0_15 = arith.constant 0 : index
    %c0_16 = arith.constant 0 : index
    %25 = vector.load %arg3[%c0_15, %c0_16] : memref<2x32xf32, #tpu.memory_space<vmem>>, vector<1x32xf32>
    %cst_17 = arith.constant 9.99999974E-6 : f32
    %26 = vector.broadcast %cst_17 : f32 to vector<1x32xf32>
    %27 = arith.addf %24, %26 : vector<1x32xf32>
    %28 = math.rsqrt %27 : vector<1x32xf32>
    %29 = arith.mulf %25, %28 : vector<1x32xf32>
    %c1 = arith.constant 1 : index
    %c0_18 = arith.constant 0 : index
    %30 = vector.load %arg3[%c1, %c0_18] : memref<2x32xf32, #tpu.memory_space<vmem>>, vector<1x32xf32>
    %31 = arith.mulf %18, %29 : vector<1x32xf32>
    %32 = arith.subf %30, %31 : vector<1x32xf32>
    %c0_19 = arith.constant 0 : index
    %c0_20 = arith.constant 0 : index
    %c0_21 = arith.constant 0 : index
    %33 = vector.load %arg4[%c0_19, %c0_20, %c0_21] : memref<1x32x32xf32, #tpu.memory_space<vmem>>, vector<1x32x32xf32>
    %34 = vector.shape_cast %33 : vector<1x32x32xf32> to vector<32x32xf32>
    %35 = vector.broadcast %29 : vector<1x32xf32> to vector<32x32xf32>
    %36 = arith.mulf %34, %35 : vector<32x32xf32>
    %37 = vector.broadcast %32 : vector<1x32xf32> to vector<32x32xf32>
    %38 = arith.addf %36, %37 : vector<32x32xf32>
    %cst_22 = arith.constant 0.000000e+00 : f32
    %39 = vector.broadcast %cst_22 : f32 to vector<32x32xf32>
    %40 = arith.maximumf %38, %39 : vector<32x32xf32>
    %c0_23 = arith.constant 0 : index
    %c0_24 = arith.constant 0 : index
    %c0_25 = arith.constant 0 : index
    %41 = vector.load %arg4[%c0_23, %c0_24, %c0_25] : memref<1x32x32xf32, #tpu.memory_space<vmem>>, vector<1x32x32xf32>
    %42 = vector.shape_cast %41 : vector<1x32x32xf32> to vector<32x32xf32>
    %43 = vector.shape_cast %40 : vector<32x32xf32> to vector<1x32x32xf32>
    tpu.vector_store %arg4[%c0_23, %c0_24, %c0_25], %43 {strides = array<i32>} : memref<1x32x32xf32, #tpu.memory_space<vmem>>, vector<1x32x32xf32>,
    return
  }
  func.func @transform_0(%arg0: i32) -> (i32, i32, i32) {
    %c0_i32 = arith.constant 0 : i32
    %c0_i32_0 = arith.constant 0 : i32
    %c0_i32_1 = arith.constant 0 : i32
    %c0_i32_2 = arith.constant 0 : i32
    return %c0_i32, %c0_i32_0, %c0_i32_1 : i32, i32, i32
  }
  func.func @transform_1(%arg0: i32) -> (i32, i32, i32) {
    %c0_i32 = arith.constant 0 : i32
    %c0_i32_0 = arith.constant 0 : i32
    %c0_i32_1 = arith.constant 0 : i32
    %c0_i32_2 = arith.constant 0 : i32
    return %c0_i32, %c0_i32_0, %c0_i32_1 : i32, i32, i32
  }
  func.func @transform_2(%arg0: i32) -> (i32, i32) {
    %c0_i32 = arith.constant 0 : i32
    %c0_i32_0 = arith.constant 0 : i32
    %c0_i32_1 = arith.constant 0 : i32
    return %c0_i32, %c0_i32_0 : i32, i32
  }
  func.func @transform_3(%arg0: i32) -> (i32, i32, i32) {
    %c0_i32 = arith.constant 0 : i32
    %c0_i32_0 = arith.constant 0 : i32
    %c0_i32_1 = arith.constant 0 : i32
    %c0_i32_2 = arith.constant 0 : i32
    return %c0_i32, %c0_i32_0, %c0_i32_1 : i32, i32, i32
  }
}

module attributes {stable_mosaic.version = 11 : i64} {
  func.func @_bn_relu_layer_kernel(%arg0: i32, %arg1: memref<4x32x128xf32, #tpu.memory_space<vmem>>, %arg2: memref<4x128x16xf32, #tpu.memory_space<vmem>>, %arg3: memref<2x16xf32, #tpu.memory_space<vmem>>, %arg4: memref<4x32x16xf32, #tpu.memory_space<vmem>>) attributes {dimension_semantics = [#tpu.dimension_semantics<arbitrary>], iteration_bounds = array<i64: 1>, scalar_prefetch = 0 : i64, scratch_operands = 0 : i64, tpu.core_type = #tpu.core_type<tc>, window_params = [{pipeline_mode = #tpu.pipeline_mode<synchronous>, transform_indices = @transform_0, window_bounds = array<i64: 4, 32, 128>}, {pipeline_mode = #tpu.pipeline_mode<synchronous>, transform_indices = @transform_1, window_bounds = array<i64: 4, 128, 16>}, {pipeline_mode = #tpu.pipeline_mode<synchronous>, transform_indices = @transform_2, window_bounds = array<i64: 2, 16>}, {pipeline_mode = #tpu.pipeline_mode<synchronous>, transform_indices = @transform_3, window_bounds = array<i64: 4, 32, 16>}]} {
    %cst = arith.constant 0.000000e+00 : f32
    %0 = vector.broadcast %cst : f32 to vector<1x16xf32>
    %cst_0 = arith.constant 0.000000e+00 : f32
    %1 = vector.broadcast %cst_0 : f32 to vector<1x16xf32>
    %c0 = arith.constant 0 : index
    %c0_1 = arith.constant 0 : index
    %c0_2 = arith.constant 0 : index
    %2 = vector.load %arg1[%c0, %c0_1, %c0_2] : memref<4x32x128xf32, #tpu.memory_space<vmem>>, vector<1x32x128xf32>
    %3 = vector.shape_cast %2 : vector<1x32x128xf32> to vector<32x128xf32>
    %c0_3 = arith.constant 0 : index
    %c0_4 = arith.constant 0 : index
    %c0_5 = arith.constant 0 : index
    %4 = vector.load %arg2[%c0_3, %c0_4, %c0_5] : memref<4x128x16xf32, #tpu.memory_space<vmem>>, vector<1x128x16xf32>
    %5 = vector.shape_cast %4 : vector<1x128x16xf32> to vector<128x16xf32>
    %cst_6 = arith.constant dense<0.000000e+00> : vector<32x16xf32>
    %6 = tpu.matmul %3, %5, %cst_6 {dimension_numbers = #tpu.dot_dimension_numbers<[1], [0], [0], [1], [0, 0, 1, 1], [], []>} : vector<32x128xf32>, vector<128x16xf32>, vector<32x16xf32> -> vector<32x16xf32>
    %c0_7 = arith.constant 0 : index
    %c0_8 = arith.constant 0 : index
    %c0_9 = arith.constant 0 : index
    %7 = vector.load %arg4[%c0_7, %c0_8, %c0_9] : memref<4x32x16xf32, #tpu.memory_space<vmem>>, vector<1x32x16xf32>
    %8 = vector.shape_cast %7 : vector<1x32x16xf32> to vector<32x16xf32>
    %9 = vector.shape_cast %6 : vector<32x16xf32> to vector<1x32x16xf32>
    tpu.vector_store %arg4[%c0_7, %c0_8, %c0_9], %9 {strides = array<i32>} : memref<4x32x16xf32, #tpu.memory_space<vmem>>, vector<1x32x16xf32>,
    %cst_10 = arith.constant dense<0.000000e+00> : vector<16xf32>
    %10 = vector.multi_reduction <add>, %6, %cst_10 [0] : vector<32x16xf32> to vector<16xf32>
    %11 = vector.shape_cast %10 : vector<16xf32> to vector<1x16xf32>
    %12 = arith.addf %0, %11 : vector<1x16xf32>
    %13 = arith.mulf %6, %6 : vector<32x16xf32>
    %cst_11 = arith.constant dense<0.000000e+00> : vector<16xf32>
    %14 = vector.multi_reduction <add>, %13, %cst_11 [0] : vector<32x16xf32> to vector<16xf32>
    %15 = vector.shape_cast %14 : vector<16xf32> to vector<1x16xf32>
    %16 = arith.addf %1, %15 : vector<1x16xf32>
    %c1 = arith.constant 1 : index
    %c0_12 = arith.constant 0 : index
    %c0_13 = arith.constant 0 : index
    %17 = vector.load %arg1[%c1, %c0_12, %c0_13] : memref<4x32x128xf32, #tpu.memory_space<vmem>>, vector<1x32x128xf32>
    %18 = vector.shape_cast %17 : vector<1x32x128xf32> to vector<32x128xf32>
    %c1_14 = arith.constant 1 : index
    %c0_15 = arith.constant 0 : index
    %c0_16 = arith.constant 0 : index
    %19 = vector.load %arg2[%c1_14, %c0_15, %c0_16] : memref<4x128x16xf32, #tpu.memory_space<vmem>>, vector<1x128x16xf32>
    %20 = vector.shape_cast %19 : vector<1x128x16xf32> to vector<128x16xf32>
    %cst_17 = arith.constant dense<0.000000e+00> : vector<32x16xf32>
    %21 = tpu.matmul %18, %20, %cst_17 {dimension_numbers = #tpu.dot_dimension_numbers<[1], [0], [0], [1], [0, 0, 1, 1], [], []>} : vector<32x128xf32>, vector<128x16xf32>, vector<32x16xf32> -> vector<32x16xf32>
    %c1_18 = arith.constant 1 : index
    %c0_19 = arith.constant 0 : index
    %c0_20 = arith.constant 0 : index
    %22 = vector.load %arg4[%c1_18, %c0_19, %c0_20] : memref<4x32x16xf32, #tpu.memory_space<vmem>>, vector<1x32x16xf32>
    %23 = vector.shape_cast %22 : vector<1x32x16xf32> to vector<32x16xf32>
    %24 = vector.shape_cast %21 : vector<32x16xf32> to vector<1x32x16xf32>
    tpu.vector_store %arg4[%c1_18, %c0_19, %c0_20], %24 {strides = array<i32>} : memref<4x32x16xf32, #tpu.memory_space<vmem>>, vector<1x32x16xf32>,
    %cst_21 = arith.constant dense<0.000000e+00> : vector<16xf32>
    %25 = vector.multi_reduction <add>, %21, %cst_21 [0] : vector<32x16xf32> to vector<16xf32>
    %26 = vector.shape_cast %25 : vector<16xf32> to vector<1x16xf32>
    %27 = arith.addf %12, %26 : vector<1x16xf32>
    %28 = arith.mulf %21, %21 : vector<32x16xf32>
    %cst_22 = arith.constant dense<0.000000e+00> : vector<16xf32>
    %29 = vector.multi_reduction <add>, %28, %cst_22 [0] : vector<32x16xf32> to vector<16xf32>
    %30 = vector.shape_cast %29 : vector<16xf32> to vector<1x16xf32>
    %31 = arith.addf %16, %30 : vector<1x16xf32>
    %c2 = arith.constant 2 : index
    %c0_23 = arith.constant 0 : index
    %c0_24 = arith.constant 0 : index
    %32 = vector.load %arg1[%c2, %c0_23, %c0_24] : memref<4x32x128xf32, #tpu.memory_space<vmem>>, vector<1x32x128xf32>
    %33 = vector.shape_cast %32 : vector<1x32x128xf32> to vector<32x128xf32>
    %c2_25 = arith.constant 2 : index
    %c0_26 = arith.constant 0 : index
    %c0_27 = arith.constant 0 : index
    %34 = vector.load %arg2[%c2_25, %c0_26, %c0_27] : memref<4x128x16xf32, #tpu.memory_space<vmem>>, vector<1x128x16xf32>
    %35 = vector.shape_cast %34 : vector<1x128x16xf32> to vector<128x16xf32>
    %cst_28 = arith.constant dense<0.000000e+00> : vector<32x16xf32>
    %36 = tpu.matmul %33, %35, %cst_28 {dimension_numbers = #tpu.dot_dimension_numbers<[1], [0], [0], [1], [0, 0, 1, 1], [], []>} : vector<32x128xf32>, vector<128x16xf32>, vector<32x16xf32> -> vector<32x16xf32>
    %c2_29 = arith.constant 2 : index
    %c0_30 = arith.constant 0 : index
    %c0_31 = arith.constant 0 : index
    %37 = vector.load %arg4[%c2_29, %c0_30, %c0_31] : memref<4x32x16xf32, #tpu.memory_space<vmem>>, vector<1x32x16xf32>
    %38 = vector.shape_cast %37 : vector<1x32x16xf32> to vector<32x16xf32>
    %39 = vector.shape_cast %36 : vector<32x16xf32> to vector<1x32x16xf32>
    tpu.vector_store %arg4[%c2_29, %c0_30, %c0_31], %39 {strides = array<i32>} : memref<4x32x16xf32, #tpu.memory_space<vmem>>, vector<1x32x16xf32>,
    %cst_32 = arith.constant dense<0.000000e+00> : vector<16xf32>
    %40 = vector.multi_reduction <add>, %36, %cst_32 [0] : vector<32x16xf32> to vector<16xf32>
    %41 = vector.shape_cast %40 : vector<16xf32> to vector<1x16xf32>
    %42 = arith.addf %27, %41 : vector<1x16xf32>
    %43 = arith.mulf %36, %36 : vector<32x16xf32>
    %cst_33 = arith.constant dense<0.000000e+00> : vector<16xf32>
    %44 = vector.multi_reduction <add>, %43, %cst_33 [0] : vector<32x16xf32> to vector<16xf32>
    %45 = vector.shape_cast %44 : vector<16xf32> to vector<1x16xf32>
    %46 = arith.addf %31, %45 : vector<1x16xf32>
    %c3 = arith.constant 3 : index
    %c0_34 = arith.constant 0 : index
    %c0_35 = arith.constant 0 : index
    %47 = vector.load %arg1[%c3, %c0_34, %c0_35] : memref<4x32x128xf32, #tpu.memory_space<vmem>>, vector<1x32x128xf32>
    %48 = vector.shape_cast %47 : vector<1x32x128xf32> to vector<32x128xf32>
    %c3_36 = arith.constant 3 : index
    %c0_37 = arith.constant 0 : index
    %c0_38 = arith.constant 0 : index
    %49 = vector.load %arg2[%c3_36, %c0_37, %c0_38] : memref<4x128x16xf32, #tpu.memory_space<vmem>>, vector<1x128x16xf32>
    %50 = vector.shape_cast %49 : vector<1x128x16xf32> to vector<128x16xf32>
    %cst_39 = arith.constant dense<0.000000e+00> : vector<32x16xf32>
    %51 = tpu.matmul %48, %50, %cst_39 {dimension_numbers = #tpu.dot_dimension_numbers<[1], [0], [0], [1], [0, 0, 1, 1], [], []>} : vector<32x128xf32>, vector<128x16xf32>, vector<32x16xf32> -> vector<32x16xf32>
    %c3_40 = arith.constant 3 : index
    %c0_41 = arith.constant 0 : index
    %c0_42 = arith.constant 0 : index
    %52 = vector.load %arg4[%c3_40, %c0_41, %c0_42] : memref<4x32x16xf32, #tpu.memory_space<vmem>>, vector<1x32x16xf32>
    %53 = vector.shape_cast %52 : vector<1x32x16xf32> to vector<32x16xf32>
    %54 = vector.shape_cast %51 : vector<32x16xf32> to vector<1x32x16xf32>
    tpu.vector_store %arg4[%c3_40, %c0_41, %c0_42], %54 {strides = array<i32>} : memref<4x32x16xf32, #tpu.memory_space<vmem>>, vector<1x32x16xf32>,
    %cst_43 = arith.constant dense<0.000000e+00> : vector<16xf32>
    %55 = vector.multi_reduction <add>, %51, %cst_43 [0] : vector<32x16xf32> to vector<16xf32>
    %56 = vector.shape_cast %55 : vector<16xf32> to vector<1x16xf32>
    %57 = arith.addf %42, %56 : vector<1x16xf32>
    %58 = arith.mulf %51, %51 : vector<32x16xf32>
    %cst_44 = arith.constant dense<0.000000e+00> : vector<16xf32>
    %59 = vector.multi_reduction <add>, %58, %cst_44 [0] : vector<32x16xf32> to vector<16xf32>
    %60 = vector.shape_cast %59 : vector<16xf32> to vector<1x16xf32>
    %61 = arith.addf %46, %60 : vector<1x16xf32>
    %cst_45 = arith.constant 7.812500e-03 : f32
    %62 = vector.broadcast %cst_45 : f32 to vector<1x16xf32>
    %63 = arith.mulf %57, %62 : vector<1x16xf32>
    %cst_46 = arith.constant 7.812500e-03 : f32
    %64 = vector.broadcast %cst_46 : f32 to vector<1x16xf32>
    %65 = arith.mulf %61, %64 : vector<1x16xf32>
    %66 = arith.mulf %63, %63 : vector<1x16xf32>
    %67 = arith.subf %65, %66 : vector<1x16xf32>
    %cst_47 = arith.constant 0.000000e+00 : f32
    %68 = vector.broadcast %cst_47 : f32 to vector<1x16xf32>
    %69 = arith.maximumf %67, %68 : vector<1x16xf32>
    %c0_48 = arith.constant 0 : index
    %c0_49 = arith.constant 0 : index
    %70 = vector.load %arg3[%c0_48, %c0_49] : memref<2x16xf32, #tpu.memory_space<vmem>>, vector<1x16xf32>
    %cst_50 = arith.constant 9.99999974E-6 : f32
    %71 = vector.broadcast %cst_50 : f32 to vector<1x16xf32>
    %72 = arith.addf %69, %71 : vector<1x16xf32>
    %73 = math.rsqrt %72 : vector<1x16xf32>
    %74 = arith.mulf %70, %73 : vector<1x16xf32>
    %c1_51 = arith.constant 1 : index
    %c0_52 = arith.constant 0 : index
    %75 = vector.load %arg3[%c1_51, %c0_52] : memref<2x16xf32, #tpu.memory_space<vmem>>, vector<1x16xf32>
    %76 = arith.mulf %63, %74 : vector<1x16xf32>
    %77 = arith.subf %75, %76 : vector<1x16xf32>
    %c0_53 = arith.constant 0 : index
    %c0_54 = arith.constant 0 : index
    %c0_55 = arith.constant 0 : index
    %78 = vector.load %arg4[%c0_53, %c0_54, %c0_55] : memref<4x32x16xf32, #tpu.memory_space<vmem>>, vector<1x32x16xf32>
    %79 = vector.shape_cast %78 : vector<1x32x16xf32> to vector<32x16xf32>
    %80 = vector.broadcast %74 : vector<1x16xf32> to vector<32x16xf32>
    %81 = arith.mulf %79, %80 : vector<32x16xf32>
    %82 = vector.broadcast %77 : vector<1x16xf32> to vector<32x16xf32>
    %83 = arith.addf %81, %82 : vector<32x16xf32>
    %cst_56 = arith.constant 0.000000e+00 : f32
    %84 = vector.broadcast %cst_56 : f32 to vector<32x16xf32>
    %85 = arith.maximumf %83, %84 : vector<32x16xf32>
    %c0_57 = arith.constant 0 : index
    %c0_58 = arith.constant 0 : index
    %c0_59 = arith.constant 0 : index
    %86 = vector.load %arg4[%c0_57, %c0_58, %c0_59] : memref<4x32x16xf32, #tpu.memory_space<vmem>>, vector<1x32x16xf32>
    %87 = vector.shape_cast %86 : vector<1x32x16xf32> to vector<32x16xf32>
    %88 = vector.shape_cast %85 : vector<32x16xf32> to vector<1x32x16xf32>
    tpu.vector_store %arg4[%c0_57, %c0_58, %c0_59], %88 {strides = array<i32>} : memref<4x32x16xf32, #tpu.memory_space<vmem>>, vector<1x32x16xf32>,
    %c1_60 = arith.constant 1 : index
    %c0_61 = arith.constant 0 : index
    %c0_62 = arith.constant 0 : index
    %89 = vector.load %arg4[%c1_60, %c0_61, %c0_62] : memref<4x32x16xf32, #tpu.memory_space<vmem>>, vector<1x32x16xf32>
    %90 = vector.shape_cast %89 : vector<1x32x16xf32> to vector<32x16xf32>
    %91 = vector.broadcast %74 : vector<1x16xf32> to vector<32x16xf32>
    %92 = arith.mulf %90, %91 : vector<32x16xf32>
    %93 = vector.broadcast %77 : vector<1x16xf32> to vector<32x16xf32>
    %94 = arith.addf %92, %93 : vector<32x16xf32>
    %cst_63 = arith.constant 0.000000e+00 : f32
    %95 = vector.broadcast %cst_63 : f32 to vector<32x16xf32>
    %96 = arith.maximumf %94, %95 : vector<32x16xf32>
    %c1_64 = arith.constant 1 : index
    %c0_65 = arith.constant 0 : index
    %c0_66 = arith.constant 0 : index
    %97 = vector.load %arg4[%c1_64, %c0_65, %c0_66] : memref<4x32x16xf32, #tpu.memory_space<vmem>>, vector<1x32x16xf32>
    %98 = vector.shape_cast %97 : vector<1x32x16xf32> to vector<32x16xf32>
    %99 = vector.shape_cast %96 : vector<32x16xf32> to vector<1x32x16xf32>
    tpu.vector_store %arg4[%c1_64, %c0_65, %c0_66], %99 {strides = array<i32>} : memref<4x32x16xf32, #tpu.memory_space<vmem>>, vector<1x32x16xf32>,
    %c2_67 = arith.constant 2 : index
    %c0_68 = arith.constant 0 : index
    %c0_69 = arith.constant 0 : index
    %100 = vector.load %arg4[%c2_67, %c0_68, %c0_69] : memref<4x32x16xf32, #tpu.memory_space<vmem>>, vector<1x32x16xf32>
    %101 = vector.shape_cast %100 : vector<1x32x16xf32> to vector<32x16xf32>
    %102 = vector.broadcast %74 : vector<1x16xf32> to vector<32x16xf32>
    %103 = arith.mulf %101, %102 : vector<32x16xf32>
    %104 = vector.broadcast %77 : vector<1x16xf32> to vector<32x16xf32>
    %105 = arith.addf %103, %104 : vector<32x16xf32>
    %cst_70 = arith.constant 0.000000e+00 : f32
    %106 = vector.broadcast %cst_70 : f32 to vector<32x16xf32>
    %107 = arith.maximumf %105, %106 : vector<32x16xf32>
    %c2_71 = arith.constant 2 : index
    %c0_72 = arith.constant 0 : index
    %c0_73 = arith.constant 0 : index
    %108 = vector.load %arg4[%c2_71, %c0_72, %c0_73] : memref<4x32x16xf32, #tpu.memory_space<vmem>>, vector<1x32x16xf32>
    %109 = vector.shape_cast %108 : vector<1x32x16xf32> to vector<32x16xf32>
    %110 = vector.shape_cast %107 : vector<32x16xf32> to vector<1x32x16xf32>
    tpu.vector_store %arg4[%c2_71, %c0_72, %c0_73], %110 {strides = array<i32>} : memref<4x32x16xf32, #tpu.memory_space<vmem>>, vector<1x32x16xf32>,
    %c3_74 = arith.constant 3 : index
    %c0_75 = arith.constant 0 : index
    %c0_76 = arith.constant 0 : index
    %111 = vector.load %arg4[%c3_74, %c0_75, %c0_76] : memref<4x32x16xf32, #tpu.memory_space<vmem>>, vector<1x32x16xf32>
    %112 = vector.shape_cast %111 : vector<1x32x16xf32> to vector<32x16xf32>
    %113 = vector.broadcast %74 : vector<1x16xf32> to vector<32x16xf32>
    %114 = arith.mulf %112, %113 : vector<32x16xf32>
    %115 = vector.broadcast %77 : vector<1x16xf32> to vector<32x16xf32>
    %116 = arith.addf %114, %115 : vector<32x16xf32>
    %cst_77 = arith.constant 0.000000e+00 : f32
    %117 = vector.broadcast %cst_77 : f32 to vector<32x16xf32>
    %118 = arith.maximumf %116, %117 : vector<32x16xf32>
    %c3_78 = arith.constant 3 : index
    %c0_79 = arith.constant 0 : index
    %c0_80 = arith.constant 0 : index
    %119 = vector.load %arg4[%c3_78, %c0_79, %c0_80] : memref<4x32x16xf32, #tpu.memory_space<vmem>>, vector<1x32x16xf32>
    %120 = vector.shape_cast %119 : vector<1x32x16xf32> to vector<32x16xf32>
    %121 = vector.shape_cast %118 : vector<32x16xf32> to vector<1x32x16xf32>
    tpu.vector_store %arg4[%c3_78, %c0_79, %c0_80], %121 {strides = array<i32>} : memref<4x32x16xf32, #tpu.memory_space<vmem>>, vector<1x32x16xf32>,
    return
  }
  func.func @transform_0(%arg0: i32) -> (i32, i32, i32) {
    %c0_i32 = arith.constant 0 : i32
    %c0_i32_0 = arith.constant 0 : i32
    %c0_i32_1 = arith.constant 0 : i32
    %c0_i32_2 = arith.constant 0 : i32
    return %c0_i32, %c0_i32_0, %c0_i32_1 : i32, i32, i32
  }
  func.func @transform_1(%arg0: i32) -> (i32, i32, i32) {
    %c0_i32 = arith.constant 0 : i32
    %c0_i32_0 = arith.constant 0 : i32
    %c0_i32_1 = arith.constant 0 : i32
    %c0_i32_2 = arith.constant 0 : i32
    return %c0_i32, %c0_i32_0, %c0_i32_1 : i32, i32, i32
  }
  func.func @transform_2(%arg0: i32) -> (i32, i32) {
    %c0_i32 = arith.constant 0 : i32
    %c0_i32_0 = arith.constant 0 : i32
    %c0_i32_1 = arith.constant 0 : i32
    return %c0_i32, %c0_i32_0 : i32, i32
  }
  func.func @transform_3(%arg0: i32) -> (i32, i32, i32) {
    %c0_i32 = arith.constant 0 : i32
    %c0_i32_0 = arith.constant 0 : i32
    %c0_i32_1 = arith.constant 0 : i32
    %c0_i32_2 = arith.constant 0 : i32
    return %c0_i32, %c0_i32_0, %c0_i32_1 : i32, i32, i32
  }
}

module attributes {stable_mosaic.version = 11 : i64} {
  func.func @_bn_relu_layer_kernel(%arg0: i32, %arg1: memref<4x128x64xf32, #tpu.memory_space<vmem>>, %arg2: memref<4x64x8xf32, #tpu.memory_space<vmem>>, %arg3: memref<2x8xf32, #tpu.memory_space<vmem>>, %arg4: memref<4x128x8xf32, #tpu.memory_space<vmem>>) attributes {dimension_semantics = [#tpu.dimension_semantics<arbitrary>], iteration_bounds = array<i64: 1>, scalar_prefetch = 0 : i64, scratch_operands = 0 : i64, tpu.core_type = #tpu.core_type<tc>, window_params = [{pipeline_mode = #tpu.pipeline_mode<synchronous>, transform_indices = @transform_0, window_bounds = array<i64: 4, 128, 64>}, {pipeline_mode = #tpu.pipeline_mode<synchronous>, transform_indices = @transform_1, window_bounds = array<i64: 4, 64, 8>}, {pipeline_mode = #tpu.pipeline_mode<synchronous>, transform_indices = @transform_2, window_bounds = array<i64: 2, 8>}, {pipeline_mode = #tpu.pipeline_mode<synchronous>, transform_indices = @transform_3, window_bounds = array<i64: 4, 128, 8>}]} {
    %cst = arith.constant 0.000000e+00 : f32
    %0 = vector.broadcast %cst : f32 to vector<1x8xf32>
    %cst_0 = arith.constant 0.000000e+00 : f32
    %1 = vector.broadcast %cst_0 : f32 to vector<1x8xf32>
    %c0 = arith.constant 0 : index
    %c0_1 = arith.constant 0 : index
    %c0_2 = arith.constant 0 : index
    %2 = vector.load %arg1[%c0, %c0_1, %c0_2] : memref<4x128x64xf32, #tpu.memory_space<vmem>>, vector<1x128x64xf32>
    %3 = vector.shape_cast %2 : vector<1x128x64xf32> to vector<128x64xf32>
    %c0_3 = arith.constant 0 : index
    %c0_4 = arith.constant 0 : index
    %c0_5 = arith.constant 0 : index
    %4 = vector.load %arg2[%c0_3, %c0_4, %c0_5] : memref<4x64x8xf32, #tpu.memory_space<vmem>>, vector<1x64x8xf32>
    %5 = vector.shape_cast %4 : vector<1x64x8xf32> to vector<64x8xf32>
    %cst_6 = arith.constant dense<0.000000e+00> : vector<128x8xf32>
    %6 = tpu.matmul %3, %5, %cst_6 {dimension_numbers = #tpu.dot_dimension_numbers<[1], [0], [0], [1], [0, 0, 1, 1], [], []>} : vector<128x64xf32>, vector<64x8xf32>, vector<128x8xf32> -> vector<128x8xf32>
    %c0_7 = arith.constant 0 : index
    %c0_8 = arith.constant 0 : index
    %c0_9 = arith.constant 0 : index
    %7 = vector.load %arg4[%c0_7, %c0_8, %c0_9] : memref<4x128x8xf32, #tpu.memory_space<vmem>>, vector<1x128x8xf32>
    %8 = vector.shape_cast %7 : vector<1x128x8xf32> to vector<128x8xf32>
    %9 = vector.shape_cast %6 : vector<128x8xf32> to vector<1x128x8xf32>
    tpu.vector_store %arg4[%c0_7, %c0_8, %c0_9], %9 {strides = array<i32>} : memref<4x128x8xf32, #tpu.memory_space<vmem>>, vector<1x128x8xf32>,
    %cst_10 = arith.constant dense<0.000000e+00> : vector<8xf32>
    %10 = vector.multi_reduction <add>, %6, %cst_10 [0] : vector<128x8xf32> to vector<8xf32>
    %11 = vector.shape_cast %10 : vector<8xf32> to vector<1x8xf32>
    %12 = arith.addf %0, %11 : vector<1x8xf32>
    %13 = arith.mulf %6, %6 : vector<128x8xf32>
    %cst_11 = arith.constant dense<0.000000e+00> : vector<8xf32>
    %14 = vector.multi_reduction <add>, %13, %cst_11 [0] : vector<128x8xf32> to vector<8xf32>
    %15 = vector.shape_cast %14 : vector<8xf32> to vector<1x8xf32>
    %16 = arith.addf %1, %15 : vector<1x8xf32>
    %c1 = arith.constant 1 : index
    %c0_12 = arith.constant 0 : index
    %c0_13 = arith.constant 0 : index
    %17 = vector.load %arg1[%c1, %c0_12, %c0_13] : memref<4x128x64xf32, #tpu.memory_space<vmem>>, vector<1x128x64xf32>
    %18 = vector.shape_cast %17 : vector<1x128x64xf32> to vector<128x64xf32>
    %c1_14 = arith.constant 1 : index
    %c0_15 = arith.constant 0 : index
    %c0_16 = arith.constant 0 : index
    %19 = vector.load %arg2[%c1_14, %c0_15, %c0_16] : memref<4x64x8xf32, #tpu.memory_space<vmem>>, vector<1x64x8xf32>
    %20 = vector.shape_cast %19 : vector<1x64x8xf32> to vector<64x8xf32>
    %cst_17 = arith.constant dense<0.000000e+00> : vector<128x8xf32>
    %21 = tpu.matmul %18, %20, %cst_17 {dimension_numbers = #tpu.dot_dimension_numbers<[1], [0], [0], [1], [0, 0, 1, 1], [], []>} : vector<128x64xf32>, vector<64x8xf32>, vector<128x8xf32> -> vector<128x8xf32>
    %c1_18 = arith.constant 1 : index
    %c0_19 = arith.constant 0 : index
    %c0_20 = arith.constant 0 : index
    %22 = vector.load %arg4[%c1_18, %c0_19, %c0_20] : memref<4x128x8xf32, #tpu.memory_space<vmem>>, vector<1x128x8xf32>
    %23 = vector.shape_cast %22 : vector<1x128x8xf32> to vector<128x8xf32>
    %24 = vector.shape_cast %21 : vector<128x8xf32> to vector<1x128x8xf32>
    tpu.vector_store %arg4[%c1_18, %c0_19, %c0_20], %24 {strides = array<i32>} : memref<4x128x8xf32, #tpu.memory_space<vmem>>, vector<1x128x8xf32>,
    %cst_21 = arith.constant dense<0.000000e+00> : vector<8xf32>
    %25 = vector.multi_reduction <add>, %21, %cst_21 [0] : vector<128x8xf32> to vector<8xf32>
    %26 = vector.shape_cast %25 : vector<8xf32> to vector<1x8xf32>
    %27 = arith.addf %12, %26 : vector<1x8xf32>
    %28 = arith.mulf %21, %21 : vector<128x8xf32>
    %cst_22 = arith.constant dense<0.000000e+00> : vector<8xf32>
    %29 = vector.multi_reduction <add>, %28, %cst_22 [0] : vector<128x8xf32> to vector<8xf32>
    %30 = vector.shape_cast %29 : vector<8xf32> to vector<1x8xf32>
    %31 = arith.addf %16, %30 : vector<1x8xf32>
    %c2 = arith.constant 2 : index
    %c0_23 = arith.constant 0 : index
    %c0_24 = arith.constant 0 : index
    %32 = vector.load %arg1[%c2, %c0_23, %c0_24] : memref<4x128x64xf32, #tpu.memory_space<vmem>>, vector<1x128x64xf32>
    %33 = vector.shape_cast %32 : vector<1x128x64xf32> to vector<128x64xf32>
    %c2_25 = arith.constant 2 : index
    %c0_26 = arith.constant 0 : index
    %c0_27 = arith.constant 0 : index
    %34 = vector.load %arg2[%c2_25, %c0_26, %c0_27] : memref<4x64x8xf32, #tpu.memory_space<vmem>>, vector<1x64x8xf32>
    %35 = vector.shape_cast %34 : vector<1x64x8xf32> to vector<64x8xf32>
    %cst_28 = arith.constant dense<0.000000e+00> : vector<128x8xf32>
    %36 = tpu.matmul %33, %35, %cst_28 {dimension_numbers = #tpu.dot_dimension_numbers<[1], [0], [0], [1], [0, 0, 1, 1], [], []>} : vector<128x64xf32>, vector<64x8xf32>, vector<128x8xf32> -> vector<128x8xf32>
    %c2_29 = arith.constant 2 : index
    %c0_30 = arith.constant 0 : index
    %c0_31 = arith.constant 0 : index
    %37 = vector.load %arg4[%c2_29, %c0_30, %c0_31] : memref<4x128x8xf32, #tpu.memory_space<vmem>>, vector<1x128x8xf32>
    %38 = vector.shape_cast %37 : vector<1x128x8xf32> to vector<128x8xf32>
    %39 = vector.shape_cast %36 : vector<128x8xf32> to vector<1x128x8xf32>
    tpu.vector_store %arg4[%c2_29, %c0_30, %c0_31], %39 {strides = array<i32>} : memref<4x128x8xf32, #tpu.memory_space<vmem>>, vector<1x128x8xf32>,
    %cst_32 = arith.constant dense<0.000000e+00> : vector<8xf32>
    %40 = vector.multi_reduction <add>, %36, %cst_32 [0] : vector<128x8xf32> to vector<8xf32>
    %41 = vector.shape_cast %40 : vector<8xf32> to vector<1x8xf32>
    %42 = arith.addf %27, %41 : vector<1x8xf32>
    %43 = arith.mulf %36, %36 : vector<128x8xf32>
    %cst_33 = arith.constant dense<0.000000e+00> : vector<8xf32>
    %44 = vector.multi_reduction <add>, %43, %cst_33 [0] : vector<128x8xf32> to vector<8xf32>
    %45 = vector.shape_cast %44 : vector<8xf32> to vector<1x8xf32>
    %46 = arith.addf %31, %45 : vector<1x8xf32>
    %c3 = arith.constant 3 : index
    %c0_34 = arith.constant 0 : index
    %c0_35 = arith.constant 0 : index
    %47 = vector.load %arg1[%c3, %c0_34, %c0_35] : memref<4x128x64xf32, #tpu.memory_space<vmem>>, vector<1x128x64xf32>
    %48 = vector.shape_cast %47 : vector<1x128x64xf32> to vector<128x64xf32>
    %c3_36 = arith.constant 3 : index
    %c0_37 = arith.constant 0 : index
    %c0_38 = arith.constant 0 : index
    %49 = vector.load %arg2[%c3_36, %c0_37, %c0_38] : memref<4x64x8xf32, #tpu.memory_space<vmem>>, vector<1x64x8xf32>
    %50 = vector.shape_cast %49 : vector<1x64x8xf32> to vector<64x8xf32>
    %cst_39 = arith.constant dense<0.000000e+00> : vector<128x8xf32>
    %51 = tpu.matmul %48, %50, %cst_39 {dimension_numbers = #tpu.dot_dimension_numbers<[1], [0], [0], [1], [0, 0, 1, 1], [], []>} : vector<128x64xf32>, vector<64x8xf32>, vector<128x8xf32> -> vector<128x8xf32>
    %c3_40 = arith.constant 3 : index
    %c0_41 = arith.constant 0 : index
    %c0_42 = arith.constant 0 : index
    %52 = vector.load %arg4[%c3_40, %c0_41, %c0_42] : memref<4x128x8xf32, #tpu.memory_space<vmem>>, vector<1x128x8xf32>
    %53 = vector.shape_cast %52 : vector<1x128x8xf32> to vector<128x8xf32>
    %54 = vector.shape_cast %51 : vector<128x8xf32> to vector<1x128x8xf32>
    tpu.vector_store %arg4[%c3_40, %c0_41, %c0_42], %54 {strides = array<i32>} : memref<4x128x8xf32, #tpu.memory_space<vmem>>, vector<1x128x8xf32>,
    %cst_43 = arith.constant dense<0.000000e+00> : vector<8xf32>
    %55 = vector.multi_reduction <add>, %51, %cst_43 [0] : vector<128x8xf32> to vector<8xf32>
    %56 = vector.shape_cast %55 : vector<8xf32> to vector<1x8xf32>
    %57 = arith.addf %42, %56 : vector<1x8xf32>
    %58 = arith.mulf %51, %51 : vector<128x8xf32>
    %cst_44 = arith.constant dense<0.000000e+00> : vector<8xf32>
    %59 = vector.multi_reduction <add>, %58, %cst_44 [0] : vector<128x8xf32> to vector<8xf32>
    %60 = vector.shape_cast %59 : vector<8xf32> to vector<1x8xf32>
    %61 = arith.addf %46, %60 : vector<1x8xf32>
    %cst_45 = arith.constant 0.001953125 : f32
    %62 = vector.broadcast %cst_45 : f32 to vector<1x8xf32>
    %63 = arith.mulf %57, %62 : vector<1x8xf32>
    %cst_46 = arith.constant 0.001953125 : f32
    %64 = vector.broadcast %cst_46 : f32 to vector<1x8xf32>
    %65 = arith.mulf %61, %64 : vector<1x8xf32>
    %66 = arith.mulf %63, %63 : vector<1x8xf32>
    %67 = arith.subf %65, %66 : vector<1x8xf32>
    %cst_47 = arith.constant 0.000000e+00 : f32
    %68 = vector.broadcast %cst_47 : f32 to vector<1x8xf32>
    %69 = arith.maximumf %67, %68 : vector<1x8xf32>
    %c0_48 = arith.constant 0 : index
    %c0_49 = arith.constant 0 : index
    %70 = vector.load %arg3[%c0_48, %c0_49] : memref<2x8xf32, #tpu.memory_space<vmem>>, vector<1x8xf32>
    %cst_50 = arith.constant 9.99999974E-6 : f32
    %71 = vector.broadcast %cst_50 : f32 to vector<1x8xf32>
    %72 = arith.addf %69, %71 : vector<1x8xf32>
    %73 = math.rsqrt %72 : vector<1x8xf32>
    %74 = arith.mulf %70, %73 : vector<1x8xf32>
    %c1_51 = arith.constant 1 : index
    %c0_52 = arith.constant 0 : index
    %75 = vector.load %arg3[%c1_51, %c0_52] : memref<2x8xf32, #tpu.memory_space<vmem>>, vector<1x8xf32>
    %76 = arith.mulf %63, %74 : vector<1x8xf32>
    %77 = arith.subf %75, %76 : vector<1x8xf32>
    %c0_53 = arith.constant 0 : index
    %c0_54 = arith.constant 0 : index
    %c0_55 = arith.constant 0 : index
    %78 = vector.load %arg4[%c0_53, %c0_54, %c0_55] : memref<4x128x8xf32, #tpu.memory_space<vmem>>, vector<1x128x8xf32>
    %79 = vector.shape_cast %78 : vector<1x128x8xf32> to vector<128x8xf32>
    %80 = vector.broadcast %74 : vector<1x8xf32> to vector<128x8xf32>
    %81 = arith.mulf %79, %80 : vector<128x8xf32>
    %82 = vector.broadcast %77 : vector<1x8xf32> to vector<128x8xf32>
    %83 = arith.addf %81, %82 : vector<128x8xf32>
    %cst_56 = arith.constant 0.000000e+00 : f32
    %84 = vector.broadcast %cst_56 : f32 to vector<128x8xf32>
    %85 = arith.maximumf %83, %84 : vector<128x8xf32>
    %c0_57 = arith.constant 0 : index
    %c0_58 = arith.constant 0 : index
    %c0_59 = arith.constant 0 : index
    %86 = vector.load %arg4[%c0_57, %c0_58, %c0_59] : memref<4x128x8xf32, #tpu.memory_space<vmem>>, vector<1x128x8xf32>
    %87 = vector.shape_cast %86 : vector<1x128x8xf32> to vector<128x8xf32>
    %88 = vector.shape_cast %85 : vector<128x8xf32> to vector<1x128x8xf32>
    tpu.vector_store %arg4[%c0_57, %c0_58, %c0_59], %88 {strides = array<i32>} : memref<4x128x8xf32, #tpu.memory_space<vmem>>, vector<1x128x8xf32>,
    %c1_60 = arith.constant 1 : index
    %c0_61 = arith.constant 0 : index
    %c0_62 = arith.constant 0 : index
    %89 = vector.load %arg4[%c1_60, %c0_61, %c0_62] : memref<4x128x8xf32, #tpu.memory_space<vmem>>, vector<1x128x8xf32>
    %90 = vector.shape_cast %89 : vector<1x128x8xf32> to vector<128x8xf32>
    %91 = vector.broadcast %74 : vector<1x8xf32> to vector<128x8xf32>
    %92 = arith.mulf %90, %91 : vector<128x8xf32>
    %93 = vector.broadcast %77 : vector<1x8xf32> to vector<128x8xf32>
    %94 = arith.addf %92, %93 : vector<128x8xf32>
    %cst_63 = arith.constant 0.000000e+00 : f32
    %95 = vector.broadcast %cst_63 : f32 to vector<128x8xf32>
    %96 = arith.maximumf %94, %95 : vector<128x8xf32>
    %c1_64 = arith.constant 1 : index
    %c0_65 = arith.constant 0 : index
    %c0_66 = arith.constant 0 : index
    %97 = vector.load %arg4[%c1_64, %c0_65, %c0_66] : memref<4x128x8xf32, #tpu.memory_space<vmem>>, vector<1x128x8xf32>
    %98 = vector.shape_cast %97 : vector<1x128x8xf32> to vector<128x8xf32>
    %99 = vector.shape_cast %96 : vector<128x8xf32> to vector<1x128x8xf32>
    tpu.vector_store %arg4[%c1_64, %c0_65, %c0_66], %99 {strides = array<i32>} : memref<4x128x8xf32, #tpu.memory_space<vmem>>, vector<1x128x8xf32>,
    %c2_67 = arith.constant 2 : index
    %c0_68 = arith.constant 0 : index
    %c0_69 = arith.constant 0 : index
    %100 = vector.load %arg4[%c2_67, %c0_68, %c0_69] : memref<4x128x8xf32, #tpu.memory_space<vmem>>, vector<1x128x8xf32>
    %101 = vector.shape_cast %100 : vector<1x128x8xf32> to vector<128x8xf32>
    %102 = vector.broadcast %74 : vector<1x8xf32> to vector<128x8xf32>
    %103 = arith.mulf %101, %102 : vector<128x8xf32>
    %104 = vector.broadcast %77 : vector<1x8xf32> to vector<128x8xf32>
    %105 = arith.addf %103, %104 : vector<128x8xf32>
    %cst_70 = arith.constant 0.000000e+00 : f32
    %106 = vector.broadcast %cst_70 : f32 to vector<128x8xf32>
    %107 = arith.maximumf %105, %106 : vector<128x8xf32>
    %c2_71 = arith.constant 2 : index
    %c0_72 = arith.constant 0 : index
    %c0_73 = arith.constant 0 : index
    %108 = vector.load %arg4[%c2_71, %c0_72, %c0_73] : memref<4x128x8xf32, #tpu.memory_space<vmem>>, vector<1x128x8xf32>
    %109 = vector.shape_cast %108 : vector<1x128x8xf32> to vector<128x8xf32>
    %110 = vector.shape_cast %107 : vector<128x8xf32> to vector<1x128x8xf32>
    tpu.vector_store %arg4[%c2_71, %c0_72, %c0_73], %110 {strides = array<i32>} : memref<4x128x8xf32, #tpu.memory_space<vmem>>, vector<1x128x8xf32>,
    %c3_74 = arith.constant 3 : index
    %c0_75 = arith.constant 0 : index
    %c0_76 = arith.constant 0 : index
    %111 = vector.load %arg4[%c3_74, %c0_75, %c0_76] : memref<4x128x8xf32, #tpu.memory_space<vmem>>, vector<1x128x8xf32>
    %112 = vector.shape_cast %111 : vector<1x128x8xf32> to vector<128x8xf32>
    %113 = vector.broadcast %74 : vector<1x8xf32> to vector<128x8xf32>
    %114 = arith.mulf %112, %113 : vector<128x8xf32>
    %115 = vector.broadcast %77 : vector<1x8xf32> to vector<128x8xf32>
    %116 = arith.addf %114, %115 : vector<128x8xf32>
    %cst_77 = arith.constant 0.000000e+00 : f32
    %117 = vector.broadcast %cst_77 : f32 to vector<128x8xf32>
    %118 = arith.maximumf %116, %117 : vector<128x8xf32>
    %c3_78 = arith.constant 3 : index
    %c0_79 = arith.constant 0 : index
    %c0_80 = arith.constant 0 : index
    %119 = vector.load %arg4[%c3_78, %c0_79, %c0_80] : memref<4x128x8xf32, #tpu.memory_space<vmem>>, vector<1x128x8xf32>
    %120 = vector.shape_cast %119 : vector<1x128x8xf32> to vector<128x8xf32>
    %121 = vector.shape_cast %118 : vector<128x8xf32> to vector<1x128x8xf32>
    tpu.vector_store %arg4[%c3_78, %c0_79, %c0_80], %121 {strides = array<i32>} : memref<4x128x8xf32, #tpu.memory_space<vmem>>, vector<1x128x8xf32>,
    return
  }
  func.func @transform_0(%arg0: i32) -> (i32, i32, i32) {
    %c0_i32 = arith.constant 0 : i32
    %c0_i32_0 = arith.constant 0 : i32
    %c0_i32_1 = arith.constant 0 : i32
    %c0_i32_2 = arith.constant 0 : i32
    return %c0_i32, %c0_i32_0, %c0_i32_1 : i32, i32, i32
  }
  func.func @transform_1(%arg0: i32) -> (i32, i32, i32) {
    %c0_i32 = arith.constant 0 : i32
    %c0_i32_0 = arith.constant 0 : i32
    %c0_i32_1 = arith.constant 0 : i32
    %c0_i32_2 = arith.constant 0 : i32
    return %c0_i32, %c0_i32_0, %c0_i32_1 : i32, i32, i32
  }
  func.func @transform_2(%arg0: i32) -> (i32, i32) {
    %c0_i32 = arith.constant 0 : i32
    %c0_i32_0 = arith.constant 0 : i32
    %c0_i32_1 = arith.constant 0 : i32
    return %c0_i32, %c0_i32_0 : i32, i32
  }
  func.func @transform_3(%arg0: i32) -> (i32, i32, i32) {
    %c0_i32 = arith.constant 0 : i32
    %c0_i32_0 = arith.constant 0 : i32
    %c0_i32_1 = arith.constant 0 : i32
    %c0_i32_2 = arith.constant 0 : i32
    return %c0_i32, %c0_i32_0, %c0_i32_1 : i32, i32, i32
  }
}

module attributes {stable_mosaic.version = 11 : i64} {
  func.func @_matmul_tanh_kernel(%arg0: i32, %arg1: memref<128x8xf32, #tpu.memory_space<vmem>>, %arg2: memref<8x75xf32, #tpu.memory_space<vmem>>, %arg3: memref<128x75xf32, #tpu.memory_space<vmem>>) attributes {dimension_semantics = [#tpu.dimension_semantics<parallel>], iteration_bounds = array<i64: 4>, scalar_prefetch = 0 : i64, scratch_operands = 0 : i64, tpu.core_type = #tpu.core_type<tc>, window_params = [{transform_indices = @transform_0, window_bounds = array<i64: 128, 8>}, {pipeline_mode = #tpu.pipeline_mode<synchronous>, transform_indices = @transform_1, window_bounds = array<i64: 8, 75>}, {transform_indices = @transform_2, window_bounds = array<i64: 128, 75>}]} {
    %c0 = arith.constant 0 : index
    %c0_0 = arith.constant 0 : index
    %0 = vector.load %arg1[%c0, %c0_0] : memref<128x8xf32, #tpu.memory_space<vmem>>, vector<128x8xf32>
    %c0_1 = arith.constant 0 : index
    %c0_2 = arith.constant 0 : index
    %1 = vector.load %arg2[%c0_1, %c0_2] : memref<8x75xf32, #tpu.memory_space<vmem>>, vector<8x75xf32>
    %cst = arith.constant dense<0.000000e+00> : vector<128x75xf32>
    %2 = tpu.matmul %0, %1, %cst {dimension_numbers = #tpu.dot_dimension_numbers<[1], [0], [0], [1], [0, 0, 1, 1], [], []>} : vector<128x8xf32>, vector<8x75xf32>, vector<128x75xf32> -> vector<128x75xf32>
    %3 = math.tanh %2 : vector<128x75xf32>
    %c0_3 = arith.constant 0 : index
    %c0_4 = arith.constant 0 : index
    %4 = vector.load %arg3[%c0_3, %c0_4] : memref<128x75xf32, #tpu.memory_space<vmem>>, vector<128x75xf32>
    tpu.vector_store %arg3[%c0_3, %c0_4], %3 {strides = array<i32>} : memref<128x75xf32, #tpu.memory_space<vmem>>, vector<128x75xf32>,
    return
  }
  func.func @transform_0(%arg0: i32) -> (i32, i32) {
    %c0_i32 = arith.constant 0 : i32
    %c0_i32_0 = arith.constant 0 : i32
    return %arg0, %c0_i32 : i32, i32
  }
  func.func @transform_1(%arg0: i32) -> (i32, i32) {
    %c0_i32 = arith.constant 0 : i32
    %c0_i32_0 = arith.constant 0 : i32
    %c0_i32_1 = arith.constant 0 : i32
    return %c0_i32, %c0_i32_0 : i32, i32
  }
  func.func @transform_2(%arg0: i32) -> (i32, i32) {
    %c0_i32 = arith.constant 0 : i32
    %c0_i32_0 = arith.constant 0 : i32
    return %arg0, %c0_i32 : i32, i32
  }
}

</mosaic_0001>

<llo_original>
// kernel: squeeze.34
$region0: #{squeeze.34}
  %s0 = inlined_call_operand.vmem [shape: f32[1,18,64], index: 0, kind: input, shape index: {}]
  %s1 = inlined_call_operand.vmem [shape: f32[2,3,3,64], index: 1, kind: output, shape index: {}]
  $region1: #{squeeze.34} parent=0
    #allocation0 [shape = 'u8[24576]{0}', space=vmem, size = 0x6000, scoped, tag = 'scoped mem for output reshape']
    %v2 = vld [vmem:[%s0] sm:$0xff]
    %vm3 = vcmask 523264
    %4 = vst.msk [vmem:[#allocation0] sm:$0x7] %vm3, %v2
    %s5 = scalar_lea.vmem [#allocation0], 5
    %6 = vst.msk [vmem:[%s5] sm:$0x38] %vm3, %v2
    %s7 = scalar_lea.vmem [#allocation0], 10
    %8 = vst.msk [vmem:[%s7] sm:$0xc0] %vm3, %v2
    %s9 = scalar_lea.vmem %s0, 8
    %v10 = vld [vmem:[%s9] sm:$0xff]
    %vm11 = vcmask 523264
    %s12 = scalar_lea.vmem [#allocation0], 18
    %13 = vst.msk [vmem:[%s12] ss:$6 sm:$0x3] %vm11, %v10
    %s14 = scalar_lea.vmem [#allocation0], 23
    %15 = vst.msk [vmem:[%s14] sm:$0xc] %vm11, %v10
    %s16 = scalar_lea.vmem [#allocation0], 28
    %17 = vst.msk [vmem:[%s16] sm:$0x70] %vm11, %v10
    %s18 = scalar_lea.vmem [#allocation0], 33
    %19 = vst.msk [vmem:[%s18] sm:$0x80] %vm11, %v10
    %s20 = scalar_lea.vmem %s0, 16
    %v21 = vld [vmem:[%s20] sm:$0x3]
    %vm22 = vcmask 523264
    %s23 = scalar_lea.vmem [#allocation0], 41
    %24 = vst.msk [vmem:[%s23] sm:$0x3] %vm22, %v21
    %s26 = sshll.u32 1, 4
    %s27 = ssub.s32 %s26, 1
    %v29 = vld [vmem:[#allocation0] sm:%s27]
    %s30 = sshll.u32 1, 4
    %s31 = ssub.s32 %s30, 1
    %32 = vst [vmem:[%s1] sm:%s31] %v29
    %s33 = scalar_lea.vmem [#allocation0], 8
    %v34 = vld [vmem:[%s33] sm:%s27]
    %s35 = sshll.u32 1, 4
    %s36 = ssub.s32 %s35, 1
    %s37 = scalar_lea.vmem %s1, 4
    %38 = vst [vmem:[%s37] sm:%s36] %v34
    %s39 = scalar_lea.vmem [#allocation0], 16
    %v40 = vld [vmem:[%s39] sm:%s27]
    %s41 = sshll.u32 1, 4
    %s42 = ssub.s32 %s41, 1
    %s43 = smul.addr 4, 2
    %s44 = scalar_lea.vmem %s1, %s43
    %45 = vst [vmem:[%s44] sm:%s42] %v40
    %s46 = scalar_lea.vmem [#allocation0], 24
    %v47 = vld [vmem:[%s46] sm:%s27]
    %s48 = sshll.u32 1, 4
    %s49 = ssub.s32 %s48, 1
    %s50 = smul.addr 4, 3
    %s51 = scalar_lea.vmem %s1, %s50
    %52 = vst [vmem:[%s51] sm:%s49] %v47
    %s53 = scalar_lea.vmem [#allocation0], 32
    %v54 = vld [vmem:[%s53] sm:%s27]
    %s55 = sshll.u32 1, 4
    %s56 = ssub.s32 %s55, 1
    %s57 = smul.addr 4, 4
    %s58 = scalar_lea.vmem %s1, %s57
    %59 = vst [vmem:[%s58] sm:%s56] %v54
    %s60 = scalar_lea.vmem [#allocation0], 40
    %v61 = vld [vmem:[%s60] sm:%s27]
    %s62 = sshll.u32 1, 4
    %s63 = ssub.s32 %s62, 1
    %s64 = smul.addr 4, 5
    %s65 = scalar_lea.vmem %s1, %s64
    %66 = vst [vmem:[%s65] sm:%s63] %v61

// kernel: decoder_forward_pallas.5
$region0: #{decoder_forward_pallas.5}
  #allocation0 [shape = 'u32[]', space=smem, size = 0x4, offset = 0x4, fixed_abs, tag = 'smem constant byte address 0x4 - core index']
  #allocation1 [shape = 'u32[144,128]{1,0:T(1,128)}', space=vmem, size = 0x12000, scoped, tag = 'internal scratch']
  %s0 = inlined_call_operand.vmem [shape: f32[1,18,32], index: 0, kind: input, shape index: {}]
  %s1 = inlined_call_operand.vmem [shape: f32[1,32,64], index: 1, kind: input, shape index: {}]
  %s2 = inlined_call_operand.vmem [shape: f32[2,64], index: 2, kind: input, shape index: {}]
  %s3 = inlined_call_operand.vmem [shape: f32[1,18,64], index: 3, kind: output, shape index: {}]
  %s4 = sld [smem:[#allocation0]]
  $region22: #{decoder_forward_pallas.5} parent=0
    _
  %s6 = ssub.s32 1, %s4
  %s7 = scalar_select 0, %s6, %s4
  // Predicated region
  $region2: #{decoder_forward_pallas.5} parent=0 // pred_check
    _
  $region3: #{decoder_forward_pallas.5} parent=0 // pred_check_branch
    %9 = sbr.rel (0) target = $region5
  $region4: #{decoder_forward_pallas.5} parent=0 // pred_region
    _
  $region5: #{decoder_forward_pallas.5} parent=0 // pred_fallthru
    _
  // Predicated region
  $region6: #{decoder_forward_pallas.5} parent=0 // pred_check
    _
  $region7: #{decoder_forward_pallas.5} parent=0 // pred_check_branch
    %11 = sbr.rel (0) target = $region9
  $region8: #{decoder_forward_pallas.5} parent=0 // pred_region
    _
  $region9: #{decoder_forward_pallas.5} parent=0 // pred_fallthru
    _
  // Predicated region
  $region10: #{decoder_forward_pallas.5} parent=0 // pred_check
    _
  $region11: #{decoder_forward_pallas.5} parent=0 // pred_check_branch
    %13 = sbr.rel (0) target = $region13
  $region12: #{decoder_forward_pallas.5} parent=0 // pred_region
    _
  $region13: #{decoder_forward_pallas.5} parent=0 // pred_fallthru
    _
  %v14 = vld [vmem:[%s0] sm:$0xff]
  %v15 = vld [vmem:[%s0 + $0x8] sm:$0xff]
  %v16 = vld [vmem:[%s0 + $0x10] sm:$0x3]
  %v17 = vld [vmem:[%s1] sm:$0xff]
  %v18 = vld [vmem:[%s1 + $0x8] sm:$0xff]
  %v19 = vld [vmem:[%s1 + $0x10] sm:$0xff]
  %v20 = vld [vmem:[%s1 + $0x18] sm:$0xff]
  %vm21 = vcmask 261120
  %v23 = vsel %vm21, %v14, 0
  %v26 = vsel %vm21, %v15, 0
  %v29 = vsel %vm21, %v16, 0
  %31 = vmatprep.subr.mxu0 0.0
  %32 = vmatpush1.msra.mxu0 0.0
  %33 = vmatprep.subr.mxu0 0.0
  %34 = vmatpush1.msra.mxu0 0.0
  %35 = vmatprep.subr.mxu0 0.0
  %36 = vmatpush1.msra.mxu0 0.0
  %37 = vmatprep.subr.mxu0 0.0
  %38 = vmatpush1.msra.mxu0 0.0
  %39 = vmatprep.subr.mxu0 0.0
  %40 = vmatpush1.msra.mxu0 0.0
  %41 = vmatprep.subr.mxu0 0.0
  %42 = vmatpush1.msra.mxu0 0.0
  %43 = vmatprep.subr.mxu0 0.0
  %44 = vmatpush1.msra.mxu0 0.0
  %45 = vmatprep.subr.mxu0 0.0
  %46 = vmatpush1.msra.mxu0 0.0
  %47 = vmatprep.subr.mxu0 0.0
  %48 = vmatpush1.msra.mxu0 0.0
  %49 = vmatprep.subr.mxu0 0.0
  %50 = vmatpush1.msra.mxu0 0.0
  %51 = vmatprep.subr.mxu0 0.0
  %52 = vmatpush1.msra.mxu0 0.0
  %53 = vmatprep.subr.mxu0 0.0
  %54 = vmatpush1.msra.mxu0 0.0
  %55 = vmatprep.subr.mxu0 0.0
  %56 = vmatpush1.msra.mxu0 %v20
  %57 = vmatprep.subr.mxu0 0.0
  %58 = vmatpush1.msra.mxu0 %v19
  %59 = vmatprep.subr.mxu0 0.0
  %60 = vmatpush1.msra.mxu0 %v18
  %61 = vmatprep.subr.mxu0 0.0
  %62 = vmatpush1.msra.mxu0 %v17
  %63 = vmatprep.subr.mxu0 0.0
  %64 = vmatpush2.msra.mxu0 0.0
  %65 = vmatprep.subr.mxu0 0.0
  %66 = vmatpush2.msra.mxu0 0.0
  %67 = vmatprep.subr.mxu0 0.0
  %68 = vmatpush2.msra.mxu0 0.0
  %69 = vmatprep.subr.mxu0 0.0
  %70 = vmatpush2.msra.mxu0 0.0
  %71 = vmatprep.subr.mxu0 0.0
  %72 = vmatpush2.msra.mxu0 0.0
  %73 = vmatprep.subr.mxu0 0.0
  %74 = vmatpush2.msra.mxu0 0.0
  %75 = vmatprep.subr.mxu0 0.0
  %76 = vmatpush2.msra.mxu0 0.0
  %77 = vmatprep.subr.mxu0 0.0
  %78 = vmatpush2.msra.mxu0 0.0
  %79 = vmatprep.subr.mxu0 0.0
  %80 = vmatpush2.msra.mxu0 0.0
  %81 = vmatprep.subr.mxu0 0.0
  %82 = vmatpush2.msra.mxu0 0.0
  %83 = vmatprep.subr.mxu0 0.0
  %84 = vmatpush2.msra.mxu0 0.0
  %85 = vmatprep.subr.mxu0 0.0
  %86 = vmatpush2.msra.mxu0 0.0
  %87 = vmatprep.subr.mxu0 0.0
  %88 = vmatpush2.msra.mxu0 0.0
  %89 = vmatprep.subr.mxu0 0.0
  %90 = vmatpush2.msra.mxu0 0.0
  %91 = vmatprep.subr.mxu0 0.0
  %92 = vmatpush2.msra.mxu0 0.0
  %93 = vmatprep.subr.mxu0 0.0
  %94 = vmatpush2.msra.mxu0 0.0
  %95 = vmatprep.mubr.f32.mxu0 0.0
  %96 = vmatmul.mubr.f32.gmra.mxu0 %v23
  %v97 = vpop.f32.mrf.mxu0
  %v98 = vadd.f32 0.0, %v97
  %v99 = vpop.f32.mrf.mxu0
  %100 = vmatprep.mubr.f32.mxu0 0.0
  %101 = vmatmul.mubr.f32.gmra.mxu0 %v26
  %v102 = vpop.f32.mrf.mxu0
  %v103 = vadd.f32 0.0, %v102
  %v104 = vpop.f32.mrf.mxu0
  %105 = vmatprep.mubr.f32.mxu0 0.0
  %106 = vmatmul.mubr.f32.gmra.mxu0 %v29
  %v107 = vpop.f32.mrf.mxu0
  %v108 = vadd.f32 0.0, %v107
  %v109 = vpop.f32.mrf.mxu0
  %110 = vdwg.mxu0
  %vm111 = vcmask 523264
  %112 = vst.msk [vmem:[%s3] sm:$0xff] %vm111, %v98
  %113 = vst.msk [vmem:[%s3 + $0x8] sm:$0xff] %vm111, %v103
  %vm114 = vcmask 517120
  %115 = vst.msk [vmem:[%s3 + $0x10] sm:$0x3] %vm114, %v108
  %v116 = vsel %vm111, %v98, 0.0
  %v117 = vsel %vm111, %v103, 0.0
  %v118 = vadd.f32 %v116, %v117
  %v119 = vsel %vm114, %v108, 0.0
  %v120 = vadd.f32 %v118, %v119
  %v121 = vrot.slane %v120, 4
  %v122 = vadd.f32 %v120, %v121
  %v123 = vrot.slane %v122, 2
  %v124 = vadd.f32 %v122, %v123
  %v125 = vrot.slane %v124, 1
  %v126 = vadd.f32 %v124, %v125
  %v127 = vadd.f32 %v126, 0.0
  %v128 = vmul.f32 %v98, %v98
  %v129 = vmul.f32 %v103, %v103
  %v130 = vmul.f32 %v108, %v108
  %v131 = vsel %vm111, %v128, 0.0
  %v132 = vsel %vm111, %v129, 0.0
  %v133 = vadd.f32 %v131, %v132
  %v134 = vsel %vm114, %v130, 0.0
  %v135 = vadd.f32 %v133, %v134
  %v136 = vrot.slane %v135, 4
  %v137 = vadd.f32 %v135, %v136
  %v138 = vrot.slane %v137, 2
  %v139 = vadd.f32 %v137, %v138
  %v140 = vrot.slane %v139, 1
  %v141 = vadd.f32 %v139, %v140
  %v142 = vadd.f32 %v141, 0.0
  %v143 = vmul.f32 %v127, 0.055555556
  %v144 = vmul.f32 %v142, 0.055555556
  %v145 = vmul.f32 %v143, %v143
  %v146 = vsub.f32 %v144, %v145
  %v147 = vmax.f32 %v146, 0.0
  %v148 = vld [vmem:[%s2] sm:$0x1]
  %v149 = vadd.f32 %v147, 1e-05
  %v150 = vrsqrt.pop %v149
  %v151 = vmul.f32 %v148, %v150
  %v152 = vld [vmem:[%s2 + $0x1] sm:$0x1]
  %v153 = vmul.f32 %v143, %v151
  %v154 = vsub.f32 %v152, %v153
  %v155 = vld [vmem:[%s3] sm:$0xff]
  %v156 = vld [vmem:[%s3 + $0x8] sm:$0xff]
  %v157 = vld [vmem:[%s3 + $0x10] sm:$0x3]
  %v158 = vlaneseq
  %v159 = vshrl.u32 %v158, 7
  %v160 = vsub.s32 0, %v159
  %v161 = vrot.slane %v151, %v160
  %v162 = vmul.f32 %v155, %v161
  %v163 = vmul.f32 %v156, %v161
  %v164 = vmul.f32 %v157, %v161
  %v165 = vlaneseq
  %v166 = vshrl.u32 %v165, 7
  %v167 = vsub.s32 0, %v166
  %v168 = vrot.slane %v154, %v167
  %v169 = vadd.f32 %v162, %v168
  %v170 = vadd.f32 %v163, %v168
  %v171 = vadd.f32 %v164, %v168
  %v172 = vmax.f32 %v169, 0.0
  %v173 = vmax.f32 %v170, 0.0
  %v174 = vmax.f32 %v171, 0.0
  %175 = vst.msk [vmem:[%s3] sm:$0xff] %vm111, %v172
  %176 = vst.msk [vmem:[%s3 + $0x8] sm:$0xff] %vm111, %v173
  %177 = vst.msk [vmem:[%s3 + $0x10] sm:$0x3] %vm114, %v174
  // Predicated region
  $region14: #{decoder_forward_pallas.5} parent=0 // pred_check
    _
  $region15: #{decoder_forward_pallas.5} parent=0 // pred_check_branch
    %179 = sbr.rel (0) target = $region17
  $region16: #{decoder_forward_pallas.5} parent=0 // pred_region
    _
  $region17: #{decoder_forward_pallas.5} parent=0 // pred_fallthru
    _
  // Predicated region
  $region18: #{decoder_forward_pallas.5} parent=0 // pred_check
    _
  $region19: #{decoder_forward_pallas.5} parent=0 // pred_check_branch
    %181 = sbr.rel (0) target = $region21
  $region20: #{decoder_forward_pallas.5} parent=0 // pred_region
    _
  $region21: #{decoder_forward_pallas.5} parent=0 // pred_fallthru
    _

// kernel: decoder_forward_pallas.6
$region0: #{decoder_forward_pallas.6}
  #allocation0 [shape = 'u32[]', space=smem, size = 0x4, offset = 0x4, fixed_abs, tag = 'smem constant byte address 0x4 - core index']
  #allocation1 [shape = 'u32[144,128]{1,0:T(1,128)}', space=vmem, size = 0x12000, scoped, tag = 'internal scratch']
  %s0 = inlined_call_operand.vmem [shape: f32[1,32,1024], index: 0, kind: input, shape index: {}]
  %s1 = inlined_call_operand.vmem [shape: f32[1,1024,32], index: 1, kind: input, shape index: {}]
  %s2 = inlined_call_operand.vmem [shape: f32[2,32], index: 2, kind: input, shape index: {}]
  %s3 = inlined_call_operand.vmem [shape: f32[1,32,32], index: 3, kind: output, shape index: {}]
  %s4 = sld [smem:[#allocation0]]
  $region22: #{decoder_forward_pallas.6} parent=0
    _
  %s6 = ssub.s32 1, %s4
  %s7 = scalar_select 0, %s6, %s4
  // Predicated region
  $region2: #{decoder_forward_pallas.6} parent=0 // pred_check
    _
  $region3: #{decoder_forward_pallas.6} parent=0 // pred_check_branch
    %9 = sbr.rel (0) target = $region5
  $region4: #{decoder_forward_pallas.6} parent=0 // pred_region
    _
  $region5: #{decoder_forward_pallas.6} parent=0 // pred_fallthru
    _
  // Predicated region
  $region6: #{decoder_forward_pallas.6} parent=0 // pred_check
    _
  $region7: #{decoder_forward_pallas.6} parent=0 // pred_check_branch
    %11 = sbr.rel (0) target = $region9
  $region8: #{decoder_forward_pallas.6} parent=0 // pred_region
    _
  $region9: #{decoder_forward_pallas.6} parent=0 // pred_fallthru
    _
  // Predicated region
  $region10: #{decoder_forward_pallas.6} parent=0 // pred_check
    _
  $region11: #{decoder_forward_pallas.6} parent=0 // pred_check_branch
    %13 = sbr.rel (0) target = $region13
  $region12: #{decoder_forward_pallas.6} parent=0 // pred_region
    _
  $region13: #{decoder_forward_pallas.6} parent=0 // pred_fallthru
    _
  %v14 = vld [vmem:[%s0] sm:$0xff]
  %v15 = vld [vmem:[%s0 + $0x8] sm:$0xff]
  %v16 = vld [vmem:[%s0 + $0x10] sm:$0xff]
  %v17 = vld [vmem:[%s0 + $0x18] sm:$0xff]
  %v18 = vld [vmem:[%s0 + $0x20] sm:$0xff]
  %v19 = vld [vmem:[%s0 + $0x28] sm:$0xff]
  %v20 = vld [vmem:[%s0 + $0x30] sm:$0xff]
  %v21 = vld [vmem:[%s0 + $0x38] sm:$0xff]
  %v22 = vld [vmem:[%s0 + $0x40] sm:$0xff]
  %v23 = vld [vmem:[%s0 + $0x48] sm:$0xff]
  %v24 = vld [vmem:[%s0 + $0x50] sm:$0xff]
  %v25 = vld [vmem:[%s0 + $0x58] sm:$0xff]
  %v26 = vld [vmem:[%s0 + $0x60] sm:$0xff]
  %v27 = vld [vmem:[%s0 + $0x68] sm:$0xff]
  %v28 = vld [vmem:[%s0 + $0x70] sm:$0xff]
  %v29 = vld [vmem:[%s0 + $0x78] sm:$0xff]
  %v30 = vld [vmem:[%s0 + $0x80] sm:$0xff]
  %v31 = vld [vmem:[%s0 + $0x88] sm:$0xff]
  %v32 = vld [vmem:[%s0 + $0x90] sm:$0xff]
  %v33 = vld [vmem:[%s0 + $0x98] sm:$0xff]
  %v34 = vld [vmem:[%s0 + $0xa0] sm:$0xff]
  %v35 = vld [vmem:[%s0 + $0xa8] sm:$0xff]
  %v36 = vld [vmem:[%s0 + $0xb0] sm:$0xff]
  %v37 = vld [vmem:[%s0 + $0xb8] sm:$0xff]
  %v38 = vld [vmem:[%s0 + $0xc0] sm:$0xff]
  %v39 = vld [vmem:[%s0 + $0xc8] sm:$0xff]
  %v40 = vld [vmem:[%s0 + $0xd0] sm:$0xff]
  %v41 = vld [vmem:[%s0 + $0xd8] sm:$0xff]
  %v42 = vld [vmem:[%s0 + $0xe0] sm:$0xff]
  %v43 = vld [vmem:[%s0 + $0xe8] sm:$0xff]
  %v44 = vld [vmem:[%s0 + $0xf0] sm:$0xff]
  %v45 = vld [vmem:[%s0 + $0xf8] sm:$0xff]
  %v46 = vld [vmem:[%s1] sm:$0xff]
  %v47 = vld [vmem:[%s1 + $0x8] sm:$0xff]
  %v48 = vld [vmem:[%s1 + $0x10] sm:$0xff]
  %v49 = vld [vmem:[%s1 + $0x18] sm:$0xff]
  %v50 = vld [vmem:[%s1 + $0x20] sm:$0xff]
  %v51 = vld [vmem:[%s1 + $0x28] sm:$0xff]
  %v52 = vld [vmem:[%s1 + $0x30] sm:$0xff]
  %v53 = vld [vmem:[%s1 + $0x38] sm:$0xff]
  %v54 = vld [vmem:[%s1 + $0x40] sm:$0xff]
  %v55 = vld [vmem:[%s1 + $0x48] sm:$0xff]
  %v56 = vld [vmem:[%s1 + $0x50] sm:$0xff]
  %v57 = vld [vmem:[%s1 + $0x58] sm:$0xff]
  %v58 = vld [vmem:[%s1 + $0x60] sm:$0xff]
  %v59 = vld [vmem:[%s1 + $0x68] sm:$0xff]
  %v60 = vld [vmem:[%s1 + $0x70] sm:$0xff]
  %v61 = vld [vmem:[%s1 + $0x78] sm:$0xff]
  %v62 = vld [vmem:[%s1 + $0x80] sm:$0xff]
  %v63 = vld [vmem:[%s1 + $0x88] sm:$0xff]
  %v64 = vld [vmem:[%s1 + $0x90] sm:$0xff]
  %v65 = vld [vmem:[%s1 + $0x98] sm:$0xff]
  %v66 = vld [vmem:[%s1 + $0xa0] sm:$0xff]
  %v67 = vld [vmem:[%s1 + $0xa8] sm:$0xff]
  %v68 = vld [vmem:[%s1 + $0xb0] sm:$0xff]
  %v69 = vld [vmem:[%s1 + $0xb8] sm:$0xff]
  %v70 = vld [vmem:[%s1 + $0xc0] sm:$0xff]
  %v71 = vld [vmem:[%s1 + $0xc8] sm:$0xff]
  %v72 = vld [vmem:[%s1 + $0xd0] sm:$0xff]
  %v73 = vld [vmem:[%s1 + $0xd8] sm:$0xff]
  %v74 = vld [vmem:[%s1 + $0xe0] sm:$0xff]
  %v75 = vld [vmem:[%s1 + $0xe8] sm:$0xff]
  %v76 = vld [vmem:[%s1 + $0xf0] sm:$0xff]
  %v77 = vld [vmem:[%s1 + $0xf8] sm:$0xff]
  %v78 = vld [vmem:[%s1 + $0x100] sm:$0xff]
  %v79 = vld [vmem:[%s1 + $0x108] sm:$0xff]
  %v80 = vld [vmem:[%s1 + $0x110] sm:$0xff]
  %v81 = vld [vmem:[%s1 + $0x118] sm:$0xff]
  %v82 = vld [vmem:[%s1 + $0x120] sm:$0xff]
  %v83 = vld [vmem:[%s1 + $0x128] sm:$0xff]
  %v84 = vld [vmem:[%s1 + $0x130] sm:$0xff]
  %v85 = vld [vmem:[%s1 + $0x138] sm:$0xff]
  %v86 = vld [vmem:[%s1 + $0x140] sm:$0xff]
  %v87 = vld [vmem:[%s1 + $0x148] sm:$0xff]
  %v88 = vld [vmem:[%s1 + $0x150] sm:$0xff]
  %v89 = vld [vmem:[%s1 + $0x158] sm:$0xff]
  %v90 = vld [vmem:[%s1 + $0x160] sm:$0xff]
  %v91 = vld [vmem:[%s1 + $0x168] sm:$0xff]
  %v92 = vld [vmem:[%s1 + $0x170] sm:$0xff]
  %v93 = vld [vmem:[%s1 + $0x178] sm:$0xff]
  %v94 = vld [vmem:[%s1 + $0x180] sm:$0xff]
  %v95 = vld [vmem:[%s1 + $0x188] sm:$0xff]
  %v96 = vld [vmem:[%s1 + $0x190] sm:$0xff]
  %v97 = vld [vmem:[%s1 + $0x198] sm:$0xff]
  %v98 = vld [vmem:[%s1 + $0x1a0] sm:$0xff]
  %v99 = vld [vmem:[%s1 + $0x1a8] sm:$0xff]
  %v100 = vld [vmem:[%s1 + $0x1b0] sm:$0xff]
  %v101 = vld [vmem:[%s1 + $0x1b8] sm:$0xff]
  %v102 = vld [vmem:[%s1 + $0x1c0] sm:$0xff]
  %v103 = vld [vmem:[%s1 + $0x1c8] sm:$0xff]
  %v104 = vld [vmem:[%s1 + $0x1d0] sm:$0xff]
  %v105 = vld [vmem:[%s1 + $0x1d8] sm:$0xff]
  %v106 = vld [vmem:[%s1 + $0x1e0] sm:$0xff]
  %v107 = vld [vmem:[%s1 + $0x1e8] sm:$0xff]
  %v108 = vld [vmem:[%s1 + $0x1f0] sm:$0xff]
  %v109 = vld [vmem:[%s1 + $0x1f8] sm:$0xff]
  %v110 = vld [vmem:[%s1 + $0x200] sm:$0xff]
  %v111 = vld [vmem:[%s1 + $0x208] sm:$0xff]
  %v112 = vld [vmem:[%s1 + $0x210] sm:$0xff]
  %v113 = vld [vmem:[%s1 + $0x218] sm:$0xff]
  %v114 = vld [vmem:[%s1 + $0x220] sm:$0xff]
  %v115 = vld [vmem:[%s1 + $0x228] sm:$0xff]
  %v116 = vld [vmem:[%s1 + $0x230] sm:$0xff]
  %v117 = vld [vmem:[%s1 + $0x238] sm:$0xff]
  %v118 = vld [vmem:[%s1 + $0x240] sm:$0xff]
  %v119 = vld [vmem:[%s1 + $0x248] sm:$0xff]
  %v120 = vld [vmem:[%s1 + $0x250] sm:$0xff]
  %v121 = vld [vmem:[%s1 + $0x258] sm:$0xff]
  %v122 = vld [vmem:[%s1 + $0x260] sm:$0xff]
  %v123 = vld [vmem:[%s1 + $0x268] sm:$0xff]
  %v124 = vld [vmem:[%s1 + $0x270] sm:$0xff]
  %v125 = vld [vmem:[%s1 + $0x278] sm:$0xff]
  %v126 = vld [vmem:[%s1 + $0x280] sm:$0xff]
  %v127 = vld [vmem:[%s1 + $0x288] sm:$0xff]
  %v128 = vld [vmem:[%s1 + $0x290] sm:$0xff]
  %v129 = vld [vmem:[%s1 + $0x298] sm:$0xff]
  %v130 = vld [vmem:[%s1 + $0x2a0] sm:$0xff]
  %v131 = vld [vmem:[%s1 + $0x2a8] sm:$0xff]
  %v132 = vld [vmem:[%s1 + $0x2b0] sm:$0xff]
  %v133 = vld [vmem:[%s1 + $0x2b8] sm:$0xff]
  %v134 = vld [vmem:[%s1 + $0x2c0] sm:$0xff]
  %v135 = vld [vmem:[%s1 + $0x2c8] sm:$0xff]
  %v136 = vld [vmem:[%s1 + $0x2d0] sm:$0xff]
  %v137 = vld [vmem:[%s1 + $0x2d8] sm:$0xff]
  %v138 = vld [vmem:[%s1 + $0x2e0] sm:$0xff]
  %v139 = vld [vmem:[%s1 + $0x2e8] sm:$0xff]
  %v140 = vld [vmem:[%s1 + $0x2f0] sm:$0xff]
  %v141 = vld [vmem:[%s1 + $0x2f8] sm:$0xff]
  %v142 = vld [vmem:[%s1 + $0x300] sm:$0xff]
  %v143 = vld [vmem:[%s1 + $0x308] sm:$0xff]
  %v144 = vld [vmem:[%s1 + $0x310] sm:$0xff]
  %v145 = vld [vmem:[%s1 + $0x318] sm:$0xff]
  %v146 = vld [vmem:[%s1 + $0x320] sm:$0xff]
  %v147 = vld [vmem:[%s1 + $0x328] sm:$0xff]
  %v148 = vld [vmem:[%s1 + $0x330] sm:$0xff]
  %v149 = vld [vmem:[%s1 + $0x338] sm:$0xff]
  %v150 = vld [vmem:[%s1 + $0x340] sm:$0xff]
  %v151 = vld [vmem:[%s1 + $0x348] sm:$0xff]
  %v152 = vld [vmem:[%s1 + $0x350] sm:$0xff]
  %v153 = vld [vmem:[%s1 + $0x358] sm:$0xff]
  %v154 = vld [vmem:[%s1 + $0x360] sm:$0xff]
  %v155 = vld [vmem:[%s1 + $0x368] sm:$0xff]
  %v156 = vld [vmem:[%s1 + $0x370] sm:$0xff]
  %v157 = vld [vmem:[%s1 + $0x378] sm:$0xff]
  %v158 = vld [vmem:[%s1 + $0x380] sm:$0xff]
  %v159 = vld [vmem:[%s1 + $0x388] sm:$0xff]
  %v160 = vld [vmem:[%s1 + $0x390] sm:$0xff]
  %v161 = vld [vmem:[%s1 + $0x398] sm:$0xff]
  %v162 = vld [vmem:[%s1 + $0x3a0] sm:$0xff]
  %v163 = vld [vmem:[%s1 + $0x3a8] sm:$0xff]
  %v164 = vld [vmem:[%s1 + $0x3b0] sm:$0xff]
  %v165 = vld [vmem:[%s1 + $0x3b8] sm:$0xff]
  %v166 = vld [vmem:[%s1 + $0x3c0] sm:$0xff]
  %v167 = vld [vmem:[%s1 + $0x3c8] sm:$0xff]
  %v168 = vld [vmem:[%s1 + $0x3d0] sm:$0xff]
  %v169 = vld [vmem:[%s1 + $0x3d8] sm:$0xff]
  %v170 = vld [vmem:[%s1 + $0x3e0] sm:$0xff]
  %v171 = vld [vmem:[%s1 + $0x3e8] sm:$0xff]
  %v172 = vld [vmem:[%s1 + $0x3f0] sm:$0xff]
  %v173 = vld [vmem:[%s1 + $0x3f8] sm:$0xff]
  %174 = vmatprep.subr.mxu0 0.0
  %175 = vmatpush1.msra.mxu0 %v61
  %176 = vmatprep.subr.mxu0 0.0
  %177 = vmatpush1.msra.mxu0 %v60
  %178 = vmatprep.subr.mxu0 0.0
  %179 = vmatpush1.msra.mxu0 %v59
  %180 = vmatprep.subr.mxu0 0.0
  %181 = vmatpush1.msra.mxu0 %v58
  %182 = vmatprep.subr.mxu0 0.0
  %183 = vmatpush1.msra.mxu0 %v57
  %184 = vmatprep.subr.mxu0 0.0
  %185 = vmatpush1.msra.mxu0 %v56
  %186 = vmatprep.subr.mxu0 0.0
  %187 = vmatpush1.msra.mxu0 %v55
  %188 = vmatprep.subr.mxu0 0.0
  %189 = vmatpush1.msra.mxu0 %v54
  %190 = vmatprep.subr.mxu0 0.0
  %191 = vmatpush1.msra.mxu0 %v53
  %192 = vmatprep.subr.mxu0 0.0
  %193 = vmatpush1.msra.mxu0 %v52
  %194 = vmatprep.subr.mxu0 0.0
  %195 = vmatpush1.msra.mxu0 %v51
  %196 = vmatprep.subr.mxu0 0.0
  %197 = vmatpush1.msra.mxu0 %v50
  %198 = vmatprep.subr.mxu0 0.0
  %199 = vmatpush1.msra.mxu0 %v49
  %200 = vmatprep.subr.mxu0 0.0
  %201 = vmatpush1.msra.mxu0 %v48
  %202 = vmatprep.subr.mxu0 0.0
  %203 = vmatpush1.msra.mxu0 %v47
  %204 = vmatprep.subr.mxu0 0.0
  %205 = vmatpush1.msra.mxu0 %v46
  %206 = vmatprep.subr.mxu0 0.0
  %207 = vmatpush2.msra.mxu0 %v77
  %208 = vmatprep.subr.mxu0 0.0
  %209 = vmatpush2.msra.mxu0 %v76
  %210 = vmatprep.subr.mxu0 0.0
  %211 = vmatpush2.msra.mxu0 %v75
  %212 = vmatprep.subr.mxu0 0.0
  %213 = vmatpush2.msra.mxu0 %v74
  %214 = vmatprep.subr.mxu0 0.0
  %215 = vmatpush2.msra.mxu0 %v73
  %216 = vmatprep.subr.mxu0 0.0
  %217 = vmatpush2.msra.mxu0 %v72
  %218 = vmatprep.subr.mxu0 0.0
  %219 = vmatpush2.msra.mxu0 %v71
  %220 = vmatprep.subr.mxu0 0.0
  %221 = vmatpush2.msra.mxu0 %v70
  %222 = vmatprep.subr.mxu0 0.0
  %223 = vmatpush2.msra.mxu0 %v69
  %224 = vmatprep.subr.mxu0 0.0
  %225 = vmatpush2.msra.mxu0 %v68
  %226 = vmatprep.subr.mxu0 0.0
  %227 = vmatpush2.msra.mxu0 %v67
  %228 = vmatprep.subr.mxu0 0.0
  %229 = vmatpush2.msra.mxu0 %v66
  %230 = vmatprep.subr.mxu0 0.0
  %231 = vmatpush2.msra.mxu0 %v65
  %232 = vmatprep.subr.mxu0 0.0
  %233 = vmatpush2.msra.mxu0 %v64
  %234 = vmatprep.subr.mxu0 0.0
  %235 = vmatpush2.msra.mxu0 %v63
  %236 = vmatprep.subr.mxu0 0.0
  %237 = vmatpush2.msra.mxu0 %v62
  %238 = vmatprep.mubr.f32.mxu0 %v15
  %239 = vmatmul.mubr.f32.gmra.mxu0 %v14
  %v240 = vpop.f32.mrf.mxu0
  %v241 = vadd.f32 0.0, %v240
  %v242 = vpop.f32.mrf.mxu0
  %243 = vmatprep.mubr.f32.mxu0 %v23
  %244 = vmatmul.mubr.f32.gmra.mxu0 %v22
  %v245 = vpop.f32.mrf.mxu0
  %v246 = vadd.f32 0.0, %v245
  %v247 = vpop.f32.mrf.mxu0
  %248 = vmatprep.mubr.f32.mxu0 %v31
  %249 = vmatmul.mubr.f32.gmra.mxu0 %v30
  %v250 = vpop.f32.mrf.mxu0
  %v251 = vadd.f32 0.0, %v250
  %v252 = vpop.f32.mrf.mxu0
  %253 = vmatprep.mubr.f32.mxu0 %v39
  %254 = vmatmul.mubr.f32.gmra.mxu0 %v38
  %v255 = vpop.f32.mrf.mxu0
  %v256 = vadd.f32 0.0, %v255
  %v257 = vpop.f32.mrf.mxu0
  %258 = vdwg.mxu0
  %259 = vmatprep.subr.mxu0 0.0
  %260 = vmatpush1.msra.mxu0 %v93
  %261 = vmatprep.subr.mxu0 0.0
  %262 = vmatpush1.msra.mxu0 %v92
  %263 = vmatprep.subr.mxu0 0.0
  %264 = vmatpush1.msra.mxu0 %v91
  %265 = vmatprep.subr.mxu0 0.0
  %266 = vmatpush1.msra.mxu0 %v90
  %267 = vmatprep.subr.mxu0 0.0
  %268 = vmatpush1.msra.mxu0 %v89
  %269 = vmatprep.subr.mxu0 0.0
  %270 = vmatpush1.msra.mxu0 %v88
  %271 = vmatprep.subr.mxu0 0.0
  %272 = vmatpush1.msra.mxu0 %v87
  %273 = vmatprep.subr.mxu0 0.0
  %274 = vmatpush1.msra.mxu0 %v86
  %275 = vmatprep.subr.mxu0 0.0
  %276 = vmatpush1.msra.mxu0 %v85
  %277 = vmatprep.subr.mxu0 0.0
  %278 = vmatpush1.msra.mxu0 %v84
  %279 = vmatprep.subr.mxu0 0.0
  %280 = vmatpush1.msra.mxu0 %v83
  %281 = vmatprep.subr.mxu0 0.0
  %282 = vmatpush1.msra.mxu0 %v82
  %283 = vmatprep.subr.mxu0 0.0
  %284 = vmatpush1.msra.mxu0 %v81
  %285 = vmatprep.subr.mxu0 0.0
  %286 = vmatpush1.msra.mxu0 %v80
  %287 = vmatprep.subr.mxu0 0.0
  %288 = vmatpush1.msra.mxu0 %v79
  %289 = vmatprep.subr.mxu0 0.0
  %290 = vmatpush1.msra.mxu0 %v78
  %291 = vmatprep.subr.mxu0 0.0
  %292 = vmatpush2.msra.mxu0 %v109
  %293 = vmatprep.subr.mxu0 0.0
  %294 = vmatpush2.msra.mxu0 %v108
  %295 = vmatprep.subr.mxu0 0.0
  %296 = vmatpush2.msra.mxu0 %v107
  %297 = vmatprep.subr.mxu0 0.0
  %298 = vmatpush2.msra.mxu0 %v106
  %299 = vmatprep.subr.mxu0 0.0
  %300 = vmatpush2.msra.mxu0 %v105
  %301 = vmatprep.subr.mxu0 0.0
  %302 = vmatpush2.msra.mxu0 %v104
  %303 = vmatprep.subr.mxu0 0.0
  %304 = vmatpush2.msra.mxu0 %v103
  %305 = vmatprep.subr.mxu0 0.0
  %306 = vmatpush2.msra.mxu0 %v102
  %307 = vmatprep.subr.mxu0 0.0
  %308 = vmatpush2.msra.mxu0 %v101
  %309 = vmatprep.subr.mxu0 0.0
  %310 = vmatpush2.msra.mxu0 %v100
  %311 = vmatprep.subr.mxu0 0.0
  %312 = vmatpush2.msra.mxu0 %v99
  %313 = vmatprep.subr.mxu0 0.0
  %314 = vmatpush2.msra.mxu0 %v98
  %315 = vmatprep.subr.mxu0 0.0
  %316 = vmatpush2.msra.mxu0 %v97
  %317 = vmatprep.subr.mxu0 0.0
  %318 = vmatpush2.msra.mxu0 %v96
  %319 = vmatprep.subr.mxu0 0.0
  %320 = vmatpush2.msra.mxu0 %v95
  %321 = vmatprep.subr.mxu0 0.0
  %322 = vmatpush2.msra.mxu0 %v94
  %323 = vmatprep.mubr.f32.mxu0 %v17
  %324 = vmatmul.mubr.f32.gmra.mxu0 %v16
  %v325 = vpop.f32.mrf.mxu0
  %v326 = vadd.f32 %v241, %v325
  %v327 = vpop.f32.mrf.mxu0
  %328 = vmatprep.mubr.f32.mxu0 %v25
  %329 = vmatmul.mubr.f32.gmra.mxu0 %v24
  %v330 = vpop.f32.mrf.mxu0
  %v331 = vadd.f32 %v246, %v330
  %v332 = vpop.f32.mrf.mxu0
  %333 = vmatprep.mubr.f32.mxu0 %v33
  %334 = vmatmul.mubr.f32.gmra.mxu0 %v32
  %v335 = vpop.f32.mrf.mxu0
  %v336 = vadd.f32 %v251, %v335
  %v337 = vpop.f32.mrf.mxu0
  %338 = vmatprep.mubr.f32.mxu0 %v41
  %339 = vmatmul.mubr.f32.gmra.mxu0 %v40
  %v340 = vpop.f32.mrf.mxu0
  %v341 = vadd.f32 %v256, %v340
  %v342 = vpop.f32.mrf.mxu0
  %343 = vdwg.mxu0
  %344 = vmatprep.subr.mxu0 0.0
  %345 = vmatpush1.msra.mxu0 %v125
  %346 = vmatprep.subr.mxu0 0.0
  %347 = vmatpush1.msra.mxu0 %v124
  %348 = vmatprep.subr.mxu0 0.0
  %349 = vmatpush1.msra.mxu0 %v123
  %350 = vmatprep.subr.mxu0 0.0
  %351 = vmatpush1.msra.mxu0 %v122
  %352 = vmatprep.subr.mxu0 0.0
  %353 = vmatpush1.msra.mxu0 %v121
  %354 = vmatprep.subr.mxu0 0.0
  %355 = vmatpush1.msra.mxu0 %v120
  %356 = vmatprep.subr.mxu0 0.0
  %357 = vmatpush1.msra.mxu0 %v119
  %358 = vmatprep.subr.mxu0 0.0
  %359 = vmatpush1.msra.mxu0 %v118
  %360 = vmatprep.subr.mxu0 0.0
  %361 = vmatpush1.msra.mxu0 %v117
  %362 = vmatprep.subr.mxu0 0.0
  %363 = vmatpush1.msra.mxu0 %v116
  %364 = vmatprep.subr.mxu0 0.0
  %365 = vmatpush1.msra.mxu0 %v115
  %366 = vmatprep.subr.mxu0 0.0
  %367 = vmatpush1.msra.mxu0 %v114
  %368 = vmatprep.subr.mxu0 0.0
  %369 = vmatpush1.msra.mxu0 %v113
  %370 = vmatprep.subr.mxu0 0.0
  %371 = vmatpush1.msra.mxu0 %v112
  %372 = vmatprep.subr.mxu0 0.0
  %373 = vmatpush1.msra.mxu0 %v111
  %374 = vmatprep.subr.mxu0 0.0
  %375 = vmatpush1.msra.mxu0 %v110
  %376 = vmatprep.subr.mxu0 0.0
  %377 = vmatpush2.msra.mxu0 %v141
  %378 = vmatprep.subr.mxu0 0.0
  %379 = vmatpush2.msra.mxu0 %v140
  %380 = vmatprep.subr.mxu0 0.0
  %381 = vmatpush2.msra.mxu0 %v139
  %382 = vmatprep.subr.mxu0 0.0
  %383 = vmatpush2.msra.mxu0 %v138
  %384 = vmatprep.subr.mxu0 0.0
  %385 = vmatpush2.msra.mxu0 %v137
  %386 = vmatprep.subr.mxu0 0.0
  %387 = vmatpush2.msra.mxu0 %v136
  %388 = vmatprep.subr.mxu0 0.0
  %389 = vmatpush2.msra.mxu0 %v135
  %390 = vmatprep.subr.mxu0 0.0
  %391 = vmatpush2.msra.mxu0 %v134
  %392 = vmatprep.subr.mxu0 0.0
  %393 = vmatpush2.msra.mxu0 %v133
  %394 = vmatprep.subr.mxu0 0.0
  %395 = vmatpush2.msra.mxu0 %v132
  %396 = vmatprep.subr.mxu0 0.0
  %397 = vmatpush2.msra.mxu0 %v131
  %398 = vmatprep.subr.mxu0 0.0
  %399 = vmatpush2.msra.mxu0 %v130
  %400 = vmatprep.subr.mxu0 0.0
  %401 = vmatpush2.msra.mxu0 %v129
  %402 = vmatprep.subr.mxu0 0.0
  %403 = vmatpush2.msra.mxu0 %v128
  %404 = vmatprep.subr.mxu0 0.0
  %405 = vmatpush2.msra.mxu0 %v127
  %406 = vmatprep.subr.mxu0 0.0
  %407 = vmatpush2.msra.mxu0 %v126
  %408 = vmatprep.mubr.f32.mxu0 %v19
  %409 = vmatmul.mubr.f32.gmra.mxu0 %v18
  %v410 = vpop.f32.mrf.mxu0
  %v411 = vadd.f32 %v326, %v410
  %v412 = vpop.f32.mrf.mxu0
  %413 = vmatprep.mubr.f32.mxu0 %v27
  %414 = vmatmul.mubr.f32.gmra.mxu0 %v26
  %v415 = vpop.f32.mrf.mxu0
  %v416 = vadd.f32 %v331, %v415
  %v417 = vpop.f32.mrf.mxu0
  %418 = vmatprep.mubr.f32.mxu0 %v35
  %419 = vmatmul.mubr.f32.gmra.mxu0 %v34
  %v420 = vpop.f32.mrf.mxu0
  %v421 = vadd.f32 %v336, %v420
  %v422 = vpop.f32.mrf.mxu0
  %423 = vmatprep.mubr.f32.mxu0 %v43
  %424 = vmatmul.mubr.f32.gmra.mxu0 %v42
  %v425 = vpop.f32.mrf.mxu0
  %v426 = vadd.f32 %v341, %v425
  %v427 = vpop.f32.mrf.mxu0
  %428 = vdwg.mxu0
  %429 = vmatprep.subr.mxu0 0.0
  %430 = vmatpush1.msra.mxu0 %v157
  %431 = vmatprep.subr.mxu0 0.0
  %432 = vmatpush1.msra.mxu0 %v156
  %433 = vmatprep.subr.mxu0 0.0
  %434 = vmatpush1.msra.mxu0 %v155
  %435 = vmatprep.subr.mxu0 0.0
  %436 = vmatpush1.msra.mxu0 %v154
  %437 = vmatprep.subr.mxu0 0.0
  %438 = vmatpush1.msra.mxu0 %v153
  %439 = vmatprep.subr.mxu0 0.0
  %440 = vmatpush1.msra.mxu0 %v152
  %441 = vmatprep.subr.mxu0 0.0
  %442 = vmatpush1.msra.mxu0 %v151
  %443 = vmatprep.subr.mxu0 0.0
  %444 = vmatpush1.msra.mxu0 %v150
  %445 = vmatprep.subr.mxu0 0.0
  %446 = vmatpush1.msra.mxu0 %v149
  %447 = vmatprep.subr.mxu0 0.0
  %448 = vmatpush1.msra.mxu0 %v148
  %449 = vmatprep.subr.mxu0 0.0
  %450 = vmatpush1.msra.mxu0 %v147
  %451 = vmatprep.subr.mxu0 0.0
  %452 = vmatpush1.msra.mxu0 %v146
  %453 = vmatprep.subr.mxu0 0.0
  %454 = vmatpush1.msra.mxu0 %v145
  %455 = vmatprep.subr.mxu0 0.0
  %456 = vmatpush1.msra.mxu0 %v144
  %457 = vmatprep.subr.mxu0 0.0
  %458 = vmatpush1.msra.mxu0 %v143
  %459 = vmatprep.subr.mxu0 0.0
  %460 = vmatpush1.msra.mxu0 %v142
  %461 = vmatprep.subr.mxu0 0.0
  %462 = vmatpush2.msra.mxu0 %v173
  %463 = vmatprep.subr.mxu0 0.0
  %464 = vmatpush2.msra.mxu0 %v172
  %465 = vmatprep.subr.mxu0 0.0
  %466 = vmatpush2.msra.mxu0 %v171
  %467 = vmatprep.subr.mxu0 0.0
  %468 = vmatpush2.msra.mxu0 %v170
  %469 = vmatprep.subr.mxu0 0.0
  %470 = vmatpush2.msra.mxu0 %v169
  %471 = vmatprep.subr.mxu0 0.0
  %472 = vmatpush2.msra.mxu0 %v168
  %473 = vmatprep.subr.mxu0 0.0
  %474 = vmatpush2.msra.mxu0 %v167
  %475 = vmatprep.subr.mxu0 0.0
  %476 = vmatpush2.msra.mxu0 %v166
  %477 = vmatprep.subr.mxu0 0.0
  %478 = vmatpush2.msra.mxu0 %v165
  %479 = vmatprep.subr.mxu0 0.0
  %480 = vmatpush2.msra.mxu0 %v164
  %481 = vmatprep.subr.mxu0 0.0
  %482 = vmatpush2.msra.mxu0 %v163
  %483 = vmatprep.subr.mxu0 0.0
  %484 = vmatpush2.msra.mxu0 %v162
  %485 = vmatprep.subr.mxu0 0.0
  %486 = vmatpush2.msra.mxu0 %v161
  %487 = vmatprep.subr.mxu0 0.0
  %488 = vmatpush2.msra.mxu0 %v160
  %489 = vmatprep.subr.mxu0 0.0
  %490 = vmatpush2.msra.mxu0 %v159
  %491 = vmatprep.subr.mxu0 0.0
  %492 = vmatpush2.msra.mxu0 %v158
  %493 = vmatprep.mubr.f32.mxu0 %v21
  %494 = vmatmul.mubr.f32.gmra.mxu0 %v20
  %v495 = vpop.f32.mrf.mxu0
  %v496 = vadd.f32 %v411, %v495
  %v497 = vpop.f32.mrf.mxu0
  %498 = vmatprep.mubr.f32.mxu0 %v29
  %499 = vmatmul.mubr.f32.gmra.mxu0 %v28
  %v500 = vpop.f32.mrf.mxu0
  %v501 = vadd.f32 %v416, %v500
  %v502 = vpop.f32.mrf.mxu0
  %503 = vmatprep.mubr.f32.mxu0 %v37
  %504 = vmatmul.mubr.f32.gmra.mxu0 %v36
  %v505 = vpop.f32.mrf.mxu0
  %v506 = vadd.f32 %v421, %v505
  %v507 = vpop.f32.mrf.mxu0
  %508 = vmatprep.mubr.f32.mxu0 %v45
  %509 = vmatmul.mubr.f32.gmra.mxu0 %v44
  %v510 = vpop.f32.mrf.mxu0
  %v511 = vadd.f32 %v426, %v510
  %v512 = vpop.f32.mrf.mxu0
  %513 = vdwg.mxu0
  %vm514 = vcmask 261120
  %515 = vst.msk [vmem:[%s3] sm:$0xff] %vm514, %v496
  %516 = vst.msk [vmem:[%s3 + $0x8] sm:$0xff] %vm514, %v501
  %517 = vst.msk [vmem:[%s3 + $0x10] sm:$0xff] %vm514, %v506
  %518 = vst.msk [vmem:[%s3 + $0x18] sm:$0xff] %vm514, %v511
  %v519 = vsel %vm514, %v496, 0.0
  %v520 = vsel %vm514, %v501, 0.0
  %v521 = vadd.f32 %v519, %v520
  %v522 = vsel %vm514, %v506, 0.0
  %v523 = vadd.f32 %v521, %v522
  %v524 = vsel %vm514, %v511, 0.0
  %v525 = vadd.f32 %v523, %v524
  %v526 = vrot.slane %v525, 4
  %v527 = vadd.f32 %v525, %v526
  %v528 = vrot.slane %v527, 2
  %v529 = vadd.f32 %v527, %v528
  %v530 = vrot.slane %v529, 1
  %v531 = vadd.f32 %v529, %v530
  %v532 = vadd.f32 %v531, 0.0
  %v533 = vmul.f32 %v496, %v496
  %v534 = vmul.f32 %v501, %v501
  %v535 = vmul.f32 %v506, %v506
  %v536 = vmul.f32 %v511, %v511
  %v537 = vsel %vm514, %v533, 0.0
  %v538 = vsel %vm514, %v534, 0.0
  %v539 = vadd.f32 %v537, %v538
  %v540 = vsel %vm514, %v535, 0.0
  %v541 = vadd.f32 %v539, %v540
  %v542 = vsel %vm514, %v536, 0.0
  %v543 = vadd.f32 %v541, %v542
  %v544 = vrot.slane %v543, 4
  %v545 = vadd.f32 %v543, %v544
  %v546 = vrot.slane %v545, 2
  %v547 = vadd.f32 %v545, %v546
  %v548 = vrot.slane %v547, 1
  %v549 = vadd.f32 %v547, %v548
  %v550 = vadd.f32 %v549, 0.0
  %v551 = vmul.f32 %v532, 0.03125
  %v552 = vmul.f32 %v550, 0.03125
  %v553 = vmul.f32 %v551, %v551
  %v554 = vsub.f32 %v552, %v553
  %v555 = vmax.f32 %v554, 0.0
  %v556 = vld [vmem:[%s2] sm:$0x1]
  %v557 = vadd.f32 %v555, 1e-05
  %v558 = vrsqrt.pop %v557
  %v559 = vmul.f32 %v556, %v558
  %v560 = vld [vmem:[%s2 + $0x1] sm:$0x1]
  %v561 = vmul.f32 %v551, %v559
  %v562 = vsub.f32 %v560, %v561
  %v563 = vld [vmem:[%s3] sm:$0xff]
  %v564 = vld [vmem:[%s3 + $0x8] sm:$0xff]
  %v565 = vld [vmem:[%s3 + $0x10] sm:$0xff]
  %v566 = vld [vmem:[%s3 + $0x18] sm:$0xff]
  %v567 = vlaneseq
  %v568 = vshrl.u32 %v567, 7
  %v569 = vsub.s32 0, %v568
  %v570 = vrot.slane %v559, %v569
  %v571 = vmul.f32 %v563, %v570
  %v572 = vmul.f32 %v564, %v570
  %v573 = vmul.f32 %v565, %v570
  %v574 = vmul.f32 %v566, %v570
  %v575 = vlaneseq
  %v576 = vshrl.u32 %v575, 7
  %v577 = vsub.s32 0, %v576
  %v578 = vrot.slane %v562, %v577
  %v579 = vadd.f32 %v571, %v578
  %v580 = vadd.f32 %v572, %v578
  %v581 = vadd.f32 %v573, %v578
  %v582 = vadd.f32 %v574, %v578
  %v583 = vmax.f32 %v579, 0.0
  %v584 = vmax.f32 %v580, 0.0
  %v585 = vmax.f32 %v581, 0.0
  %v586 = vmax.f32 %v582, 0.0
  %587 = vst.msk [vmem:[%s3] sm:$0xff] %vm514, %v583
  %588 = vst.msk [vmem:[%s3 + $0x8] sm:$0xff] %vm514, %v584
  %589 = vst.msk [vmem:[%s3 + $0x10] sm:$0xff] %vm514, %v585
  %590 = vst.msk [vmem:[%s3 + $0x18] sm:$0xff] %vm514, %v586
  // Predicated region
  $region14: #{decoder_forward_pallas.6} parent=0 // pred_check
    _
  $region15: #{decoder_forward_pallas.6} parent=0 // pred_check_branch
    %592 = sbr.rel (0) target = $region17
  $region16: #{decoder_forward_pallas.6} parent=0 // pred_region
    _
  $region17: #{decoder_forward_pallas.6} parent=0 // pred_fallthru
    _
  // Predicated region
  $region18: #{decoder_forward_pallas.6} parent=0 // pred_check
    _
  $region19: #{decoder_forward_pallas.6} parent=0 // pred_check_branch
    %594 = sbr.rel (0) target = $region21
  $region20: #{decoder_forward_pallas.6} parent=0 // pred_region
    _
  $region21: #{decoder_forward_pallas.6} parent=0 // pred_fallthru
    _

// kernel: decoder_forward_pallas.7
$region0: #{decoder_forward_pallas.7}
  #allocation0 [shape = 'u32[]', space=smem, size = 0x4, offset = 0x4, fixed_abs, tag = 'smem constant byte address 0x4 - core index']
  #allocation1 [shape = 'u32[144,128]{1,0:T(1,128)}', space=vmem, size = 0x12000, scoped, tag = 'internal scratch']
  %s0 = inlined_call_operand.vmem [shape: f32[4,32,128], index: 0, kind: input, shape index: {}]
  %s1 = inlined_call_operand.vmem [shape: f32[4,128,16], index: 1, kind: input, shape index: {}]
  %s2 = inlined_call_operand.vmem [shape: f32[2,16], index: 2, kind: input, shape index: {}]
  %s3 = inlined_call_operand.vmem [shape: f32[4,32,16], index: 3, kind: output, shape index: {}]
  %s4 = sld [smem:[#allocation0]]
  $region22: #{decoder_forward_pallas.7} parent=0
    _
  %s6 = ssub.s32 1, %s4
  %s7 = scalar_select 0, %s6, %s4
  // Predicated region
  $region2: #{decoder_forward_pallas.7} parent=0 // pred_check
    _
  $region3: #{decoder_forward_pallas.7} parent=0 // pred_check_branch
    %9 = sbr.rel (0) target = $region5
  $region4: #{decoder_forward_pallas.7} parent=0 // pred_region
    _
  $region5: #{decoder_forward_pallas.7} parent=0 // pred_fallthru
    _
  // Predicated region
  $region6: #{decoder_forward_pallas.7} parent=0 // pred_check
    _
  $region7: #{decoder_forward_pallas.7} parent=0 // pred_check_branch
    %11 = sbr.rel (0) target = $region9
  $region8: #{decoder_forward_pallas.7} parent=0 // pred_region
    _
  $region9: #{decoder_forward_pallas.7} parent=0 // pred_fallthru
    _
  // Predicated region
  $region10: #{decoder_forward_pallas.7} parent=0 // pred_check
    _
  $region11: #{decoder_forward_pallas.7} parent=0 // pred_check_branch
    %13 = sbr.rel (0) target = $region13
  $region12: #{decoder_forward_pallas.7} parent=0 // pred_region
    _
  $region13: #{decoder_forward_pallas.7} parent=0 // pred_fallthru
    _
  %v14 = vld [vmem:[%s0] sm:$0xff]
  %v15 = vld [vmem:[%s0 + $0x8] sm:$0xff]
  %v16 = vld [vmem:[%s0 + $0x10] sm:$0xff]
  %v17 = vld [vmem:[%s0 + $0x18] sm:$0xff]
  %v18 = vld [vmem:[%s1] sm:$0xff]
  %v19 = vld [vmem:[%s1 + $0x8] sm:$0xff]
  %v20 = vld [vmem:[%s1 + $0x10] sm:$0xff]
  %v21 = vld [vmem:[%s1 + $0x18] sm:$0xff]
  %v22 = vld [vmem:[%s1 + $0x20] sm:$0xff]
  %v23 = vld [vmem:[%s1 + $0x28] sm:$0xff]
  %v24 = vld [vmem:[%s1 + $0x30] sm:$0xff]
  %v25 = vld [vmem:[%s1 + $0x38] sm:$0xff]
  %v26 = vld [vmem:[%s1 + $0x40] sm:$0xff]
  %v27 = vld [vmem:[%s1 + $0x48] sm:$0xff]
  %v28 = vld [vmem:[%s1 + $0x50] sm:$0xff]
  %v29 = vld [vmem:[%s1 + $0x58] sm:$0xff]
  %v30 = vld [vmem:[%s1 + $0x60] sm:$0xff]
  %v31 = vld [vmem:[%s1 + $0x68] sm:$0xff]
  %v32 = vld [vmem:[%s1 + $0x70] sm:$0xff]
  %v33 = vld [vmem:[%s1 + $0x78] sm:$0xff]
  %34 = vmatprep.subr.mxu0 0.0
  %35 = vmatpush1.msra.mxu0 %v33
  %36 = vmatprep.subr.mxu0 0.0
  %37 = vmatpush1.msra.mxu0 %v32
  %38 = vmatprep.subr.mxu0 0.0
  %39 = vmatpush1.msra.mxu0 %v31
  %40 = vmatprep.subr.mxu0 0.0
  %41 = vmatpush1.msra.mxu0 %v30
  %42 = vmatprep.subr.mxu0 0.0
  %43 = vmatpush1.msra.mxu0 %v29
  %44 = vmatprep.subr.mxu0 0.0
  %45 = vmatpush1.msra.mxu0 %v28
  %46 = vmatprep.subr.mxu0 0.0
  %47 = vmatpush1.msra.mxu0 %v27
  %48 = vmatprep.subr.mxu0 0.0
  %49 = vmatpush1.msra.mxu0 %v26
  %50 = vmatprep.subr.mxu0 0.0
  %51 = vmatpush1.msra.mxu0 %v25
  %52 = vmatprep.subr.mxu0 0.0
  %53 = vmatpush1.msra.mxu0 %v24
  %54 = vmatprep.subr.mxu0 0.0
  %55 = vmatpush1.msra.mxu0 %v23
  %56 = vmatprep.subr.mxu0 0.0
  %57 = vmatpush1.msra.mxu0 %v22
  %58 = vmatprep.subr.mxu0 0.0
  %59 = vmatpush1.msra.mxu0 %v21
  %60 = vmatprep.subr.mxu0 0.0
  %61 = vmatpush1.msra.mxu0 %v20
  %62 = vmatprep.subr.mxu0 0.0
  %63 = vmatpush1.msra.mxu0 %v19
  %64 = vmatprep.subr.mxu0 0.0
  %65 = vmatpush1.msra.mxu0 %v18
  %66 = vmatprep.subr.mxu0 0.0
  %67 = vmatpush2.msra.mxu0 0.0
  %68 = vmatprep.subr.mxu0 0.0
  %69 = vmatpush2.msra.mxu0 0.0
  %70 = vmatprep.subr.mxu0 0.0
  %71 = vmatpush2.msra.mxu0 0.0
  %72 = vmatprep.subr.mxu0 0.0
  %73 = vmatpush2.msra.mxu0 0.0
  %74 = vmatprep.subr.mxu0 0.0
  %75 = vmatpush2.msra.mxu0 0.0
  %76 = vmatprep.subr.mxu0 0.0
  %77 = vmatpush2.msra.mxu0 0.0
  %78 = vmatprep.subr.mxu0 0.0
  %79 = vmatpush2.msra.mxu0 0.0
  %80 = vmatprep.subr.mxu0 0.0
  %81 = vmatpush2.msra.mxu0 0.0
  %82 = vmatprep.subr.mxu0 0.0
  %83 = vmatpush2.msra.mxu0 0.0
  %84 = vmatprep.subr.mxu0 0.0
  %85 = vmatpush2.msra.mxu0 0.0
  %86 = vmatprep.subr.mxu0 0.0
  %87 = vmatpush2.msra.mxu0 0.0
  %88 = vmatprep.subr.mxu0 0.0
  %89 = vmatpush2.msra.mxu0 0.0
  %90 = vmatprep.subr.mxu0 0.0
  %91 = vmatpush2.msra.mxu0 0.0
  %92 = vmatprep.subr.mxu0 0.0
  %93 = vmatpush2.msra.mxu0 0.0
  %94 = vmatprep.subr.mxu0 0.0
  %95 = vmatpush2.msra.mxu0 0.0
  %96 = vmatprep.subr.mxu0 0.0
  %97 = vmatpush2.msra.mxu0 0.0
  %98 = vmatprep.mubr.f32.mxu0 0.0
  %99 = vmatmul.mubr.f32.gmra.mxu0 %v14
  %v100 = vpop.f32.mrf.mxu0
  %v101 = vadd.f32 0.0, %v100
  %v102 = vpop.f32.mrf.mxu0
  %103 = vmatprep.mubr.f32.mxu0 0.0
  %104 = vmatmul.mubr.f32.gmra.mxu0 %v15
  %v105 = vpop.f32.mrf.mxu0
  %v106 = vadd.f32 0.0, %v105
  %v107 = vpop.f32.mrf.mxu0
  %108 = vmatprep.mubr.f32.mxu0 0.0
  %109 = vmatmul.mubr.f32.gmra.mxu0 %v16
  %v110 = vpop.f32.mrf.mxu0
  %v111 = vadd.f32 0.0, %v110
  %v112 = vpop.f32.mrf.mxu0
  %113 = vmatprep.mubr.f32.mxu0 0.0
  %114 = vmatmul.mubr.f32.gmra.mxu0 %v17
  %v115 = vpop.f32.mrf.mxu0
  %v116 = vadd.f32 0.0, %v115
  %v117 = vpop.f32.mrf.mxu0
  %118 = vdwg.mxu0
  %vm119 = vcmask 130048
  %120 = vst.msk [vmem:[%s3] sm:$0xff] %vm119, %v101
  %121 = vst.msk [vmem:[%s3 + $0x8] sm:$0xff] %vm119, %v106
  %122 = vst.msk [vmem:[%s3 + $0x10] sm:$0xff] %vm119, %v111
  %123 = vst.msk [vmem:[%s3 + $0x18] sm:$0xff] %vm119, %v116
  %v124 = vsel %vm119, %v101, 0.0
  %v125 = vsel %vm119, %v106, 0.0
  %v126 = vadd.f32 %v124, %v125
  %v127 = vsel %vm119, %v111, 0.0
  %v128 = vadd.f32 %v126, %v127
  %v129 = vsel %vm119, %v116, 0.0
  %v130 = vadd.f32 %v128, %v129
  %v131 = vrot.slane %v130, 4
  %v132 = vadd.f32 %v130, %v131
  %v133 = vrot.slane %v132, 2
  %v134 = vadd.f32 %v132, %v133
  %v135 = vrot.slane %v134, 1
  %v136 = vadd.f32 %v134, %v135
  %v137 = vadd.f32 %v136, 0.0
  %v138 = vmul.f32 %v101, %v101
  %v139 = vmul.f32 %v106, %v106
  %v140 = vmul.f32 %v111, %v111
  %v141 = vmul.f32 %v116, %v116
  %v142 = vsel %vm119, %v138, 0.0
  %v143 = vsel %vm119, %v139, 0.0
  %v144 = vadd.f32 %v142, %v143
  %v145 = vsel %vm119, %v140, 0.0
  %v146 = vadd.f32 %v144, %v145
  %v147 = vsel %vm119, %v141, 0.0
  %v148 = vadd.f32 %v146, %v147
  %v149 = vrot.slane %v148, 4
  %v150 = vadd.f32 %v148, %v149
  %v151 = vrot.slane %v150, 2
  %v152 = vadd.f32 %v150, %v151
  %v153 = vrot.slane %v152, 1
  %v154 = vadd.f32 %v152, %v153
  %v155 = vadd.f32 %v154, 0.0
  %s156 = scalar_lea.vmem %s0, 32
  %v157 = vld [vmem:[%s156] sm:$0xff]
  %v158 = vld [vmem:[%s156 + $0x8] sm:$0xff]
  %v159 = vld [vmem:[%s156 + $0x10] sm:$0xff]
  %v160 = vld [vmem:[%s156 + $0x18] sm:$0xff]
  %s161 = scalar_lea.vmem %s1, 128
  %v162 = vld [vmem:[%s161] sm:$0xff]
  %v163 = vld [vmem:[%s161 + $0x8] sm:$0xff]
  %v164 = vld [vmem:[%s161 + $0x10] sm:$0xff]
  %v165 = vld [vmem:[%s161 + $0x18] sm:$0xff]
  %v166 = vld [vmem:[%s161 + $0x20] sm:$0xff]
  %v167 = vld [vmem:[%s161 + $0x28] sm:$0xff]
  %v168 = vld [vmem:[%s161 + $0x30] sm:$0xff]
  %v169 = vld [vmem:[%s161 + $0x38] sm:$0xff]
  %v170 = vld [vmem:[%s161 + $0x40] sm:$0xff]
  %v171 = vld [vmem:[%s161 + $0x48] sm:$0xff]
  %v172 = vld [vmem:[%s161 + $0x50] sm:$0xff]
  %v173 = vld [vmem:[%s161 + $0x58] sm:$0xff]
  %v174 = vld [vmem:[%s161 + $0x60] sm:$0xff]
  %v175 = vld [vmem:[%s161 + $0x68] sm:$0xff]
  %v176 = vld [vmem:[%s161 + $0x70] sm:$0xff]
  %v177 = vld [vmem:[%s161 + $0x78] sm:$0xff]
  %178 = vmatprep.subr.mxu0 0.0
  %179 = vmatpush1.msra.mxu0 %v177
  %180 = vmatprep.subr.mxu0 0.0
  %181 = vmatpush1.msra.mxu0 %v176
  %182 = vmatprep.subr.mxu0 0.0
  %183 = vmatpush1.msra.mxu0 %v175
  %184 = vmatprep.subr.mxu0 0.0
  %185 = vmatpush1.msra.mxu0 %v174
  %186 = vmatprep.subr.mxu0 0.0
  %187 = vmatpush1.msra.mxu0 %v173
  %188 = vmatprep.subr.mxu0 0.0
  %189 = vmatpush1.msra.mxu0 %v172
  %190 = vmatprep.subr.mxu0 0.0
  %191 = vmatpush1.msra.mxu0 %v171
  %192 = vmatprep.subr.mxu0 0.0
  %193 = vmatpush1.msra.mxu0 %v170
  %194 = vmatprep.subr.mxu0 0.0
  %195 = vmatpush1.msra.mxu0 %v169
  %196 = vmatprep.subr.mxu0 0.0
  %197 = vmatpush1.msra.mxu0 %v168
  %198 = vmatprep.subr.mxu0 0.0
  %199 = vmatpush1.msra.mxu0 %v167
  %200 = vmatprep.subr.mxu0 0.0
  %201 = vmatpush1.msra.mxu0 %v166
  %202 = vmatprep.subr.mxu0 0.0
  %203 = vmatpush1.msra.mxu0 %v165
  %204 = vmatprep.subr.mxu0 0.0
  %205 = vmatpush1.msra.mxu0 %v164
  %206 = vmatprep.subr.mxu0 0.0
  %207 = vmatpush1.msra.mxu0 %v163
  %208 = vmatprep.subr.mxu0 0.0
  %209 = vmatpush1.msra.mxu0 %v162
  %210 = vmatprep.subr.mxu0 0.0
  %211 = vmatpush2.msra.mxu0 0.0
  %212 = vmatprep.subr.mxu0 0.0
  %213 = vmatpush2.msra.mxu0 0.0
  %214 = vmatprep.subr.mxu0 0.0
  %215 = vmatpush2.msra.mxu0 0.0
  %216 = vmatprep.subr.mxu0 0.0
  %217 = vmatpush2.msra.mxu0 0.0
  %218 = vmatprep.subr.mxu0 0.0
  %219 = vmatpush2.msra.mxu0 0.0
  %220 = vmatprep.subr.mxu0 0.0
  %221 = vmatpush2.msra.mxu0 0.0
  %222 = vmatprep.subr.mxu0 0.0
  %223 = vmatpush2.msra.mxu0 0.0
  %224 = vmatprep.subr.mxu0 0.0
  %225 = vmatpush2.msra.mxu0 0.0
  %226 = vmatprep.subr.mxu0 0.0
  %227 = vmatpush2.msra.mxu0 0.0
  %228 = vmatprep.subr.mxu0 0.0
  %229 = vmatpush2.msra.mxu0 0.0
  %230 = vmatprep.subr.mxu0 0.0
  %231 = vmatpush2.msra.mxu0 0.0
  %232 = vmatprep.subr.mxu0 0.0
  %233 = vmatpush2.msra.mxu0 0.0
  %234 = vmatprep.subr.mxu0 0.0
  %235 = vmatpush2.msra.mxu0 0.0
  %236 = vmatprep.subr.mxu0 0.0
  %237 = vmatpush2.msra.mxu0 0.0
  %238 = vmatprep.subr.mxu0 0.0
  %239 = vmatpush2.msra.mxu0 0.0
  %240 = vmatprep.subr.mxu0 0.0
  %241 = vmatpush2.msra.mxu0 0.0
  %242 = vmatprep.mubr.f32.mxu0 0.0
  %243 = vmatmul.mubr.f32.gmra.mxu0 %v157
  %v244 = vpop.f32.mrf.mxu0
  %v245 = vadd.f32 0.0, %v244
  %v246 = vpop.f32.mrf.mxu0
  %247 = vmatprep.mubr.f32.mxu0 0.0
  %248 = vmatmul.mubr.f32.gmra.mxu0 %v158
  %v249 = vpop.f32.mrf.mxu0
  %v250 = vadd.f32 0.0, %v249
  %v251 = vpop.f32.mrf.mxu0
  %252 = vmatprep.mubr.f32.mxu0 0.0
  %253 = vmatmul.mubr.f32.gmra.mxu0 %v159
  %v254 = vpop.f32.mrf.mxu0
  %v255 = vadd.f32 0.0, %v254
  %v256 = vpop.f32.mrf.mxu0
  %257 = vmatprep.mubr.f32.mxu0 0.0
  %258 = vmatmul.mubr.f32.gmra.mxu0 %v160
  %v259 = vpop.f32.mrf.mxu0
  %v260 = vadd.f32 0.0, %v259
  %v261 = vpop.f32.mrf.mxu0
  %262 = vdwg.mxu0
  %s263 = scalar_lea.vmem %s3, 32
  %264 = vst.msk [vmem:[%s263] sm:$0xff] %vm119, %v245
  %265 = vst.msk [vmem:[%s263 + $0x8] sm:$0xff] %vm119, %v250
  %266 = vst.msk [vmem:[%s263 + $0x10] sm:$0xff] %vm119, %v255
  %267 = vst.msk [vmem:[%s263 + $0x18] sm:$0xff] %vm119, %v260
  %v268 = vsel %vm119, %v245, 0.0
  %v269 = vsel %vm119, %v250, 0.0
  %v270 = vadd.f32 %v268, %v269
  %v271 = vsel %vm119, %v255, 0.0
  %v272 = vadd.f32 %v270, %v271
  %v273 = vsel %vm119, %v260, 0.0
  %v274 = vadd.f32 %v272, %v273
  %v275 = vrot.slane %v274, 4
  %v276 = vadd.f32 %v274, %v275
  %v277 = vrot.slane %v276, 2
  %v278 = vadd.f32 %v276, %v277
  %v279 = vrot.slane %v278, 1
  %v280 = vadd.f32 %v278, %v279
  %v281 = vadd.f32 %v137, %v280
  %v282 = vmul.f32 %v245, %v245
  %v283 = vmul.f32 %v250, %v250
  %v284 = vmul.f32 %v255, %v255
  %v285 = vmul.f32 %v260, %v260
  %v286 = vsel %vm119, %v282, 0.0
  %v287 = vsel %vm119, %v283, 0.0
  %v288 = vadd.f32 %v286, %v287
  %v289 = vsel %vm119, %v284, 0.0
  %v290 = vadd.f32 %v288, %v289
  %v291 = vsel %vm119, %v285, 0.0
  %v292 = vadd.f32 %v290, %v291
  %v293 = vrot.slane %v292, 4
  %v294 = vadd.f32 %v292, %v293
  %v295 = vrot.slane %v294, 2
  %v296 = vadd.f32 %v294, %v295
  %v297 = vrot.slane %v296, 1
  %v298 = vadd.f32 %v296, %v297
  %v299 = vadd.f32 %v155, %v298
  %s300 = scalar_lea.vmem %s0, 64
  %v301 = vld [vmem:[%s300] sm:$0xff]
  %v302 = vld [vmem:[%s300 + $0x8] sm:$0xff]
  %v303 = vld [vmem:[%s300 + $0x10] sm:$0xff]
  %v304 = vld [vmem:[%s300 + $0x18] sm:$0xff]
  %s305 = scalar_lea.vmem %s1, 256
  %v306 = vld [vmem:[%s305] sm:$0xff]
  %v307 = vld [vmem:[%s305 + $0x8] sm:$0xff]
  %v308 = vld [vmem:[%s305 + $0x10] sm:$0xff]
  %v309 = vld [vmem:[%s305 + $0x18] sm:$0xff]
  %v310 = vld [vmem:[%s305 + $0x20] sm:$0xff]
  %v311 = vld [vmem:[%s305 + $0x28] sm:$0xff]
  %v312 = vld [vmem:[%s305 + $0x30] sm:$0xff]
  %v313 = vld [vmem:[%s305 + $0x38] sm:$0xff]
  %v314 = vld [vmem:[%s305 + $0x40] sm:$0xff]
  %v315 = vld [vmem:[%s305 + $0x48] sm:$0xff]
  %v316 = vld [vmem:[%s305 + $0x50] sm:$0xff]
  %v317 = vld [vmem:[%s305 + $0x58] sm:$0xff]
  %v318 = vld [vmem:[%s305 + $0x60] sm:$0xff]
  %v319 = vld [vmem:[%s305 + $0x68] sm:$0xff]
  %v320 = vld [vmem:[%s305 + $0x70] sm:$0xff]
  %v321 = vld [vmem:[%s305 + $0x78] sm:$0xff]
  %322 = vmatprep.subr.mxu0 0.0
  %323 = vmatpush1.msra.mxu0 %v321
  %324 = vmatprep.subr.mxu0 0.0
  %325 = vmatpush1.msra.mxu0 %v320
  %326 = vmatprep.subr.mxu0 0.0
  %327 = vmatpush1.msra.mxu0 %v319
  %328 = vmatprep.subr.mxu0 0.0
  %329 = vmatpush1.msra.mxu0 %v318
  %330 = vmatprep.subr.mxu0 0.0
  %331 = vmatpush1.msra.mxu0 %v317
  %332 = vmatprep.subr.mxu0 0.0
  %333 = vmatpush1.msra.mxu0 %v316
  %334 = vmatprep.subr.mxu0 0.0
  %335 = vmatpush1.msra.mxu0 %v315
  %336 = vmatprep.subr.mxu0 0.0
  %337 = vmatpush1.msra.mxu0 %v314
  %338 = vmatprep.subr.mxu0 0.0
  %339 = vmatpush1.msra.mxu0 %v313
  %340 = vmatprep.subr.mxu0 0.0
  %341 = vmatpush1.msra.mxu0 %v312
  %342 = vmatprep.subr.mxu0 0.0
  %343 = vmatpush1.msra.mxu0 %v311
  %344 = vmatprep.subr.mxu0 0.0
  %345 = vmatpush1.msra.mxu0 %v310
  %346 = vmatprep.subr.mxu0 0.0
  %347 = vmatpush1.msra.mxu0 %v309
  %348 = vmatprep.subr.mxu0 0.0
  %349 = vmatpush1.msra.mxu0 %v308
  %350 = vmatprep.subr.mxu0 0.0
  %351 = vmatpush1.msra.mxu0 %v307
  %352 = vmatprep.subr.mxu0 0.0
  %353 = vmatpush1.msra.mxu0 %v306
  %354 = vmatprep.subr.mxu0 0.0
  %355 = vmatpush2.msra.mxu0 0.0
  %356 = vmatprep.subr.mxu0 0.0
  %357 = vmatpush2.msra.mxu0 0.0
  %358 = vmatprep.subr.mxu0 0.0
  %359 = vmatpush2.msra.mxu0 0.0
  %360 = vmatprep.subr.mxu0 0.0
  %361 = vmatpush2.msra.mxu0 0.0
  %362 = vmatprep.subr.mxu0 0.0
  %363 = vmatpush2.msra.mxu0 0.0
  %364 = vmatprep.subr.mxu0 0.0
  %365 = vmatpush2.msra.mxu0 0.0
  %366 = vmatprep.subr.mxu0 0.0
  %367 = vmatpush2.msra.mxu0 0.0
  %368 = vmatprep.subr.mxu0 0.0
  %369 = vmatpush2.msra.mxu0 0.0
  %370 = vmatprep.subr.mxu0 0.0
  %371 = vmatpush2.msra.mxu0 0.0
  %372 = vmatprep.subr.mxu0 0.0
  %373 = vmatpush2.msra.mxu0 0.0
  %374 = vmatprep.subr.mxu0 0.0
  %375 = vmatpush2.msra.mxu0 0.0
  %376 = vmatprep.subr.mxu0 0.0
  %377 = vmatpush2.msra.mxu0 0.0
  %378 = vmatprep.subr.mxu0 0.0
  %379 = vmatpush2.msra.mxu0 0.0
  %380 = vmatprep.subr.mxu0 0.0
  %381 = vmatpush2.msra.mxu0 0.0
  %382 = vmatprep.subr.mxu0 0.0
  %383 = vmatpush2.msra.mxu0 0.0
  %384 = vmatprep.subr.mxu0 0.0
  %385 = vmatpush2.msra.mxu0 0.0
  %386 = vmatprep.mubr.f32.mxu0 0.0
  %387 = vmatmul.mubr.f32.gmra.mxu0 %v301
  %v388 = vpop.f32.mrf.mxu0
  %v389 = vadd.f32 0.0, %v388
  %v390 = vpop.f32.mrf.mxu0
  %391 = vmatprep.mubr.f32.mxu0 0.0
  %392 = vmatmul.mubr.f32.gmra.mxu0 %v302
  %v393 = vpop.f32.mrf.mxu0
  %v394 = vadd.f32 0.0, %v393
  %v395 = vpop.f32.mrf.mxu0
  %396 = vmatprep.mubr.f32.mxu0 0.0
  %397 = vmatmul.mubr.f32.gmra.mxu0 %v303
  %v398 = vpop.f32.mrf.mxu0
  %v399 = vadd.f32 0.0, %v398
  %v400 = vpop.f32.mrf.mxu0
  %401 = vmatprep.mubr.f32.mxu0 0.0
  %402 = vmatmul.mubr.f32.gmra.mxu0 %v304
  %v403 = vpop.f32.mrf.mxu0
  %v404 = vadd.f32 0.0, %v403
  %v405 = vpop.f32.mrf.mxu0
  %406 = vdwg.mxu0
  %s407 = scalar_lea.vmem %s3, 64
  %408 = vst.msk [vmem:[%s407] sm:$0xff] %vm119, %v389
  %409 = vst.msk [vmem:[%s407 + $0x8] sm:$0xff] %vm119, %v394
  %410 = vst.msk [vmem:[%s407 + $0x10] sm:$0xff] %vm119, %v399
  %411 = vst.msk [vmem:[%s407 + $0x18] sm:$0xff] %vm119, %v404
  %v412 = vsel %vm119, %v389, 0.0
  %v413 = vsel %vm119, %v394, 0.0
  %v414 = vadd.f32 %v412, %v413
  %v415 = vsel %vm119, %v399, 0.0
  %v416 = vadd.f32 %v414, %v415
  %v417 = vsel %vm119, %v404, 0.0
  %v418 = vadd.f32 %v416, %v417
  %v419 = vrot.slane %v418, 4
  %v420 = vadd.f32 %v418, %v419
  %v421 = vrot.slane %v420, 2
  %v422 = vadd.f32 %v420, %v421
  %v423 = vrot.slane %v422, 1
  %v424 = vadd.f32 %v422, %v423
  %v425 = vadd.f32 %v281, %v424
  %v426 = vmul.f32 %v389, %v389
  %v427 = vmul.f32 %v394, %v394
  %v428 = vmul.f32 %v399, %v399
  %v429 = vmul.f32 %v404, %v404
  %v430 = vsel %vm119, %v426, 0.0
  %v431 = vsel %vm119, %v427, 0.0
  %v432 = vadd.f32 %v430, %v431
  %v433 = vsel %vm119, %v428, 0.0
  %v434 = vadd.f32 %v432, %v433
  %v435 = vsel %vm119, %v429, 0.0
  %v436 = vadd.f32 %v434, %v435
  %v437 = vrot.slane %v436, 4
  %v438 = vadd.f32 %v436, %v437
  %v439 = vrot.slane %v438, 2
  %v440 = vadd.f32 %v438, %v439
  %v441 = vrot.slane %v440, 1
  %v442 = vadd.f32 %v440, %v441
  %v443 = vadd.f32 %v299, %v442
  %s444 = scalar_lea.vmem %s0, 96
  %v445 = vld [vmem:[%s444] sm:$0xff]
  %v446 = vld [vmem:[%s444 + $0x8] sm:$0xff]
  %v447 = vld [vmem:[%s444 + $0x10] sm:$0xff]
  %v448 = vld [vmem:[%s444 + $0x18] sm:$0xff]
  %s449 = scalar_lea.vmem %s1, 384
  %v450 = vld [vmem:[%s449] sm:$0xff]
  %v451 = vld [vmem:[%s449 + $0x8] sm:$0xff]
  %v452 = vld [vmem:[%s449 + $0x10] sm:$0xff]
  %v453 = vld [vmem:[%s449 + $0x18] sm:$0xff]
  %v454 = vld [vmem:[%s449 + $0x20] sm:$0xff]
  %v455 = vld [vmem:[%s449 + $0x28] sm:$0xff]
  %v456 = vld [vmem:[%s449 + $0x30] sm:$0xff]
  %v457 = vld [vmem:[%s449 + $0x38] sm:$0xff]
  %v458 = vld [vmem:[%s449 + $0x40] sm:$0xff]
  %v459 = vld [vmem:[%s449 + $0x48] sm:$0xff]
  %v460 = vld [vmem:[%s449 + $0x50] sm:$0xff]
  %v461 = vld [vmem:[%s449 + $0x58] sm:$0xff]
  %v462 = vld [vmem:[%s449 + $0x60] sm:$0xff]
  %v463 = vld [vmem:[%s449 + $0x68] sm:$0xff]
  %v464 = vld [vmem:[%s449 + $0x70] sm:$0xff]
  %v465 = vld [vmem:[%s449 + $0x78] sm:$0xff]
  %466 = vmatprep.subr.mxu0 0.0
  %467 = vmatpush1.msra.mxu0 %v465
  %468 = vmatprep.subr.mxu0 0.0
  %469 = vmatpush1.msra.mxu0 %v464
  %470 = vmatprep.subr.mxu0 0.0
  %471 = vmatpush1.msra.mxu0 %v463
  %472 = vmatprep.subr.mxu0 0.0
  %473 = vmatpush1.msra.mxu0 %v462
  %474 = vmatprep.subr.mxu0 0.0
  %475 = vmatpush1.msra.mxu0 %v461
  %476 = vmatprep.subr.mxu0 0.0
  %477 = vmatpush1.msra.mxu0 %v460
  %478 = vmatprep.subr.mxu0 0.0
  %479 = vmatpush1.msra.mxu0 %v459
  %480 = vmatprep.subr.mxu0 0.0
  %481 = vmatpush1.msra.mxu0 %v458
  %482 = vmatprep.subr.mxu0 0.0
  %483 = vmatpush1.msra.mxu0 %v457
  %484 = vmatprep.subr.mxu0 0.0
  %485 = vmatpush1.msra.mxu0 %v456
  %486 = vmatprep.subr.mxu0 0.0
  %487 = vmatpush1.msra.mxu0 %v455
  %488 = vmatprep.subr.mxu0 0.0
  %489 = vmatpush1.msra.mxu0 %v454
  %490 = vmatprep.subr.mxu0 0.0
  %491 = vmatpush1.msra.mxu0 %v453
  %492 = vmatprep.subr.mxu0 0.0
  %493 = vmatpush1.msra.mxu0 %v452
  %494 = vmatprep.subr.mxu0 0.0
  %495 = vmatpush1.msra.mxu0 %v451
  %496 = vmatprep.subr.mxu0 0.0
  %497 = vmatpush1.msra.mxu0 %v450
  %498 = vmatprep.subr.mxu0 0.0
  %499 = vmatpush2.msra.mxu0 0.0
  %500 = vmatprep.subr.mxu0 0.0
  %501 = vmatpush2.msra.mxu0 0.0
  %502 = vmatprep.subr.mxu0 0.0
  %503 = vmatpush2.msra.mxu0 0.0
  %504 = vmatprep.subr.mxu0 0.0
  %505 = vmatpush2.msra.mxu0 0.0
  %506 = vmatprep.subr.mxu0 0.0
  %507 = vmatpush2.msra.mxu0 0.0
  %508 = vmatprep.subr.mxu0 0.0
  %509 = vmatpush2.msra.mxu0 0.0
  %510 = vmatprep.subr.mxu0 0.0
  %511 = vmatpush2.msra.mxu0 0.0
  %512 = vmatprep.subr.mxu0 0.0
  %513 = vmatpush2.msra.mxu0 0.0
  %514 = vmatprep.subr.mxu0 0.0
  %515 = vmatpush2.msra.mxu0 0.0
  %516 = vmatprep.subr.mxu0 0.0
  %517 = vmatpush2.msra.mxu0 0.0
  %518 = vmatprep.subr.mxu0 0.0
  %519 = vmatpush2.msra.mxu0 0.0
  %520 = vmatprep.subr.mxu0 0.0
  %521 = vmatpush2.msra.mxu0 0.0
  %522 = vmatprep.subr.mxu0 0.0
  %523 = vmatpush2.msra.mxu0 0.0
  %524 = vmatprep.subr.mxu0 0.0
  %525 = vmatpush2.msra.mxu0 0.0
  %526 = vmatprep.subr.mxu0 0.0
  %527 = vmatpush2.msra.mxu0 0.0
  %528 = vmatprep.subr.mxu0 0.0
  %529 = vmatpush2.msra.mxu0 0.0
  %530 = vmatprep.mubr.f32.mxu0 0.0
  %531 = vmatmul.mubr.f32.gmra.mxu0 %v445
  %v532 = vpop.f32.mrf.mxu0
  %v533 = vadd.f32 0.0, %v532
  %v534 = vpop.f32.mrf.mxu0
  %535 = vmatprep.mubr.f32.mxu0 0.0
  %536 = vmatmul.mubr.f32.gmra.mxu0 %v446
  %v537 = vpop.f32.mrf.mxu0
  %v538 = vadd.f32 0.0, %v537
  %v539 = vpop.f32.mrf.mxu0
  %540 = vmatprep.mubr.f32.mxu0 0.0
  %541 = vmatmul.mubr.f32.gmra.mxu0 %v447
  %v542 = vpop.f32.mrf.mxu0
  %v543 = vadd.f32 0.0, %v542
  %v544 = vpop.f32.mrf.mxu0
  %545 = vmatprep.mubr.f32.mxu0 0.0
  %546 = vmatmul.mubr.f32.gmra.mxu0 %v448
  %v547 = vpop.f32.mrf.mxu0
  %v548 = vadd.f32 0.0, %v547
  %v549 = vpop.f32.mrf.mxu0
  %550 = vdwg.mxu0
  %s551 = scalar_lea.vmem %s3, 96
  %552 = vst.msk [vmem:[%s551] sm:$0xff] %vm119, %v533
  %553 = vst.msk [vmem:[%s551 + $0x8] sm:$0xff] %vm119, %v538
  %554 = vst.msk [vmem:[%s551 + $0x10] sm:$0xff] %vm119, %v543
  %555 = vst.msk [vmem:[%s551 + $0x18] sm:$0xff] %vm119, %v548
  %v556 = vsel %vm119, %v533, 0.0
  %v557 = vsel %vm119, %v538, 0.0
  %v558 = vadd.f32 %v556, %v557
  %v559 = vsel %vm119, %v543, 0.0
  %v560 = vadd.f32 %v558, %v559
  %v561 = vsel %vm119, %v548, 0.0
  %v562 = vadd.f32 %v560, %v561
  %v563 = vrot.slane %v562, 4
  %v564 = vadd.f32 %v562, %v563
  %v565 = vrot.slane %v564, 2
  %v566 = vadd.f32 %v564, %v565
  %v567 = vrot.slane %v566, 1
  %v568 = vadd.f32 %v566, %v567
  %v569 = vadd.f32 %v425, %v568
  %v570 = vmul.f32 %v533, %v533
  %v571 = vmul.f32 %v538, %v538
  %v572 = vmul.f32 %v543, %v543
  %v573 = vmul.f32 %v548, %v548
  %v574 = vsel %vm119, %v570, 0.0
  %v575 = vsel %vm119, %v571, 0.0
  %v576 = vadd.f32 %v574, %v575
  %v577 = vsel %vm119, %v572, 0.0
  %v578 = vadd.f32 %v576, %v577
  %v579 = vsel %vm119, %v573, 0.0
  %v580 = vadd.f32 %v578, %v579
  %v581 = vrot.slane %v580, 4
  %v582 = vadd.f32 %v580, %v581
  %v583 = vrot.slane %v582, 2
  %v584 = vadd.f32 %v582, %v583
  %v585 = vrot.slane %v584, 1
  %v586 = vadd.f32 %v584, %v585
  %v587 = vadd.f32 %v443, %v586
  %v588 = vmul.f32 %v569, 0.0078125
  %v589 = vmul.f32 %v587, 0.0078125
  %v590 = vmul.f32 %v588, %v588
  %v591 = vsub.f32 %v589, %v590
  %v592 = vmax.f32 %v591, 0.0
  %v593 = vld [vmem:[%s2] sm:$0x1]
  %v594 = vadd.f32 %v592, 1e-05
  %v595 = vrsqrt.pop %v594
  %v596 = vmul.f32 %v593, %v595
  %v597 = vld [vmem:[%s2 + $0x1] sm:$0x1]
  %v598 = vmul.f32 %v588, %v596
  %v599 = vsub.f32 %v597, %v598
  %v600 = vld [vmem:[%s3] sm:$0xff]
  %v601 = vld [vmem:[%s3 + $0x8] sm:$0xff]
  %v602 = vld [vmem:[%s3 + $0x10] sm:$0xff]
  %v603 = vld [vmem:[%s3 + $0x18] sm:$0xff]
  %v604 = vlaneseq
  %v605 = vshrl.u32 %v604, 7
  %v606 = vsub.s32 0, %v605
  %v607 = vrot.slane %v596, %v606
  %v608 = vmul.f32 %v600, %v607
  %v609 = vmul.f32 %v601, %v607
  %v610 = vmul.f32 %v602, %v607
  %v611 = vmul.f32 %v603, %v607
  %v612 = vlaneseq
  %v613 = vshrl.u32 %v612, 7
  %v614 = vsub.s32 0, %v613
  %v615 = vrot.slane %v599, %v614
  %v616 = vadd.f32 %v608, %v615
  %v617 = vadd.f32 %v609, %v615
  %v618 = vadd.f32 %v610, %v615
  %v619 = vadd.f32 %v611, %v615
  %v620 = vmax.f32 %v616, 0.0
  %v621 = vmax.f32 %v617, 0.0
  %v622 = vmax.f32 %v618, 0.0
  %v623 = vmax.f32 %v619, 0.0
  %624 = vst.msk [vmem:[%s3] sm:$0xff] %vm119, %v620
  %625 = vst.msk [vmem:[%s3 + $0x8] sm:$0xff] %vm119, %v621
  %626 = vst.msk [vmem:[%s3 + $0x10] sm:$0xff] %vm119, %v622
  %627 = vst.msk [vmem:[%s3 + $0x18] sm:$0xff] %vm119, %v623
  %v628 = vld [vmem:[%s263] sm:$0xff]
  %v629 = vld [vmem:[%s263 + $0x8] sm:$0xff]
  %v630 = vld [vmem:[%s263 + $0x10] sm:$0xff]
  %v631 = vld [vmem:[%s263 + $0x18] sm:$0xff]
  %v632 = vmul.f32 %v628, %v607
  %v633 = vmul.f32 %v629, %v607
  %v634 = vmul.f32 %v630, %v607
  %v635 = vmul.f32 %v631, %v607
  %v636 = vadd.f32 %v632, %v615
  %v637 = vadd.f32 %v633, %v615
  %v638 = vadd.f32 %v634, %v615
  %v639 = vadd.f32 %v635, %v615
  %v640 = vmax.f32 %v636, 0.0
  %v641 = vmax.f32 %v637, 0.0
  %v642 = vmax.f32 %v638, 0.0
  %v643 = vmax.f32 %v639, 0.0
  %644 = vst.msk [vmem:[%s263] sm:$0xff] %vm119, %v640
  %645 = vst.msk [vmem:[%s263 + $0x8] sm:$0xff] %vm119, %v641
  %646 = vst.msk [vmem:[%s263 + $0x10] sm:$0xff] %vm119, %v642
  %647 = vst.msk [vmem:[%s263 + $0x18] sm:$0xff] %vm119, %v643
  %v648 = vld [vmem:[%s407] sm:$0xff]
  %v649 = vld [vmem:[%s407 + $0x8] sm:$0xff]
  %v650 = vld [vmem:[%s407 + $0x10] sm:$0xff]
  %v651 = vld [vmem:[%s407 + $0x18] sm:$0xff]
  %v652 = vmul.f32 %v648, %v607
  %v653 = vmul.f32 %v649, %v607
  %v654 = vmul.f32 %v650, %v607
  %v655 = vmul.f32 %v651, %v607
  %v656 = vadd.f32 %v652, %v615
  %v657 = vadd.f32 %v653, %v615
  %v658 = vadd.f32 %v654, %v615
  %v659 = vadd.f32 %v655, %v615
  %v660 = vmax.f32 %v656, 0.0
  %v661 = vmax.f32 %v657, 0.0
  %v662 = vmax.f32 %v658, 0.0
  %v663 = vmax.f32 %v659, 0.0
  %664 = vst.msk [vmem:[%s407] sm:$0xff] %vm119, %v660
  %665 = vst.msk [vmem:[%s407 + $0x8] sm:$0xff] %vm119, %v661
  %666 = vst.msk [vmem:[%s407 + $0x10] sm:$0xff] %vm119, %v662
  %667 = vst.msk [vmem:[%s407 + $0x18] sm:$0xff] %vm119, %v663
  %v668 = vld [vmem:[%s551] sm:$0xff]
  %v669 = vld [vmem:[%s551 + $0x8] sm:$0xff]
  %v670 = vld [vmem:[%s551 + $0x10] sm:$0xff]
  %v671 = vld [vmem:[%s551 + $0x18] sm:$0xff]
  %v672 = vmul.f32 %v668, %v607
  %v673 = vmul.f32 %v669, %v607
  %v674 = vmul.f32 %v670, %v607
  %v675 = vmul.f32 %v671, %v607
  %v676 = vadd.f32 %v672, %v615
  %v677 = vadd.f32 %v673, %v615
  %v678 = vadd.f32 %v674, %v615
  %v679 = vadd.f32 %v675, %v615
  %v680 = vmax.f32 %v676, 0.0
  %v681 = vmax.f32 %v677, 0.0
  %v682 = vmax.f32 %v678, 0.0
  %v683 = vmax.f32 %v679, 0.0
  %684 = vst.msk [vmem:[%s551] sm:$0xff] %vm119, %v680
  %685 = vst.msk [vmem:[%s551 + $0x8] sm:$0xff] %vm119, %v681
  %686 = vst.msk [vmem:[%s551 + $0x10] sm:$0xff] %vm119, %v682
  %687 = vst.msk [vmem:[%s551 + $0x18] sm:$0xff] %vm119, %v683
  // Predicated region
  $region14: #{decoder_forward_pallas.7} parent=0 // pred_check
    _
  $region15: #{decoder_forward_pallas.7} parent=0 // pred_check_branch
    %689 = sbr.rel (0) target = $region17
  $region16: #{decoder_forward_pallas.7} parent=0 // pred_region
    _
  $region17: #{decoder_forward_pallas.7} parent=0 // pred_fallthru
    _
  // Predicated region
  $region18: #{decoder_forward_pallas.7} parent=0 // pred_check
    _
  $region19: #{decoder_forward_pallas.7} parent=0 // pred_check_branch
    %691 = sbr.rel (0) target = $region21
  $region20: #{decoder_forward_pallas.7} parent=0 // pred_region
    _
  $region21: #{decoder_forward_pallas.7} parent=0 // pred_fallthru
    _

// kernel: decoder_forward_pallas.9
$region0: #{decoder_forward_pallas.9}
  #allocation0 [shape = 'u32[]', space=smem, size = 0x4, offset = 0x4, fixed_abs, tag = 'smem constant byte address 0x4 - core index']
  #allocation1 [shape = 'u32[144,128]{1,0:T(1,128)}', space=vmem, size = 0x12000, scoped, tag = 'internal scratch']
  %s0 = inlined_call_operand.vmem [shape: f32[512,8], index: 0, kind: input, shape index: {}]
  %s1 = inlined_call_operand.vmem [shape: f32[8,75], index: 1, kind: input, shape index: {}]
  %s2 = inlined_call_operand.vmem [shape: f32[512,75], index: 2, kind: output, shape index: {}]
  %s3 = sld [smem:[#allocation0]]
  $region41: #{decoder_forward_pallas.9} parent=0
    _
  %s5 = ssub.s32 1, %s3
  %s6 = scalar_select 0, %s5, %s3
  loop: start=0, step=1, limit=6
  $region2: #{decoder_forward_pallas.9} parent=0 // loop_pre_header
    _
  $region3: #{decoder_forward_pallas.9} parent=0 // loop_header
    %s8 = sphi 0, %s12
    %p9 = scmp.ge.s32.totalorder %s8, 6
    %s18 = sphi 0, %s20
    %s21 = sphi 0, %s18
    %s22 = sphi 0, %s21
    %s38 = sphi 0, %s22
    %s42 = sphi 0, %s42
    %s44 = sphi 0, %s42
    %s45 = sphi 0, %s44
    %s59 = sphi 0, %s45
    %s65 = sphi 0, %s67
    %s68 = sphi 0, %s65
    %s69 = sphi 0, %s68
    %s85 = sphi 0, %s69
  $region4: #{decoder_forward_pallas.9} parent=0 // loop_header_branch
    %11 = sbr.rel (%p9) target = $region8
  $region5: #{decoder_forward_pallas.9} parent=0 // loop_body
    %s13 = ssub.s32 %s8, 1
    %s14 = ssub.s32 %s8, 2
    %s15 = sadd.s32 %s8, 1
    %s16 = ssub.s32 %s8, %s15
    %p17 = scmp.eq.s32.totalorder %s16, 0
    %s19 = sadd.s32 %s18, 1
    %s20 = scalar_select %p17, %s18, %s19
    %p23 = pneg %p17
    %p24 = scmp.eq.s32.totalorder %s8, 3
    %p25 = por %p23, %p24
    %p26 = scmp.ne.s32.totalorder %s18, %s21
    %p27 = scmp.eq.s32.totalorder %s8, 0
    %p28 = por %p26, %p27
    %p29 = scmp.ne.s32.totalorder %s18, %s21
    %p30 = scmp.eq.s32.totalorder %s13, 3
    %p31 = por %p29, %p30
    %p32 = scmp.ne.s32.totalorder %s21, %s22
    %p33 = scmp.eq.s32.totalorder %s13, 0
    %p34 = por %p32, %p33
    %p35 = scmp.ne.s32.totalorder %s21, %s22
    %p36 = scmp.eq.s32.totalorder %s14, 3
    %p37 = por %p35, %p36
    %p39 = scmp.ne.s32.totalorder %s22, %s38
    %p40 = scmp.eq.s32.totalorder %s14, 0
    %p41 = por %p39, %p40
    %s43 = sadd.s32 %s42, 1
    %p46 = scmp.eq.s32.totalorder %s8, 3
    %p47 = scmp.ne.s32.totalorder %s42, %s44
    %p48 = scmp.eq.s32.totalorder %s8, 0
    %p49 = por %p47, %p48
    %p50 = scmp.ne.s32.totalorder %s42, %s44
    %p51 = scmp.eq.s32.totalorder %s13, 3
    %p52 = por %p50, %p51
    %p53 = scmp.ne.s32.totalorder %s44, %s45
    %p54 = scmp.eq.s32.totalorder %s13, 0
    %p55 = por %p53, %p54
    %p56 = scmp.ne.s32.totalorder %s44, %s45
    %p57 = scmp.eq.s32.totalorder %s14, 3
    %p58 = por %p56, %p57
    %p60 = scmp.ne.s32.totalorder %s45, %s59
    %p61 = scmp.eq.s32.totalorder %s14, 0
    %p62 = por %p60, %p61
    %s63 = ssub.s32 %s8, %s15
    %p64 = scmp.eq.s32.totalorder %s63, 0
    %s66 = sadd.s32 %s65, 1
    %s67 = scalar_select %p64, %s65, %s66
    %p70 = pneg %p64
    %p71 = scmp.eq.s32.totalorder %s8, 3
    %p72 = por %p70, %p71
    %p73 = scmp.ne.s32.totalorder %s65, %s68
    %p74 = scmp.eq.s32.totalorder %s8, 0
    %p75 = por %p73, %p74
    %p76 = scmp.ne.s32.totalorder %s65, %s68
    %p77 = scmp.eq.s32.totalorder %s13, 3
    %p78 = por %p76, %p77
    %p79 = scmp.ne.s32.totalorder %s68, %s69
    %p80 = scmp.eq.s32.totalorder %s13, 0
    %p81 = por %p79, %p80
    %p82 = scmp.ne.s32.totalorder %s68, %s69
    %p83 = scmp.eq.s32.totalorder %s14, 3
    %p84 = por %p82, %p83
    %p86 = scmp.ne.s32.totalorder %s69, %s85
    %p87 = scmp.eq.s32.totalorder %s14, 0
    %p88 = por %p86, %p87
    %p89 = scmp.le.s32.totalorder 1, %s8
    %p90 = scmp.lt.s32.totalorder %s8, 5
    %p91 = pnand %p89, %p90
    %p92 = pneg %p91
    // Predicated region
    $region9: #{decoder_forward_pallas.9} parent=5 // pred_check
      _
    $region10: #{decoder_forward_pallas.9} parent=5 // pred_check_branch
      %94 = sbr.rel (%p91) target = $region12
    $region11: #{decoder_forward_pallas.9} parent=5 // pred_region
      %s95 = ssub.s32 %s8, 1
      // Predicated region
      $region13: #{decoder_forward_pallas.9} parent=11 // pred_check
        %p96 = pneg %p55
      $region14: #{decoder_forward_pallas.9} parent=11 // pred_check_branch
        %98 = sbr.rel (%p96) target = $region16
      $region15: #{decoder_forward_pallas.9} parent=11 // pred_region
        _
      $region16: #{decoder_forward_pallas.9} parent=11 // pred_fallthru
        _
    $region12: #{decoder_forward_pallas.9} parent=5 // pred_fallthru
      _
    %p99 = scmp.lt.s32.totalorder %s8, 4
    // Predicated region
    $region17: #{decoder_forward_pallas.9} parent=5 // pred_check
      %p100 = pneg %p99
    $region18: #{decoder_forward_pallas.9} parent=5 // pred_check_branch
      %102 = sbr.rel (%p100) target = $region20
    $region19: #{decoder_forward_pallas.9} parent=5 // pred_region
      // Predicated region
      $region21: #{decoder_forward_pallas.9} parent=19 // pred_check
        %p103 = pneg %p28
      $region22: #{decoder_forward_pallas.9} parent=19 // pred_check_branch
        %105 = sbr.rel (%p103) target = $region24
      $region23: #{decoder_forward_pallas.9} parent=19 // pred_region
        %s106 = smul.u32 16, %s8
        %p107 = scmp.lt.s32.totalorder %s106, 63
        %s108 = scalar_select %p107, %s106, 63
        %s109 = smul.addr %s108, 8
        %s110 = scalar_lea.vmem %s0, %s109
        %s111 = smul.u32 16, %s8
      $region24: #{decoder_forward_pallas.9} parent=19 // pred_fallthru
        _
    $region20: #{decoder_forward_pallas.9} parent=5 // pred_fallthru
      _
    %p112 = scmp.le.s32.totalorder 1, %s8
    %p113 = scmp.lt.s32.totalorder %s8, 5
    %p114 = pnand %p112, %p113
    %p115 = pneg %p114
    // Predicated region
    $region25: #{decoder_forward_pallas.9} parent=5 // pred_check
      _
    $region26: #{decoder_forward_pallas.9} parent=5 // pred_check_branch
      %117 = sbr.rel (%p114) target = $region28
    $region27: #{decoder_forward_pallas.9} parent=5 // pred_region
      %s118 = ssub.s32 %s8, 1
      %s119 = smul.u32 16, %s13
      %p120 = scmp.lt.s32.totalorder %s119, 63
      %s121 = scalar_select %p120, %s119, 63
      %s122 = smul.addr %s121, 8
      %s123 = scalar_lea.vmem %s0, %s122
      %p124 = pneg %p34
      %p125 = pneg %p31
      %p126 = pneg %p55
      %p127 = pneg %p52
      %p128 = pneg %p81
      %p129 = pneg %p78
      %s130 = smul.u32 16, %s13
      %p131 = scmp.lt.s32.totalorder %s130, 63
      %s132 = scalar_select %p131, %s130, 63
      %s133 = smul.addr %s132, 8
      %s134 = scalar_lea.vmem %s2, %s133
      %s135 = smul.u32 16, %s13
      %p136 = scmp.lt.s32.totalorder %s135, 63
      %s137 = scalar_select %p136, %s135, 63
      %s138 = smul.addr %s137, 8
      %s139 = scalar_lea.vmem %s0, %s138
      %s140 = smul.u32 16, %s13
      %s141 = smul.u32 16, %s13
      %p142 = scmp.lt.s32.totalorder %s141, 63
      %s143 = scalar_select %p142, %s141, 63
      %s144 = smul.addr %s143, 8
      %s145 = scalar_lea.vmem %s2, %s144
      %s146 = smul.u32 16, %s13
      %v147 = vld [vmem:[%s139] sm:$0xff]
      %v148 = vld [vmem:[%s139 + $0x8] sm:$0xff]
      %v149 = vld [vmem:[%s139 + $0x10] sm:$0xff]
      %v150 = vld [vmem:[%s139 + $0x18] sm:$0xff]
      %v151 = vld [vmem:[%s139 + $0x20] sm:$0xff]
      %v152 = vld [vmem:[%s139 + $0x28] sm:$0xff]
      %v153 = vld [vmem:[%s139 + $0x30] sm:$0xff]
      %v154 = vld [vmem:[%s139 + $0x38] sm:$0xff]
      %v155 = vld [vmem:[%s139 + $0x40] sm:$0xff]
      %v156 = vld [vmem:[%s139 + $0x48] sm:$0xff]
      %v157 = vld [vmem:[%s139 + $0x50] sm:$0xff]
      %v158 = vld [vmem:[%s139 + $0x58] sm:$0xff]
      %v159 = vld [vmem:[%s139 + $0x60] sm:$0xff]
      %v160 = vld [vmem:[%s139 + $0x68] sm:$0xff]
      %v161 = vld [vmem:[%s139 + $0x70] sm:$0xff]
      %v162 = vld [vmem:[%s139 + $0x78] sm:$0xff]
      %v163 = vld [vmem:[%s1] sm:$0xff]
      %vm164 = vcmask 64512
      %v166 = vsel %vm164, %v147, 0
      %v169 = vsel %vm164, %v148, 0
      %v172 = vsel %vm164, %v149, 0
      %v175 = vsel %vm164, %v150, 0
      %v178 = vsel %vm164, %v151, 0
      %v181 = vsel %vm164, %v152, 0
      %v184 = vsel %vm164, %v153, 0
      %v187 = vsel %vm164, %v154, 0
      %v190 = vsel %vm164, %v155, 0
      %v193 = vsel %vm164, %v156, 0
      %v196 = vsel %vm164, %v157, 0
      %v199 = vsel %vm164, %v158, 0
      %v202 = vsel %vm164, %v159, 0
      %v205 = vsel %vm164, %v160, 0
      %v208 = vsel %vm164, %v161, 0
      %v211 = vsel %vm164, %v162, 0
      %213 = vmatprep.subr.mxu0 0.0
      %214 = vmatpush1.msra.mxu0 0.0
      %215 = vmatprep.subr.mxu0 0.0
      %216 = vmatpush1.msra.mxu0 0.0
      %217 = vmatprep.subr.mxu0 0.0
      %218 = vmatpush1.msra.mxu0 0.0
      %219 = vmatprep.subr.mxu0 0.0
      %220 = vmatpush1.msra.mxu0 0.0
      %221 = vmatprep.subr.mxu0 0.0
      %222 = vmatpush1.msra.mxu0 0.0
      %223 = vmatprep.subr.mxu0 0.0
      %224 = vmatpush1.msra.mxu0 0.0
      %225 = vmatprep.subr.mxu0 0.0
      %226 = vmatpush1.msra.mxu0 0.0
      %227 = vmatprep.subr.mxu0 0.0
      %228 = vmatpush1.msra.mxu0 0.0
      %229 = vmatprep.subr.mxu0 0.0
      %230 = vmatpush1.msra.mxu0 0.0
      %231 = vmatprep.subr.mxu0 0.0
      %232 = vmatpush1.msra.mxu0 0.0
      %233 = vmatprep.subr.mxu0 0.0
      %234 = vmatpush1.msra.mxu0 0.0
      %235 = vmatprep.subr.mxu0 0.0
      %236 = vmatpush1.msra.mxu0 0.0
      %237 = vmatprep.subr.mxu0 0.0
      %238 = vmatpush1.msra.mxu0 0.0
      %239 = vmatprep.subr.mxu0 0.0
      %240 = vmatpush1.msra.mxu0 0.0
      %241 = vmatprep.subr.mxu0 0.0
      %242 = vmatpush1.msra.mxu0 0.0
      %243 = vmatprep.subr.mxu0 0.0
      %244 = vmatpush1.msra.mxu0 %v163
      %245 = vmatprep.subr.mxu0 0.0
      %246 = vmatpush2.msra.mxu0 0.0
      %247 = vmatprep.subr.mxu0 0.0
      %248 = vmatpush2.msra.mxu0 0.0
      %249 = vmatprep.subr.mxu0 0.0
      %250 = vmatpush2.msra.mxu0 0.0
      %251 = vmatprep.subr.mxu0 0.0
      %252 = vmatpush2.msra.mxu0 0.0
      %253 = vmatprep.subr.mxu0 0.0
      %254 = vmatpush2.msra.mxu0 0.0
      %255 = vmatprep.subr.mxu0 0.0
      %256 = vmatpush2.msra.mxu0 0.0
      %257 = vmatprep.subr.mxu0 0.0
      %258 = vmatpush2.msra.mxu0 0.0
      %259 = vmatprep.subr.mxu0 0.0
      %260 = vmatpush2.msra.mxu0 0.0
      %261 = vmatprep.subr.mxu0 0.0
      %262 = vmatpush2.msra.mxu0 0.0
      %263 = vmatprep.subr.mxu0 0.0
      %264 = vmatpush2.msra.mxu0 0.0
      %265 = vmatprep.subr.mxu0 0.0
      %266 = vmatpush2.msra.mxu0 0.0
      %267 = vmatprep.subr.mxu0 0.0
      %268 = vmatpush2.msra.mxu0 0.0
      %269 = vmatprep.subr.mxu0 0.0
      %270 = vmatpush2.msra.mxu0 0.0
      %271 = vmatprep.subr.mxu0 0.0
      %272 = vmatpush2.msra.mxu0 0.0
      %273 = vmatprep.subr.mxu0 0.0
      %274 = vmatpush2.msra.mxu0 0.0
      %275 = vmatprep.subr.mxu0 0.0
      %276 = vmatpush2.msra.mxu0 0.0
      %277 = vmatprep.mubr.f32.mxu0 0.0
      %278 = vmatmul.mubr.f32.gmra.mxu0 %v166
      %v279 = vpop.f32.mrf.mxu0
      %v280 = vadd.f32 0.0, %v279
      %v281 = vpop.f32.mrf.mxu0
      %282 = vmatprep.mubr.f32.mxu0 0.0
      %283 = vmatmul.mubr.f32.gmra.mxu0 %v169
      %v284 = vpop.f32.mrf.mxu0
      %v285 = vadd.f32 0.0, %v284
      %v286 = vpop.f32.mrf.mxu0
      %287 = vmatprep.mubr.f32.mxu0 0.0
      %288 = vmatmul.mubr.f32.gmra.mxu0 %v172
      %v289 = vpop.f32.mrf.mxu0
      %v290 = vadd.f32 0.0, %v289
      %v291 = vpop.f32.mrf.mxu0
      %292 = vmatprep.mubr.f32.mxu0 0.0
      %293 = vmatmul.mubr.f32.gmra.mxu0 %v175
      %v294 = vpop.f32.mrf.mxu0
      %v295 = vadd.f32 0.0, %v294
      %v296 = vpop.f32.mrf.mxu0
      %297 = vmatprep.mubr.f32.mxu0 0.0
      %298 = vmatmul.mubr.f32.gmra.mxu0 %v178
      %v299 = vpop.f32.mrf.mxu0
      %v300 = vadd.f32 0.0, %v299
      %v301 = vpop.f32.mrf.mxu0
      %302 = vmatprep.mubr.f32.mxu0 0.0
      %303 = vmatmul.mubr.f32.gmra.mxu0 %v181
      %v304 = vpop.f32.mrf.mxu0
      %v305 = vadd.f32 0.0, %v304
      %v306 = vpop.f32.mrf.mxu0
      %307 = vmatprep.mubr.f32.mxu0 0.0
      %308 = vmatmul.mubr.f32.gmra.mxu0 %v184
      %v309 = vpop.f32.mrf.mxu0
      %v310 = vadd.f32 0.0, %v309
      %v311 = vpop.f32.mrf.mxu0
      %312 = vmatprep.mubr.f32.mxu0 0.0
      %313 = vmatmul.mubr.f32.gmra.mxu0 %v187
      %v314 = vpop.f32.mrf.mxu0
      %v315 = vadd.f32 0.0, %v314
      %v316 = vpop.f32.mrf.mxu0
      %317 = vmatprep.mubr.f32.mxu0 0.0
      %318 = vmatmul.mubr.f32.gmra.mxu0 %v190
      %v319 = vpop.f32.mrf.mxu0
      %v320 = vadd.f32 0.0, %v319
      %v321 = vpop.f32.mrf.mxu0
      %322 = vmatprep.mubr.f32.mxu0 0.0
      %323 = vmatmul.mubr.f32.gmra.mxu0 %v193
      %v324 = vpop.f32.mrf.mxu0
      %v325 = vadd.f32 0.0, %v324
      %v326 = vpop.f32.mrf.mxu0
      %327 = vmatprep.mubr.f32.mxu0 0.0
      %328 = vmatmul.mubr.f32.gmra.mxu0 %v196
      %v329 = vpop.f32.mrf.mxu0
      %v330 = vadd.f32 0.0, %v329
      %v331 = vpop.f32.mrf.mxu0
      %332 = vmatprep.mubr.f32.mxu0 0.0
      %333 = vmatmul.mubr.f32.gmra.mxu0 %v199
      %v334 = vpop.f32.mrf.mxu0
      %v335 = vadd.f32 0.0, %v334
      %v336 = vpop.f32.mrf.mxu0
      %337 = vmatprep.mubr.f32.mxu0 0.0
      %338 = vmatmul.mubr.f32.gmra.mxu0 %v202
      %v339 = vpop.f32.mrf.mxu0
      %v340 = vadd.f32 0.0, %v339
      %v341 = vpop.f32.mrf.mxu0
      %342 = vmatprep.mubr.f32.mxu0 0.0
      %343 = vmatmul.mubr.f32.gmra.mxu0 %v205
      %v344 = vpop.f32.mrf.mxu0
      %v345 = vadd.f32 0.0, %v344
      %v346 = vpop.f32.mrf.mxu0
      %347 = vmatprep.mubr.f32.mxu0 0.0
      %348 = vmatmul.mubr.f32.gmra.mxu0 %v208
      %v349 = vpop.f32.mrf.mxu0
      %v350 = vadd.f32 0.0, %v349
      %v351 = vpop.f32.mrf.mxu0
      %352 = vmatprep.mubr.f32.mxu0 0.0
      %353 = vmatmul.mubr.f32.gmra.mxu0 %v211
      %v354 = vpop.f32.mrf.mxu0
      %v355 = vadd.f32 0.0, %v354
      %v356 = vpop.f32.mrf.mxu0
      %357 = vdwg.mxu0
      %v358 = vtanh.pop %v280
      %v359 = vtanh.pop %v285
      %v360 = vtanh.pop %v290
      %v361 = vtanh.pop %v295
      %v362 = vtanh.pop %v300
      %v363 = vtanh.pop %v305
      %v364 = vtanh.pop %v310
      %v365 = vtanh.pop %v315
      %v366 = vtanh.pop %v320
      %v367 = vtanh.pop %v325
      %v368 = vtanh.pop %v330
      %v369 = vtanh.pop %v335
      %v370 = vtanh.pop %v340
      %v371 = vtanh.pop %v345
      %v372 = vtanh.pop %v350
      %v373 = vtanh.pop %v355
      %vm374 = vcmask 613376
      %375 = vst.msk [vmem:[%s145] sm:$0xff] %vm374, %v358
      %376 = vst.msk [vmem:[%s145 + $0x8] sm:$0xff] %vm374, %v359
      %377 = vst.msk [vmem:[%s145 + $0x10] sm:$0xff] %vm374, %v360
      %378 = vst.msk [vmem:[%s145 + $0x18] sm:$0xff] %vm374, %v361
      %379 = vst.msk [vmem:[%s145 + $0x20] sm:$0xff] %vm374, %v362
      %380 = vst.msk [vmem:[%s145 + $0x28] sm:$0xff] %vm374, %v363
      %381 = vst.msk [vmem:[%s145 + $0x30] sm:$0xff] %vm374, %v364
      %382 = vst.msk [vmem:[%s145 + $0x38] sm:$0xff] %vm374, %v365
      %383 = vst.msk [vmem:[%s145 + $0x40] sm:$0xff] %vm374, %v366
      %384 = vst.msk [vmem:[%s145 + $0x48] sm:$0xff] %vm374, %v367
      %385 = vst.msk [vmem:[%s145 + $0x50] sm:$0xff] %vm374, %v368
      %386 = vst.msk [vmem:[%s145 + $0x58] sm:$0xff] %vm374, %v369
      %387 = vst.msk [vmem:[%s145 + $0x60] sm:$0xff] %vm374, %v370
      %388 = vst.msk [vmem:[%s145 + $0x68] sm:$0xff] %vm374, %v371
      %389 = vst.msk [vmem:[%s145 + $0x70] sm:$0xff] %vm374, %v372
      %390 = vst.msk [vmem:[%s145 + $0x78] sm:$0xff] %vm374, %v373
      %s391 = smul.u32 16, %s13
      %p392 = scmp.lt.s32.totalorder %s391, 63
      %s393 = scalar_select %p392, %s391, 63
      %s394 = smul.addr %s393, 8
      %s395 = scalar_lea.vmem %s2, %s394
      // Predicated region
      $region29: #{decoder_forward_pallas.9} parent=27 // pred_check
        %p396 = pneg %p78
      $region30: #{decoder_forward_pallas.9} parent=27 // pred_check_branch
        %398 = sbr.rel (%p396) target = $region32
      $region31: #{decoder_forward_pallas.9} parent=27 // pred_region
        %s399 = smul.u32 16, %s13
      $region32: #{decoder_forward_pallas.9} parent=27 // pred_fallthru
        _
    $region28: #{decoder_forward_pallas.9} parent=5 // pred_fallthru
      _
    %p400 = scmp.le.s32.totalorder 2, %s8
    // Predicated region
    $region33: #{decoder_forward_pallas.9} parent=5 // pred_check
      %p401 = pneg %p400
    $region34: #{decoder_forward_pallas.9} parent=5 // pred_check_branch
      %403 = sbr.rel (%p401) target = $region36
    $region35: #{decoder_forward_pallas.9} parent=5 // pred_region
      %s404 = ssub.s32 %s8, 2
      // Predicated region
      $region37: #{decoder_forward_pallas.9} parent=35 // pred_check
        %p405 = pneg %p84
      $region38: #{decoder_forward_pallas.9} parent=35 // pred_check_branch
        %407 = sbr.rel (%p405) target = $region40
      $region39: #{decoder_forward_pallas.9} parent=35 // pred_region
        %s408 = smul.u32 16, %s14
        %p409 = scmp.lt.s32.totalorder %s408, 63
        %s410 = scalar_select %p409, %s408, 63
        %s411 = smul.addr %s410, 8
        %s412 = scalar_lea.vmem %s2, %s411
      $region40: #{decoder_forward_pallas.9} parent=35 // pred_fallthru
        _
    $region36: #{decoder_forward_pallas.9} parent=5 // pred_fallthru
      _
  $region6: #{decoder_forward_pallas.9} parent=0 // loop_footer
    %s12 = sadd.s32 1, %s8
  $region7: #{decoder_forward_pallas.9} parent=0 // loop_footer_branch
    %7 = sbr.rel target = $region3
  $region8: #{decoder_forward_pallas.9} parent=0 // loop_exit
    _

// kernel: decoder_forward_pallas.8
$region0: #{decoder_forward_pallas.8}
  #allocation0 [shape = 'u32[]', space=smem, size = 0x4, offset = 0x4, fixed_abs, tag = 'smem constant byte address 0x4 - core index']
  #allocation1 [shape = 'u32[144,128]{1,0:T(1,128)}', space=vmem, size = 0x12000, scoped, tag = 'internal scratch']
  %s0 = inlined_call_operand.vmem [shape: f32[4,128,64], index: 0, kind: input, shape index: {}]
  %s1 = inlined_call_operand.vmem [shape: f32[4,64,8], index: 1, kind: input, shape index: {}]
  %s2 = inlined_call_operand.vmem [shape: f32[2,8], index: 2, kind: input, shape index: {}]
  %s3 = inlined_call_operand.vmem [shape: f32[4,128,8], index: 3, kind: output, shape index: {}]
  %s4 = sld [smem:[#allocation0]]
  $region22: #{decoder_forward_pallas.8} parent=0
    _
  %s6 = ssub.s32 1, %s4
  %s7 = scalar_select 0, %s6, %s4
  // Predicated region
  $region2: #{decoder_forward_pallas.8} parent=0 // pred_check
    _
  $region3: #{decoder_forward_pallas.8} parent=0 // pred_check_branch
    %9 = sbr.rel (0) target = $region5
  $region4: #{decoder_forward_pallas.8} parent=0 // pred_region
    _
  $region5: #{decoder_forward_pallas.8} parent=0 // pred_fallthru
    _
  // Predicated region
  $region6: #{decoder_forward_pallas.8} parent=0 // pred_check
    _
  $region7: #{decoder_forward_pallas.8} parent=0 // pred_check_branch
    %11 = sbr.rel (0) target = $region9
  $region8: #{decoder_forward_pallas.8} parent=0 // pred_region
    _
  $region9: #{decoder_forward_pallas.8} parent=0 // pred_fallthru
    _
  // Predicated region
  $region10: #{decoder_forward_pallas.8} parent=0 // pred_check
    _
  $region11: #{decoder_forward_pallas.8} parent=0 // pred_check_branch
    %13 = sbr.rel (0) target = $region13
  $region12: #{decoder_forward_pallas.8} parent=0 // pred_region
    _
  $region13: #{decoder_forward_pallas.8} parent=0 // pred_fallthru
    _
  %v14 = vld [vmem:[%s0] sm:$0xff]
  %v15 = vld [vmem:[%s0 + $0x8] sm:$0xff]
  %v16 = vld [vmem:[%s0 + $0x10] sm:$0xff]
  %v17 = vld [vmem:[%s0 + $0x18] sm:$0xff]
  %v18 = vld [vmem:[%s0 + $0x20] sm:$0xff]
  %v19 = vld [vmem:[%s0 + $0x28] sm:$0xff]
  %v20 = vld [vmem:[%s0 + $0x30] sm:$0xff]
  %v21 = vld [vmem:[%s0 + $0x38] sm:$0xff]
  %v22 = vld [vmem:[%s0 + $0x40] sm:$0xff]
  %v23 = vld [vmem:[%s0 + $0x48] sm:$0xff]
  %v24 = vld [vmem:[%s0 + $0x50] sm:$0xff]
  %v25 = vld [vmem:[%s0 + $0x58] sm:$0xff]
  %v26 = vld [vmem:[%s0 + $0x60] sm:$0xff]
  %v27 = vld [vmem:[%s0 + $0x68] sm:$0xff]
  %v28 = vld [vmem:[%s0 + $0x70] sm:$0xff]
  %v29 = vld [vmem:[%s0 + $0x78] sm:$0xff]
  %v30 = vld [vmem:[%s1] sm:$0xff]
  %v31 = vld [vmem:[%s1 + $0x8] sm:$0xff]
  %v32 = vld [vmem:[%s1 + $0x10] sm:$0xff]
  %v33 = vld [vmem:[%s1 + $0x18] sm:$0xff]
  %v34 = vld [vmem:[%s1 + $0x20] sm:$0xff]
  %v35 = vld [vmem:[%s1 + $0x28] sm:$0xff]
  %v36 = vld [vmem:[%s1 + $0x30] sm:$0xff]
  %v37 = vld [vmem:[%s1 + $0x38] sm:$0xff]
  %vm38 = vcmask 523264
  %v40 = vsel %vm38, %v14, 0
  %v43 = vsel %vm38, %v15, 0
  %v46 = vsel %vm38, %v16, 0
  %v49 = vsel %vm38, %v17, 0
  %v52 = vsel %vm38, %v18, 0
  %v55 = vsel %vm38, %v19, 0
  %v58 = vsel %vm38, %v20, 0
  %v61 = vsel %vm38, %v21, 0
  %v64 = vsel %vm38, %v22, 0
  %v67 = vsel %vm38, %v23, 0
  %v70 = vsel %vm38, %v24, 0
  %v73 = vsel %vm38, %v25, 0
  %v76 = vsel %vm38, %v26, 0
  %v79 = vsel %vm38, %v27, 0
  %v82 = vsel %vm38, %v28, 0
  %v85 = vsel %vm38, %v29, 0
  %87 = vmatprep.subr.mxu0 0.0
  %88 = vmatpush1.msra.mxu0 0.0
  %89 = vmatprep.subr.mxu0 0.0
  %90 = vmatpush1.msra.mxu0 0.0
  %91 = vmatprep.subr.mxu0 0.0
  %92 = vmatpush1.msra.mxu0 0.0
  %93 = vmatprep.subr.mxu0 0.0
  %94 = vmatpush1.msra.mxu0 0.0
  %95 = vmatprep.subr.mxu0 0.0
  %96 = vmatpush1.msra.mxu0 0.0
  %97 = vmatprep.subr.mxu0 0.0
  %98 = vmatpush1.msra.mxu0 0.0
  %99 = vmatprep.subr.mxu0 0.0
  %100 = vmatpush1.msra.mxu0 0.0
  %101 = vmatprep.subr.mxu0 0.0
  %102 = vmatpush1.msra.mxu0 0.0
  %103 = vmatprep.subr.mxu0 0.0
  %104 = vmatpush1.msra.mxu0 %v37
  %105 = vmatprep.subr.mxu0 0.0
  %106 = vmatpush1.msra.mxu0 %v36
  %107 = vmatprep.subr.mxu0 0.0
  %108 = vmatpush1.msra.mxu0 %v35
  %109 = vmatprep.subr.mxu0 0.0
  %110 = vmatpush1.msra.mxu0 %v34
  %111 = vmatprep.subr.mxu0 0.0
  %112 = vmatpush1.msra.mxu0 %v33
  %113 = vmatprep.subr.mxu0 0.0
  %114 = vmatpush1.msra.mxu0 %v32
  %115 = vmatprep.subr.mxu0 0.0
  %116 = vmatpush1.msra.mxu0 %v31
  %117 = vmatprep.subr.mxu0 0.0
  %118 = vmatpush1.msra.mxu0 %v30
  %119 = vmatprep.subr.mxu0 0.0
  %120 = vmatpush2.msra.mxu0 0.0
  %121 = vmatprep.subr.mxu0 0.0
  %122 = vmatpush2.msra.mxu0 0.0
  %123 = vmatprep.subr.mxu0 0.0
  %124 = vmatpush2.msra.mxu0 0.0
  %125 = vmatprep.subr.mxu0 0.0
  %126 = vmatpush2.msra.mxu0 0.0
  %127 = vmatprep.subr.mxu0 0.0
  %128 = vmatpush2.msra.mxu0 0.0
  %129 = vmatprep.subr.mxu0 0.0
  %130 = vmatpush2.msra.mxu0 0.0
  %131 = vmatprep.subr.mxu0 0.0
  %132 = vmatpush2.msra.mxu0 0.0
  %133 = vmatprep.subr.mxu0 0.0
  %134 = vmatpush2.msra.mxu0 0.0
  %135 = vmatprep.subr.mxu0 0.0
  %136 = vmatpush2.msra.mxu0 0.0
  %137 = vmatprep.subr.mxu0 0.0
  %138 = vmatpush2.msra.mxu0 0.0
  %139 = vmatprep.subr.mxu0 0.0
  %140 = vmatpush2.msra.mxu0 0.0
  %141 = vmatprep.subr.mxu0 0.0
  %142 = vmatpush2.msra.mxu0 0.0
  %143 = vmatprep.subr.mxu0 0.0
  %144 = vmatpush2.msra.mxu0 0.0
  %145 = vmatprep.subr.mxu0 0.0
  %146 = vmatpush2.msra.mxu0 0.0
  %147 = vmatprep.subr.mxu0 0.0
  %148 = vmatpush2.msra.mxu0 0.0
  %149 = vmatprep.subr.mxu0 0.0
  %150 = vmatpush2.msra.mxu0 0.0
  %151 = vmatprep.mubr.f32.mxu0 0.0
  %152 = vmatmul.mubr.f32.gmra.mxu0 %v40
  %v153 = vpop.f32.mrf.mxu0
  %v154 = vadd.f32 0.0, %v153
  %v155 = vpop.f32.mrf.mxu0
  %156 = vmatprep.mubr.f32.mxu0 0.0
  %157 = vmatmul.mubr.f32.gmra.mxu0 %v43
  %v158 = vpop.f32.mrf.mxu0
  %v159 = vadd.f32 0.0, %v158
  %v160 = vpop.f32.mrf.mxu0
  %161 = vmatprep.mubr.f32.mxu0 0.0
  %162 = vmatmul.mubr.f32.gmra.mxu0 %v46
  %v163 = vpop.f32.mrf.mxu0
  %v164 = vadd.f32 0.0, %v163
  %v165 = vpop.f32.mrf.mxu0
  %166 = vmatprep.mubr.f32.mxu0 0.0
  %167 = vmatmul.mubr.f32.gmra.mxu0 %v49
  %v168 = vpop.f32.mrf.mxu0
  %v169 = vadd.f32 0.0, %v168
  %v170 = vpop.f32.mrf.mxu0
  %171 = vmatprep.mubr.f32.mxu0 0.0
  %172 = vmatmul.mubr.f32.gmra.mxu0 %v52
  %v173 = vpop.f32.mrf.mxu0
  %v174 = vadd.f32 0.0, %v173
  %v175 = vpop.f32.mrf.mxu0
  %176 = vmatprep.mubr.f32.mxu0 0.0
  %177 = vmatmul.mubr.f32.gmra.mxu0 %v55
  %v178 = vpop.f32.mrf.mxu0
  %v179 = vadd.f32 0.0, %v178
  %v180 = vpop.f32.mrf.mxu0
  %181 = vmatprep.mubr.f32.mxu0 0.0
  %182 = vmatmul.mubr.f32.gmra.mxu0 %v58
  %v183 = vpop.f32.mrf.mxu0
  %v184 = vadd.f32 0.0, %v183
  %v185 = vpop.f32.mrf.mxu0
  %186 = vmatprep.mubr.f32.mxu0 0.0
  %187 = vmatmul.mubr.f32.gmra.mxu0 %v61
  %v188 = vpop.f32.mrf.mxu0
  %v189 = vadd.f32 0.0, %v188
  %v190 = vpop.f32.mrf.mxu0
  %191 = vmatprep.mubr.f32.mxu0 0.0
  %192 = vmatmul.mubr.f32.gmra.mxu0 %v64
  %v193 = vpop.f32.mrf.mxu0
  %v194 = vadd.f32 0.0, %v193
  %v195 = vpop.f32.mrf.mxu0
  %196 = vmatprep.mubr.f32.mxu0 0.0
  %197 = vmatmul.mubr.f32.gmra.mxu0 %v67
  %v198 = vpop.f32.mrf.mxu0
  %v199 = vadd.f32 0.0, %v198
  %v200 = vpop.f32.mrf.mxu0
  %201 = vmatprep.mubr.f32.mxu0 0.0
  %202 = vmatmul.mubr.f32.gmra.mxu0 %v70
  %v203 = vpop.f32.mrf.mxu0
  %v204 = vadd.f32 0.0, %v203
  %v205 = vpop.f32.mrf.mxu0
  %206 = vmatprep.mubr.f32.mxu0 0.0
  %207 = vmatmul.mubr.f32.gmra.mxu0 %v73
  %v208 = vpop.f32.mrf.mxu0
  %v209 = vadd.f32 0.0, %v208
  %v210 = vpop.f32.mrf.mxu0
  %211 = vmatprep.mubr.f32.mxu0 0.0
  %212 = vmatmul.mubr.f32.gmra.mxu0 %v76
  %v213 = vpop.f32.mrf.mxu0
  %v214 = vadd.f32 0.0, %v213
  %v215 = vpop.f32.mrf.mxu0
  %216 = vmatprep.mubr.f32.mxu0 0.0
  %217 = vmatmul.mubr.f32.gmra.mxu0 %v79
  %v218 = vpop.f32.mrf.mxu0
  %v219 = vadd.f32 0.0, %v218
  %v220 = vpop.f32.mrf.mxu0
  %221 = vmatprep.mubr.f32.mxu0 0.0
  %222 = vmatmul.mubr.f32.gmra.mxu0 %v82
  %v223 = vpop.f32.mrf.mxu0
  %v224 = vadd.f32 0.0, %v223
  %v225 = vpop.f32.mrf.mxu0
  %226 = vmatprep.mubr.f32.mxu0 0.0
  %227 = vmatmul.mubr.f32.gmra.mxu0 %v85
  %v228 = vpop.f32.mrf.mxu0
  %v229 = vadd.f32 0.0, %v228
  %v230 = vpop.f32.mrf.mxu0
  %231 = vdwg.mxu0
  %vm232 = vcmask 64512
  %233 = vst.msk [vmem:[%s3] sm:$0xff] %vm232, %v154
  %234 = vst.msk [vmem:[%s3 + $0x8] sm:$0xff] %vm232, %v159
  %235 = vst.msk [vmem:[%s3 + $0x10] sm:$0xff] %vm232, %v164
  %236 = vst.msk [vmem:[%s3 + $0x18] sm:$0xff] %vm232, %v169
  %237 = vst.msk [vmem:[%s3 + $0x20] sm:$0xff] %vm232, %v174
  %238 = vst.msk [vmem:[%s3 + $0x28] sm:$0xff] %vm232, %v179
  %239 = vst.msk [vmem:[%s3 + $0x30] sm:$0xff] %vm232, %v184
  %240 = vst.msk [vmem:[%s3 + $0x38] sm:$0xff] %vm232, %v189
  %241 = vst.msk [vmem:[%s3 + $0x40] sm:$0xff] %vm232, %v194
  %242 = vst.msk [vmem:[%s3 + $0x48] sm:$0xff] %vm232, %v199
  %243 = vst.msk [vmem:[%s3 + $0x50] sm:$0xff] %vm232, %v204
  %244 = vst.msk [vmem:[%s3 + $0x58] sm:$0xff] %vm232, %v209
  %245 = vst.msk [vmem:[%s3 + $0x60] sm:$0xff] %vm232, %v214
  %246 = vst.msk [vmem:[%s3 + $0x68] sm:$0xff] %vm232, %v219
  %247 = vst.msk [vmem:[%s3 + $0x70] sm:$0xff] %vm232, %v224
  %248 = vst.msk [vmem:[%s3 + $0x78] sm:$0xff] %vm232, %v229
  %v249 = vsel %vm232, %v154, 0.0
  %v250 = vsel %vm232, %v159, 0.0
  %v251 = vadd.f32 %v249, %v250
  %v252 = vsel %vm232, %v164, 0.0
  %v253 = vadd.f32 %v251, %v252
  %v254 = vsel %vm232, %v169, 0.0
  %v255 = vadd.f32 %v253, %v254
  %v256 = vsel %vm232, %v174, 0.0
  %v257 = vadd.f32 %v255, %v256
  %v258 = vsel %vm232, %v179, 0.0
  %v259 = vadd.f32 %v257, %v258
  %v260 = vsel %vm232, %v184, 0.0
  %v261 = vadd.f32 %v259, %v260
  %v262 = vsel %vm232, %v189, 0.0
  %v263 = vadd.f32 %v261, %v262
  %v264 = vsel %vm232, %v194, 0.0
  %v265 = vadd.f32 %v263, %v264
  %v266 = vsel %vm232, %v199, 0.0
  %v267 = vadd.f32 %v265, %v266
  %v268 = vsel %vm232, %v204, 0.0
  %v269 = vadd.f32 %v267, %v268
  %v270 = vsel %vm232, %v209, 0.0
  %v271 = vadd.f32 %v269, %v270
  %v272 = vsel %vm232, %v214, 0.0
  %v273 = vadd.f32 %v271, %v272
  %v274 = vsel %vm232, %v219, 0.0
  %v275 = vadd.f32 %v273, %v274
  %v276 = vsel %vm232, %v224, 0.0
  %v277 = vadd.f32 %v275, %v276
  %v278 = vsel %vm232, %v229, 0.0
  %v279 = vadd.f32 %v277, %v278
  %v280 = vrot.slane %v279, 4
  %v281 = vadd.f32 %v279, %v280
  %v282 = vrot.slane %v281, 2
  %v283 = vadd.f32 %v281, %v282
  %v284 = vrot.slane %v283, 1
  %v285 = vadd.f32 %v283, %v284
  %v286 = vadd.f32 %v285, 0.0
  %v287 = vmul.f32 %v154, %v154
  %v288 = vmul.f32 %v159, %v159
  %v289 = vmul.f32 %v164, %v164
  %v290 = vmul.f32 %v169, %v169
  %v291 = vmul.f32 %v174, %v174
  %v292 = vmul.f32 %v179, %v179
  %v293 = vmul.f32 %v184, %v184
  %v294 = vmul.f32 %v189, %v189
  %v295 = vmul.f32 %v194, %v194
  %v296 = vmul.f32 %v199, %v199
  %v297 = vmul.f32 %v204, %v204
  %v298 = vmul.f32 %v209, %v209
  %v299 = vmul.f32 %v214, %v214
  %v300 = vmul.f32 %v219, %v219
  %v301 = vmul.f32 %v224, %v224
  %v302 = vmul.f32 %v229, %v229
  %v303 = vsel %vm232, %v287, 0.0
  %v304 = vsel %vm232, %v288, 0.0
  %v305 = vadd.f32 %v303, %v304
  %v306 = vsel %vm232, %v289, 0.0
  %v307 = vadd.f32 %v305, %v306
  %v308 = vsel %vm232, %v290, 0.0
  %v309 = vadd.f32 %v307, %v308
  %v310 = vsel %vm232, %v291, 0.0
  %v311 = vadd.f32 %v309, %v310
  %v312 = vsel %vm232, %v292, 0.0
  %v313 = vadd.f32 %v311, %v312
  %v314 = vsel %vm232, %v293, 0.0
  %v315 = vadd.f32 %v313, %v314
  %v316 = vsel %vm232, %v294, 0.0
  %v317 = vadd.f32 %v315, %v316
  %v318 = vsel %vm232, %v295, 0.0
  %v319 = vadd.f32 %v317, %v318
  %v320 = vsel %vm232, %v296, 0.0
  %v321 = vadd.f32 %v319, %v320
  %v322 = vsel %vm232, %v297, 0.0
  %v323 = vadd.f32 %v321, %v322
  %v324 = vsel %vm232, %v298, 0.0
  %v325 = vadd.f32 %v323, %v324
  %v326 = vsel %vm232, %v299, 0.0
  %v327 = vadd.f32 %v325, %v326
  %v328 = vsel %vm232, %v300, 0.0
  %v329 = vadd.f32 %v327, %v328
  %v330 = vsel %vm232, %v301, 0.0
  %v331 = vadd.f32 %v329, %v330
  %v332 = vsel %vm232, %v302, 0.0
  %v333 = vadd.f32 %v331, %v332
  %v334 = vrot.slane %v333, 4
  %v335 = vadd.f32 %v333, %v334
  %v336 = vrot.slane %v335, 2
  %v337 = vadd.f32 %v335, %v336
  %v338 = vrot.slane %v337, 1
  %v339 = vadd.f32 %v337, %v338
  %v340 = vadd.f32 %v339, 0.0
  %s341 = scalar_lea.vmem %s0, 128
  %v342 = vld [vmem:[%s341] sm:$0xff]
  %v343 = vld [vmem:[%s341 + $0x8] sm:$0xff]
  %v344 = vld [vmem:[%s341 + $0x10] sm:$0xff]
  %v345 = vld [vmem:[%s341 + $0x18] sm:$0xff]
  %v346 = vld [vmem:[%s341 + $0x20] sm:$0xff]
  %v347 = vld [vmem:[%s341 + $0x28] sm:$0xff]
  %v348 = vld [vmem:[%s341 + $0x30] sm:$0xff]
  %v349 = vld [vmem:[%s341 + $0x38] sm:$0xff]
  %v350 = vld [vmem:[%s341 + $0x40] sm:$0xff]
  %v351 = vld [vmem:[%s341 + $0x48] sm:$0xff]
  %v352 = vld [vmem:[%s341 + $0x50] sm:$0xff]
  %v353 = vld [vmem:[%s341 + $0x58] sm:$0xff]
  %v354 = vld [vmem:[%s341 + $0x60] sm:$0xff]
  %v355 = vld [vmem:[%s341 + $0x68] sm:$0xff]
  %v356 = vld [vmem:[%s341 + $0x70] sm:$0xff]
  %v357 = vld [vmem:[%s341 + $0x78] sm:$0xff]
  %s358 = scalar_lea.vmem %s1, 64
  %v359 = vld [vmem:[%s358] sm:$0xff]
  %v360 = vld [vmem:[%s358 + $0x8] sm:$0xff]
  %v361 = vld [vmem:[%s358 + $0x10] sm:$0xff]
  %v362 = vld [vmem:[%s358 + $0x18] sm:$0xff]
  %v363 = vld [vmem:[%s358 + $0x20] sm:$0xff]
  %v364 = vld [vmem:[%s358 + $0x28] sm:$0xff]
  %v365 = vld [vmem:[%s358 + $0x30] sm:$0xff]
  %v366 = vld [vmem:[%s358 + $0x38] sm:$0xff]
  %v368 = vsel %vm38, %v342, 0
  %v371 = vsel %vm38, %v343, 0
  %v374 = vsel %vm38, %v344, 0
  %v377 = vsel %vm38, %v345, 0
  %v380 = vsel %vm38, %v346, 0
  %v383 = vsel %vm38, %v347, 0
  %v386 = vsel %vm38, %v348, 0
  %v389 = vsel %vm38, %v349, 0
  %v392 = vsel %vm38, %v350, 0
  %v395 = vsel %vm38, %v351, 0
  %v398 = vsel %vm38, %v352, 0
  %v401 = vsel %vm38, %v353, 0
  %v404 = vsel %vm38, %v354, 0
  %v407 = vsel %vm38, %v355, 0
  %v410 = vsel %vm38, %v356, 0
  %v413 = vsel %vm38, %v357, 0
  %415 = vmatprep.subr.mxu0 0.0
  %416 = vmatpush1.msra.mxu0 0.0
  %417 = vmatprep.subr.mxu0 0.0
  %418 = vmatpush1.msra.mxu0 0.0
  %419 = vmatprep.subr.mxu0 0.0
  %420 = vmatpush1.msra.mxu0 0.0
  %421 = vmatprep.subr.mxu0 0.0
  %422 = vmatpush1.msra.mxu0 0.0
  %423 = vmatprep.subr.mxu0 0.0
  %424 = vmatpush1.msra.mxu0 0.0
  %425 = vmatprep.subr.mxu0 0.0
  %426 = vmatpush1.msra.mxu0 0.0
  %427 = vmatprep.subr.mxu0 0.0
  %428 = vmatpush1.msra.mxu0 0.0
  %429 = vmatprep.subr.mxu0 0.0
  %430 = vmatpush1.msra.mxu0 0.0
  %431 = vmatprep.subr.mxu0 0.0
  %432 = vmatpush1.msra.mxu0 %v366
  %433 = vmatprep.subr.mxu0 0.0
  %434 = vmatpush1.msra.mxu0 %v365
  %435 = vmatprep.subr.mxu0 0.0
  %436 = vmatpush1.msra.mxu0 %v364
  %437 = vmatprep.subr.mxu0 0.0
  %438 = vmatpush1.msra.mxu0 %v363
  %439 = vmatprep.subr.mxu0 0.0
  %440 = vmatpush1.msra.mxu0 %v362
  %441 = vmatprep.subr.mxu0 0.0
  %442 = vmatpush1.msra.mxu0 %v361
  %443 = vmatprep.subr.mxu0 0.0
  %444 = vmatpush1.msra.mxu0 %v360
  %445 = vmatprep.subr.mxu0 0.0
  %446 = vmatpush1.msra.mxu0 %v359
  %447 = vmatprep.subr.mxu0 0.0
  %448 = vmatpush2.msra.mxu0 0.0
  %449 = vmatprep.subr.mxu0 0.0
  %450 = vmatpush2.msra.mxu0 0.0
  %451 = vmatprep.subr.mxu0 0.0
  %452 = vmatpush2.msra.mxu0 0.0
  %453 = vmatprep.subr.mxu0 0.0
  %454 = vmatpush2.msra.mxu0 0.0
  %455 = vmatprep.subr.mxu0 0.0
  %456 = vmatpush2.msra.mxu0 0.0
  %457 = vmatprep.subr.mxu0 0.0
  %458 = vmatpush2.msra.mxu0 0.0
  %459 = vmatprep.subr.mxu0 0.0
  %460 = vmatpush2.msra.mxu0 0.0
  %461 = vmatprep.subr.mxu0 0.0
  %462 = vmatpush2.msra.mxu0 0.0
  %463 = vmatprep.subr.mxu0 0.0
  %464 = vmatpush2.msra.mxu0 0.0
  %465 = vmatprep.subr.mxu0 0.0
  %466 = vmatpush2.msra.mxu0 0.0
  %467 = vmatprep.subr.mxu0 0.0
  %468 = vmatpush2.msra.mxu0 0.0
  %469 = vmatprep.subr.mxu0 0.0
  %470 = vmatpush2.msra.mxu0 0.0
  %471 = vmatprep.subr.mxu0 0.0
  %472 = vmatpush2.msra.mxu0 0.0
  %473 = vmatprep.subr.mxu0 0.0
  %474 = vmatpush2.msra.mxu0 0.0
  %475 = vmatprep.subr.mxu0 0.0
  %476 = vmatpush2.msra.mxu0 0.0
  %477 = vmatprep.subr.mxu0 0.0
  %478 = vmatpush2.msra.mxu0 0.0
  %479 = vmatprep.mubr.f32.mxu0 0.0
  %480 = vmatmul.mubr.f32.gmra.mxu0 %v368
  %v481 = vpop.f32.mrf.mxu0
  %v482 = vadd.f32 0.0, %v481
  %v483 = vpop.f32.mrf.mxu0
  %484 = vmatprep.mubr.f32.mxu0 0.0
  %485 = vmatmul.mubr.f32.gmra.mxu0 %v371
  %v486 = vpop.f32.mrf.mxu0
  %v487 = vadd.f32 0.0, %v486
  %v488 = vpop.f32.mrf.mxu0
  %489 = vmatprep.mubr.f32.mxu0 0.0
  %490 = vmatmul.mubr.f32.gmra.mxu0 %v374
  %v491 = vpop.f32.mrf.mxu0
  %v492 = vadd.f32 0.0, %v491
  %v493 = vpop.f32.mrf.mxu0
  %494 = vmatprep.mubr.f32.mxu0 0.0
  %495 = vmatmul.mubr.f32.gmra.mxu0 %v377
  %v496 = vpop.f32.mrf.mxu0
  %v497 = vadd.f32 0.0, %v496
  %v498 = vpop.f32.mrf.mxu0
  %499 = vmatprep.mubr.f32.mxu0 0.0
  %500 = vmatmul.mubr.f32.gmra.mxu0 %v380
  %v501 = vpop.f32.mrf.mxu0
  %v502 = vadd.f32 0.0, %v501
  %v503 = vpop.f32.mrf.mxu0
  %504 = vmatprep.mubr.f32.mxu0 0.0
  %505 = vmatmul.mubr.f32.gmra.mxu0 %v383
  %v506 = vpop.f32.mrf.mxu0
  %v507 = vadd.f32 0.0, %v506
  %v508 = vpop.f32.mrf.mxu0
  %509 = vmatprep.mubr.f32.mxu0 0.0
  %510 = vmatmul.mubr.f32.gmra.mxu0 %v386
  %v511 = vpop.f32.mrf.mxu0
  %v512 = vadd.f32 0.0, %v511
  %v513 = vpop.f32.mrf.mxu0
  %514 = vmatprep.mubr.f32.mxu0 0.0
  %515 = vmatmul.mubr.f32.gmra.mxu0 %v389
  %v516 = vpop.f32.mrf.mxu0
  %v517 = vadd.f32 0.0, %v516
  %v518 = vpop.f32.mrf.mxu0
  %519 = vmatprep.mubr.f32.mxu0 0.0
  %520 = vmatmul.mubr.f32.gmra.mxu0 %v392
  %v521 = vpop.f32.mrf.mxu0
  %v522 = vadd.f32 0.0, %v521
  %v523 = vpop.f32.mrf.mxu0
  %524 = vmatprep.mubr.f32.mxu0 0.0
  %525 = vmatmul.mubr.f32.gmra.mxu0 %v395
  %v526 = vpop.f32.mrf.mxu0
  %v527 = vadd.f32 0.0, %v526
  %v528 = vpop.f32.mrf.mxu0
  %529 = vmatprep.mubr.f32.mxu0 0.0
  %530 = vmatmul.mubr.f32.gmra.mxu0 %v398
  %v531 = vpop.f32.mrf.mxu0
  %v532 = vadd.f32 0.0, %v531
  %v533 = vpop.f32.mrf.mxu0
  %534 = vmatprep.mubr.f32.mxu0 0.0
  %535 = vmatmul.mubr.f32.gmra.mxu0 %v401
  %v536 = vpop.f32.mrf.mxu0
  %v537 = vadd.f32 0.0, %v536
  %v538 = vpop.f32.mrf.mxu0
  %539 = vmatprep.mubr.f32.mxu0 0.0
  %540 = vmatmul.mubr.f32.gmra.mxu0 %v404
  %v541 = vpop.f32.mrf.mxu0
  %v542 = vadd.f32 0.0, %v541
  %v543 = vpop.f32.mrf.mxu0
  %544 = vmatprep.mubr.f32.mxu0 0.0
  %545 = vmatmul.mubr.f32.gmra.mxu0 %v407
  %v546 = vpop.f32.mrf.mxu0
  %v547 = vadd.f32 0.0, %v546
  %v548 = vpop.f32.mrf.mxu0
  %549 = vmatprep.mubr.f32.mxu0 0.0
  %550 = vmatmul.mubr.f32.gmra.mxu0 %v410
  %v551 = vpop.f32.mrf.mxu0
  %v552 = vadd.f32 0.0, %v551
  %v553 = vpop.f32.mrf.mxu0
  %554 = vmatprep.mubr.f32.mxu0 0.0
  %555 = vmatmul.mubr.f32.gmra.mxu0 %v413
  %v556 = vpop.f32.mrf.mxu0
  %v557 = vadd.f32 0.0, %v556
  %v558 = vpop.f32.mrf.mxu0
  %559 = vdwg.mxu0
  %s560 = scalar_lea.vmem %s3, 128
  %561 = vst.msk [vmem:[%s560] sm:$0xff] %vm232, %v482
  %562 = vst.msk [vmem:[%s560 + $0x8] sm:$0xff] %vm232, %v487
  %563 = vst.msk [vmem:[%s560 + $0x10] sm:$0xff] %vm232, %v492
  %564 = vst.msk [vmem:[%s560 + $0x18] sm:$0xff] %vm232, %v497
  %565 = vst.msk [vmem:[%s560 + $0x20] sm:$0xff] %vm232, %v502
  %566 = vst.msk [vmem:[%s560 + $0x28] sm:$0xff] %vm232, %v507
  %567 = vst.msk [vmem:[%s560 + $0x30] sm:$0xff] %vm232, %v512
  %568 = vst.msk [vmem:[%s560 + $0x38] sm:$0xff] %vm232, %v517
  %569 = vst.msk [vmem:[%s560 + $0x40] sm:$0xff] %vm232, %v522
  %570 = vst.msk [vmem:[%s560 + $0x48] sm:$0xff] %vm232, %v527
  %571 = vst.msk [vmem:[%s560 + $0x50] sm:$0xff] %vm232, %v532
  %572 = vst.msk [vmem:[%s560 + $0x58] sm:$0xff] %vm232, %v537
  %573 = vst.msk [vmem:[%s560 + $0x60] sm:$0xff] %vm232, %v542
  %574 = vst.msk [vmem:[%s560 + $0x68] sm:$0xff] %vm232, %v547
  %575 = vst.msk [vmem:[%s560 + $0x70] sm:$0xff] %vm232, %v552
  %576 = vst.msk [vmem:[%s560 + $0x78] sm:$0xff] %vm232, %v557
  %v577 = vsel %vm232, %v482, 0.0
  %v578 = vsel %vm232, %v487, 0.0
  %v579 = vadd.f32 %v577, %v578
  %v580 = vsel %vm232, %v492, 0.0
  %v581 = vadd.f32 %v579, %v580
  %v582 = vsel %vm232, %v497, 0.0
  %v583 = vadd.f32 %v581, %v582
  %v584 = vsel %vm232, %v502, 0.0
  %v585 = vadd.f32 %v583, %v584
  %v586 = vsel %vm232, %v507, 0.0
  %v587 = vadd.f32 %v585, %v586
  %v588 = vsel %vm232, %v512, 0.0
  %v589 = vadd.f32 %v587, %v588
  %v590 = vsel %vm232, %v517, 0.0
  %v591 = vadd.f32 %v589, %v590
  %v592 = vsel %vm232, %v522, 0.0
  %v593 = vadd.f32 %v591, %v592
  %v594 = vsel %vm232, %v527, 0.0
  %v595 = vadd.f32 %v593, %v594
  %v596 = vsel %vm232, %v532, 0.0
  %v597 = vadd.f32 %v595, %v596
  %v598 = vsel %vm232, %v537, 0.0
  %v599 = vadd.f32 %v597, %v598
  %v600 = vsel %vm232, %v542, 0.0
  %v601 = vadd.f32 %v599, %v600
  %v602 = vsel %vm232, %v547, 0.0
  %v603 = vadd.f32 %v601, %v602
  %v604 = vsel %vm232, %v552, 0.0
  %v605 = vadd.f32 %v603, %v604
  %v606 = vsel %vm232, %v557, 0.0
  %v607 = vadd.f32 %v605, %v606
  %v608 = vrot.slane %v607, 4
  %v609 = vadd.f32 %v607, %v608
  %v610 = vrot.slane %v609, 2
  %v611 = vadd.f32 %v609, %v610
  %v612 = vrot.slane %v611, 1
  %v613 = vadd.f32 %v611, %v612
  %v614 = vadd.f32 %v286, %v613
  %v615 = vmul.f32 %v482, %v482
  %v616 = vmul.f32 %v487, %v487
  %v617 = vmul.f32 %v492, %v492
  %v618 = vmul.f32 %v497, %v497
  %v619 = vmul.f32 %v502, %v502
  %v620 = vmul.f32 %v507, %v507
  %v621 = vmul.f32 %v512, %v512
  %v622 = vmul.f32 %v517, %v517
  %v623 = vmul.f32 %v522, %v522
  %v624 = vmul.f32 %v527, %v527
  %v625 = vmul.f32 %v532, %v532
  %v626 = vmul.f32 %v537, %v537
  %v627 = vmul.f32 %v542, %v542
  %v628 = vmul.f32 %v547, %v547
  %v629 = vmul.f32 %v552, %v552
  %v630 = vmul.f32 %v557, %v557
  %v631 = vsel %vm232, %v615, 0.0
  %v632 = vsel %vm232, %v616, 0.0
  %v633 = vadd.f32 %v631, %v632
  %v634 = vsel %vm232, %v617, 0.0
  %v635 = vadd.f32 %v633, %v634
  %v636 = vsel %vm232, %v618, 0.0
  %v637 = vadd.f32 %v635, %v636
  %v638 = vsel %vm232, %v619, 0.0
  %v639 = vadd.f32 %v637, %v638
  %v640 = vsel %vm232, %v620, 0.0
  %v641 = vadd.f32 %v639, %v640
  %v642 = vsel %vm232, %v621, 0.0
  %v643 = vadd.f32 %v641, %v642
  %v644 = vsel %vm232, %v622, 0.0
  %v645 = vadd.f32 %v643, %v644
  %v646 = vsel %vm232, %v623, 0.0
  %v647 = vadd.f32 %v645, %v646
  %v648 = vsel %vm232, %v624, 0.0
  %v649 = vadd.f32 %v647, %v648
  %v650 = vsel %vm232, %v625, 0.0
  %v651 = vadd.f32 %v649, %v650
  %v652 = vsel %vm232, %v626, 0.0
  %v653 = vadd.f32 %v651, %v652
  %v654 = vsel %vm232, %v627, 0.0
  %v655 = vadd.f32 %v653, %v654
  %v656 = vsel %vm232, %v628, 0.0
  %v657 = vadd.f32 %v655, %v656
  %v658 = vsel %vm232, %v629, 0.0
  %v659 = vadd.f32 %v657, %v658
  %v660 = vsel %vm232, %v630, 0.0
  %v661 = vadd.f32 %v659, %v660
  %v662 = vrot.slane %v661, 4
  %v663 = vadd.f32 %v661, %v662
  %v664 = vrot.slane %v663, 2
  %v665 = vadd.f32 %v663, %v664
  %v666 = vrot.slane %v665, 1
  %v667 = vadd.f32 %v665, %v666
  %v668 = vadd.f32 %v340, %v667
  %s669 = scalar_lea.vmem %s0, 256
  %v670 = vld [vmem:[%s669] sm:$0xff]
  %v671 = vld [vmem:[%s669 + $0x8] sm:$0xff]
  %v672 = vld [vmem:[%s669 + $0x10] sm:$0xff]
  %v673 = vld [vmem:[%s669 + $0x18] sm:$0xff]
  %v674 = vld [vmem:[%s669 + $0x20] sm:$0xff]
  %v675 = vld [vmem:[%s669 + $0x28] sm:$0xff]
  %v676 = vld [vmem:[%s669 + $0x30] sm:$0xff]
  %v677 = vld [vmem:[%s669 + $0x38] sm:$0xff]
  %v678 = vld [vmem:[%s669 + $0x40] sm:$0xff]
  %v679 = vld [vmem:[%s669 + $0x48] sm:$0xff]
  %v680 = vld [vmem:[%s669 + $0x50] sm:$0xff]
  %v681 = vld [vmem:[%s669 + $0x58] sm:$0xff]
  %v682 = vld [vmem:[%s669 + $0x60] sm:$0xff]
  %v683 = vld [vmem:[%s669 + $0x68] sm:$0xff]
  %v684 = vld [vmem:[%s669 + $0x70] sm:$0xff]
  %v685 = vld [vmem:[%s669 + $0x78] sm:$0xff]
  %s686 = scalar_lea.vmem %s1, 128
  %v687 = vld [vmem:[%s686] sm:$0xff]
  %v688 = vld [vmem:[%s686 + $0x8] sm:$0xff]
  %v689 = vld [vmem:[%s686 + $0x10] sm:$0xff]
  %v690 = vld [vmem:[%s686 + $0x18] sm:$0xff]
  %v691 = vld [vmem:[%s686 + $0x20] sm:$0xff]
  %v692 = vld [vmem:[%s686 + $0x28] sm:$0xff]
  %v693 = vld [vmem:[%s686 + $0x30] sm:$0xff]
  %v694 = vld [vmem:[%s686 + $0x38] sm:$0xff]
  %v696 = vsel %vm38, %v670, 0
  %v699 = vsel %vm38, %v671, 0
  %v702 = vsel %vm38, %v672, 0
  %v705 = vsel %vm38, %v673, 0
  %v708 = vsel %vm38, %v674, 0
  %v711 = vsel %vm38, %v675, 0
  %v714 = vsel %vm38, %v676, 0
  %v717 = vsel %vm38, %v677, 0
  %v720 = vsel %vm38, %v678, 0
  %v723 = vsel %vm38, %v679, 0
  %v726 = vsel %vm38, %v680, 0
  %v729 = vsel %vm38, %v681, 0
  %v732 = vsel %vm38, %v682, 0
  %v735 = vsel %vm38, %v683, 0
  %v738 = vsel %vm38, %v684, 0
  %v741 = vsel %vm38, %v685, 0
  %743 = vmatprep.subr.mxu0 0.0
  %744 = vmatpush1.msra.mxu0 0.0
  %745 = vmatprep.subr.mxu0 0.0
  %746 = vmatpush1.msra.mxu0 0.0
  %747 = vmatprep.subr.mxu0 0.0
  %748 = vmatpush1.msra.mxu0 0.0
  %749 = vmatprep.subr.mxu0 0.0
  %750 = vmatpush1.msra.mxu0 0.0
  %751 = vmatprep.subr.mxu0 0.0
  %752 = vmatpush1.msra.mxu0 0.0
  %753 = vmatprep.subr.mxu0 0.0
  %754 = vmatpush1.msra.mxu0 0.0
  %755 = vmatprep.subr.mxu0 0.0
  %756 = vmatpush1.msra.mxu0 0.0
  %757 = vmatprep.subr.mxu0 0.0
  %758 = vmatpush1.msra.mxu0 0.0
  %759 = vmatprep.subr.mxu0 0.0
  %760 = vmatpush1.msra.mxu0 %v694
  %761 = vmatprep.subr.mxu0 0.0
  %762 = vmatpush1.msra.mxu0 %v693
  %763 = vmatprep.subr.mxu0 0.0
  %764 = vmatpush1.msra.mxu0 %v692
  %765 = vmatprep.subr.mxu0 0.0
  %766 = vmatpush1.msra.mxu0 %v691
  %767 = vmatprep.subr.mxu0 0.0
  %768 = vmatpush1.msra.mxu0 %v690
  %769 = vmatprep.subr.mxu0 0.0
  %770 = vmatpush1.msra.mxu0 %v689
  %771 = vmatprep.subr.mxu0 0.0
  %772 = vmatpush1.msra.mxu0 %v688
  %773 = vmatprep.subr.mxu0 0.0
  %774 = vmatpush1.msra.mxu0 %v687
  %775 = vmatprep.subr.mxu0 0.0
  %776 = vmatpush2.msra.mxu0 0.0
  %777 = vmatprep.subr.mxu0 0.0
  %778 = vmatpush2.msra.mxu0 0.0
  %779 = vmatprep.subr.mxu0 0.0
  %780 = vmatpush2.msra.mxu0 0.0
  %781 = vmatprep.subr.mxu0 0.0
  %782 = vmatpush2.msra.mxu0 0.0
  %783 = vmatprep.subr.mxu0 0.0
  %784 = vmatpush2.msra.mxu0 0.0
  %785 = vmatprep.subr.mxu0 0.0
  %786 = vmatpush2.msra.mxu0 0.0
  %787 = vmatprep.subr.mxu0 0.0
  %788 = vmatpush2.msra.mxu0 0.0
  %789 = vmatprep.subr.mxu0 0.0
  %790 = vmatpush2.msra.mxu0 0.0
  %791 = vmatprep.subr.mxu0 0.0
  %792 = vmatpush2.msra.mxu0 0.0
  %793 = vmatprep.subr.mxu0 0.0
  %794 = vmatpush2.msra.mxu0 0.0
  %795 = vmatprep.subr.mxu0 0.0
  %796 = vmatpush2.msra.mxu0 0.0
  %797 = vmatprep.subr.mxu0 0.0
  %798 = vmatpush2.msra.mxu0 0.0
  %799 = vmatprep.subr.mxu0 0.0
  %800 = vmatpush2.msra.mxu0 0.0
  %801 = vmatprep.subr.mxu0 0.0
  %802 = vmatpush2.msra.mxu0 0.0
  %803 = vmatprep.subr.mxu0 0.0
  %804 = vmatpush2.msra.mxu0 0.0
  %805 = vmatprep.subr.mxu0 0.0
  %806 = vmatpush2.msra.mxu0 0.0
  %807 = vmatprep.mubr.f32.mxu0 0.0
  %808 = vmatmul.mubr.f32.gmra.mxu0 %v696
  %v809 = vpop.f32.mrf.mxu0
  %v810 = vadd.f32 0.0, %v809
  %v811 = vpop.f32.mrf.mxu0
  %812 = vmatprep.mubr.f32.mxu0 0.0
  %813 = vmatmul.mubr.f32.gmra.mxu0 %v699
  %v814 = vpop.f32.mrf.mxu0
  %v815 = vadd.f32 0.0, %v814
  %v816 = vpop.f32.mrf.mxu0
  %817 = vmatprep.mubr.f32.mxu0 0.0
  %818 = vmatmul.mubr.f32.gmra.mxu0 %v702
  %v819 = vpop.f32.mrf.mxu0
  %v820 = vadd.f32 0.0, %v819
  %v821 = vpop.f32.mrf.mxu0
  %822 = vmatprep.mubr.f32.mxu0 0.0
  %823 = vmatmul.mubr.f32.gmra.mxu0 %v705
  %v824 = vpop.f32.mrf.mxu0
  %v825 = vadd.f32 0.0, %v824
  %v826 = vpop.f32.mrf.mxu0
  %827 = vmatprep.mubr.f32.mxu0 0.0
  %828 = vmatmul.mubr.f32.gmra.mxu0 %v708
  %v829 = vpop.f32.mrf.mxu0
  %v830 = vadd.f32 0.0, %v829
  %v831 = vpop.f32.mrf.mxu0
  %832 = vmatprep.mubr.f32.mxu0 0.0
  %833 = vmatmul.mubr.f32.gmra.mxu0 %v711
  %v834 = vpop.f32.mrf.mxu0
  %v835 = vadd.f32 0.0, %v834
  %v836 = vpop.f32.mrf.mxu0
  %837 = vmatprep.mubr.f32.mxu0 0.0
  %838 = vmatmul.mubr.f32.gmra.mxu0 %v714
  %v839 = vpop.f32.mrf.mxu0
  %v840 = vadd.f32 0.0, %v839
  %v841 = vpop.f32.mrf.mxu0
  %842 = vmatprep.mubr.f32.mxu0 0.0
  %843 = vmatmul.mubr.f32.gmra.mxu0 %v717
  %v844 = vpop.f32.mrf.mxu0
  %v845 = vadd.f32 0.0, %v844
  %v846 = vpop.f32.mrf.mxu0
  %847 = vmatprep.mubr.f32.mxu0 0.0
  %848 = vmatmul.mubr.f32.gmra.mxu0 %v720
  %v849 = vpop.f32.mrf.mxu0
  %v850 = vadd.f32 0.0, %v849
  %v851 = vpop.f32.mrf.mxu0
  %852 = vmatprep.mubr.f32.mxu0 0.0
  %853 = vmatmul.mubr.f32.gmra.mxu0 %v723
  %v854 = vpop.f32.mrf.mxu0
  %v855 = vadd.f32 0.0, %v854
  %v856 = vpop.f32.mrf.mxu0
  %857 = vmatprep.mubr.f32.mxu0 0.0
  %858 = vmatmul.mubr.f32.gmra.mxu0 %v726
  %v859 = vpop.f32.mrf.mxu0
  %v860 = vadd.f32 0.0, %v859
  %v861 = vpop.f32.mrf.mxu0
  %862 = vmatprep.mubr.f32.mxu0 0.0
  %863 = vmatmul.mubr.f32.gmra.mxu0 %v729
  %v864 = vpop.f32.mrf.mxu0
  %v865 = vadd.f32 0.0, %v864
  %v866 = vpop.f32.mrf.mxu0
  %867 = vmatprep.mubr.f32.mxu0 0.0
  %868 = vmatmul.mubr.f32.gmra.mxu0 %v732
  %v869 = vpop.f32.mrf.mxu0
  %v870 = vadd.f32 0.0, %v869
  %v871 = vpop.f32.mrf.mxu0
  %872 = vmatprep.mubr.f32.mxu0 0.0
  %873 = vmatmul.mubr.f32.gmra.mxu0 %v735
  %v874 = vpop.f32.mrf.mxu0
  %v875 = vadd.f32 0.0, %v874
  %v876 = vpop.f32.mrf.mxu0
  %877 = vmatprep.mubr.f32.mxu0 0.0
  %878 = vmatmul.mubr.f32.gmra.mxu0 %v738
  %v879 = vpop.f32.mrf.mxu0
  %v880 = vadd.f32 0.0, %v879
  %v881 = vpop.f32.mrf.mxu0
  %882 = vmatprep.mubr.f32.mxu0 0.0
  %883 = vmatmul.mubr.f32.gmra.mxu0 %v741
  %v884 = vpop.f32.mrf.mxu0
  %v885 = vadd.f32 0.0, %v884
  %v886 = vpop.f32.mrf.mxu0
  %887 = vdwg.mxu0
  %s888 = scalar_lea.vmem %s3, 256
  %889 = vst.msk [vmem:[%s888] sm:$0xff] %vm232, %v810
  %890 = vst.msk [vmem:[%s888 + $0x8] sm:$0xff] %vm232, %v815
  %891 = vst.msk [vmem:[%s888 + $0x10] sm:$0xff] %vm232, %v820
  %892 = vst.msk [vmem:[%s888 + $0x18] sm:$0xff] %vm232, %v825
  %893 = vst.msk [vmem:[%s888 + $0x20] sm:$0xff] %vm232, %v830
  %894 = vst.msk [vmem:[%s888 + $0x28] sm:$0xff] %vm232, %v835
  %895 = vst.msk [vmem:[%s888 + $0x30] sm:$0xff] %vm232, %v840
  %896 = vst.msk [vmem:[%s888 + $0x38] sm:$0xff] %vm232, %v845
  %897 = vst.msk [vmem:[%s888 + $0x40] sm:$0xff] %vm232, %v850
  %898 = vst.msk [vmem:[%s888 + $0x48] sm:$0xff] %vm232, %v855
  %899 = vst.msk [vmem:[%s888 + $0x50] sm:$0xff] %vm232, %v860
  %900 = vst.msk [vmem:[%s888 + $0x58] sm:$0xff] %vm232, %v865
  %901 = vst.msk [vmem:[%s888 + $0x60] sm:$0xff] %vm232, %v870
  %902 = vst.msk [vmem:[%s888 + $0x68] sm:$0xff] %vm232, %v875
  %903 = vst.msk [vmem:[%s888 + $0x70] sm:$0xff] %vm232, %v880
  %904 = vst.msk [vmem:[%s888 + $0x78] sm:$0xff] %vm232, %v885
  %v905 = vsel %vm232, %v810, 0.0
  %v906 = vsel %vm232, %v815, 0.0
  %v907 = vadd.f32 %v905, %v906
  %v908 = vsel %vm232, %v820, 0.0
  %v909 = vadd.f32 %v907, %v908
  %v910 = vsel %vm232, %v825, 0.0
  %v911 = vadd.f32 %v909, %v910
  %v912 = vsel %vm232, %v830, 0.0
  %v913 = vadd.f32 %v911, %v912
  %v914 = vsel %vm232, %v835, 0.0
  %v915 = vadd.f32 %v913, %v914
  %v916 = vsel %vm232, %v840, 0.0
  %v917 = vadd.f32 %v915, %v916
  %v918 = vsel %vm232, %v845, 0.0
  %v919 = vadd.f32 %v917, %v918
  %v920 = vsel %vm232, %v850, 0.0
  %v921 = vadd.f32 %v919, %v920
  %v922 = vsel %vm232, %v855, 0.0
  %v923 = vadd.f32 %v921, %v922
  %v924 = vsel %vm232, %v860, 0.0
  %v925 = vadd.f32 %v923, %v924
  %v926 = vsel %vm232, %v865, 0.0
  %v927 = vadd.f32 %v925, %v926
  %v928 = vsel %vm232, %v870, 0.0
  %v929 = vadd.f32 %v927, %v928
  %v930 = vsel %vm232, %v875, 0.0
  %v931 = vadd.f32 %v929, %v930
  %v932 = vsel %vm232, %v880, 0.0
  %v933 = vadd.f32 %v931, %v932
  %v934 = vsel %vm232, %v885, 0.0
  %v935 = vadd.f32 %v933, %v934
  %v936 = vrot.slane %v935, 4
  %v937 = vadd.f32 %v935, %v936
  %v938 = vrot.slane %v937, 2
  %v939 = vadd.f32 %v937, %v938
  %v940 = vrot.slane %v939, 1
  %v941 = vadd.f32 %v939, %v940
  %v942 = vadd.f32 %v614, %v941
  %v943 = vmul.f32 %v810, %v810
  %v944 = vmul.f32 %v815, %v815
  %v945 = vmul.f32 %v820, %v820
  %v946 = vmul.f32 %v825, %v825
  %v947 = vmul.f32 %v830, %v830
  %v948 = vmul.f32 %v835, %v835
  %v949 = vmul.f32 %v840, %v840
  %v950 = vmul.f32 %v845, %v845
  %v951 = vmul.f32 %v850, %v850
  %v952 = vmul.f32 %v855, %v855
  %v953 = vmul.f32 %v860, %v860
  %v954 = vmul.f32 %v865, %v865
  %v955 = vmul.f32 %v870, %v870
  %v956 = vmul.f32 %v875, %v875
  %v957 = vmul.f32 %v880, %v880
  %v958 = vmul.f32 %v885, %v885
  %v959 = vsel %vm232, %v943, 0.0
  %v960 = vsel %vm232, %v944, 0.0
  %v961 = vadd.f32 %v959, %v960
  %v962 = vsel %vm232, %v945, 0.0
  %v963 = vadd.f32 %v961, %v962
  %v964 = vsel %vm232, %v946, 0.0
  %v965 = vadd.f32 %v963, %v964
  %v966 = vsel %vm232, %v947, 0.0
  %v967 = vadd.f32 %v965, %v966
  %v968 = vsel %vm232, %v948, 0.0
  %v969 = vadd.f32 %v967, %v968
  %v970 = vsel %vm232, %v949, 0.0
  %v971 = vadd.f32 %v969, %v970
  %v972 = vsel %vm232, %v950, 0.0
  %v973 = vadd.f32 %v971, %v972
  %v974 = vsel %vm232, %v951, 0.0
  %v975 = vadd.f32 %v973, %v974
  %v976 = vsel %vm232, %v952, 0.0
  %v977 = vadd.f32 %v975, %v976
  %v978 = vsel %vm232, %v953, 0.0
  %v979 = vadd.f32 %v977, %v978
  %v980 = vsel %vm232, %v954, 0.0
  %v981 = vadd.f32 %v979, %v980
  %v982 = vsel %vm232, %v955, 0.0
  %v983 = vadd.f32 %v981, %v982
  %v984 = vsel %vm232, %v956, 0.0
  %v985 = vadd.f32 %v983, %v984
  %v986 = vsel %vm232, %v957, 0.0
  %v987 = vadd.f32 %v985, %v986
  %v988 = vsel %vm232, %v958, 0.0
  %v989 = vadd.f32 %v987, %v988
  %v990 = vrot.slane %v989, 4
  %v991 = vadd.f32 %v989, %v990
  %v992 = vrot.slane %v991, 2
  %v993 = vadd.f32 %v991, %v992
  %v994 = vrot.slane %v993, 1
  %v995 = vadd.f32 %v993, %v994
  %v996 = vadd.f32 %v668, %v995
  %s997 = scalar_lea.vmem %s0, 384
  %v998 = vld [vmem:[%s997] sm:$0xff]
  %v999 = vld [vmem:[%s997 + $0x8] sm:$0xff]
  %v1000 = vld [vmem:[%s997 + $0x10] sm:$0xff]
  %v1001 = vld [vmem:[%s997 + $0x18] sm:$0xff]
  %v1002 = vld [vmem:[%s997 + $0x20] sm:$0xff]
  %v1003 = vld [vmem:[%s997 + $0x28] sm:$0xff]
  %v1004 = vld [vmem:[%s997 + $0x30] sm:$0xff]
  %v1005 = vld [vmem:[%s997 + $0x38] sm:$0xff]
  %v1006 = vld [vmem:[%s997 + $0x40] sm:$0xff]
  %v1007 = vld [vmem:[%s997 + $0x48] sm:$0xff]
  %v1008 = vld [vmem:[%s997 + $0x50] sm:$0xff]
  %v1009 = vld [vmem:[%s997 + $0x58] sm:$0xff]
  %v1010 = vld [vmem:[%s997 + $0x60] sm:$0xff]
  %v1011 = vld [vmem:[%s997 + $0x68] sm:$0xff]
  %v1012 = vld [vmem:[%s997 + $0x70] sm:$0xff]
  %v1013 = vld [vmem:[%s997 + $0x78] sm:$0xff]
  %s1014 = scalar_lea.vmem %s1, 192
  %v1015 = vld [vmem:[%s1014] sm:$0xff]
  %v1016 = vld [vmem:[%s1014 + $0x8] sm:$0xff]
  %v1017 = vld [vmem:[%s1014 + $0x10] sm:$0xff]
  %v1018 = vld [vmem:[%s1014 + $0x18] sm:$0xff]
  %v1019 = vld [vmem:[%s1014 + $0x20] sm:$0xff]
  %v1020 = vld [vmem:[%s1014 + $0x28] sm:$0xff]
  %v1021 = vld [vmem:[%s1014 + $0x30] sm:$0xff]
  %v1022 = vld [vmem:[%s1014 + $0x38] sm:$0xff]
  %v1024 = vsel %vm38, %v998, 0
  %v1027 = vsel %vm38, %v999, 0
  %v1030 = vsel %vm38, %v1000, 0
  %v1033 = vsel %vm38, %v1001, 0
  %v1036 = vsel %vm38, %v1002, 0
  %v1039 = vsel %vm38, %v1003, 0
  %v1042 = vsel %vm38, %v1004, 0
  %v1045 = vsel %vm38, %v1005, 0
  %v1048 = vsel %vm38, %v1006, 0
  %v1051 = vsel %vm38, %v1007, 0
  %v1054 = vsel %vm38, %v1008, 0
  %v1057 = vsel %vm38, %v1009, 0
  %v1060 = vsel %vm38, %v1010, 0
  %v1063 = vsel %vm38, %v1011, 0
  %v1066 = vsel %vm38, %v1012, 0
  %v1069 = vsel %vm38, %v1013, 0
  %1071 = vmatprep.subr.mxu0 0.0
  %1072 = vmatpush1.msra.mxu0 0.0
  %1073 = vmatprep.subr.mxu0 0.0
  %1074 = vmatpush1.msra.mxu0 0.0
  %1075 = vmatprep.subr.mxu0 0.0
  %1076 = vmatpush1.msra.mxu0 0.0
  %1077 = vmatprep.subr.mxu0 0.0
  %1078 = vmatpush1.msra.mxu0 0.0
  %1079 = vmatprep.subr.mxu0 0.0
  %1080 = vmatpush1.msra.mxu0 0.0
  %1081 = vmatprep.subr.mxu0 0.0
  %1082 = vmatpush1.msra.mxu0 0.0
  %1083 = vmatprep.subr.mxu0 0.0
  %1084 = vmatpush1.msra.mxu0 0.0
  %1085 = vmatprep.subr.mxu0 0.0
  %1086 = vmatpush1.msra.mxu0 0.0
  %1087 = vmatprep.subr.mxu0 0.0
  %1088 = vmatpush1.msra.mxu0 %v1022
  %1089 = vmatprep.subr.mxu0 0.0
  %1090 = vmatpush1.msra.mxu0 %v1021
  %1091 = vmatprep.subr.mxu0 0.0
  %1092 = vmatpush1.msra.mxu0 %v1020
  %1093 = vmatprep.subr.mxu0 0.0
  %1094 = vmatpush1.msra.mxu0 %v1019
  %1095 = vmatprep.subr.mxu0 0.0
  %1096 = vmatpush1.msra.mxu0 %v1018
  %1097 = vmatprep.subr.mxu0 0.0
  %1098 = vmatpush1.msra.mxu0 %v1017
  %1099 = vmatprep.subr.mxu0 0.0
  %1100 = vmatpush1.msra.mxu0 %v1016
  %1101 = vmatprep.subr.mxu0 0.0
  %1102 = vmatpush1.msra.mxu0 %v1015
  %1103 = vmatprep.subr.mxu0 0.0
  %1104 = vmatpush2.msra.mxu0 0.0
  %1105 = vmatprep.subr.mxu0 0.0
  %1106 = vmatpush2.msra.mxu0 0.0
  %1107 = vmatprep.subr.mxu0 0.0
  %1108 = vmatpush2.msra.mxu0 0.0
  %1109 = vmatprep.subr.mxu0 0.0
  %1110 = vmatpush2.msra.mxu0 0.0
  %1111 = vmatprep.subr.mxu0 0.0
  %1112 = vmatpush2.msra.mxu0 0.0
  %1113 = vmatprep.subr.mxu0 0.0
  %1114 = vmatpush2.msra.mxu0 0.0
  %1115 = vmatprep.subr.mxu0 0.0
  %1116 = vmatpush2.msra.mxu0 0.0
  %1117 = vmatprep.subr.mxu0 0.0
  %1118 = vmatpush2.msra.mxu0 0.0
  %1119 = vmatprep.subr.mxu0 0.0
  %1120 = vmatpush2.msra.mxu0 0.0
  %1121 = vmatprep.subr.mxu0 0.0
  %1122 = vmatpush2.msra.mxu0 0.0
  %1123 = vmatprep.subr.mxu0 0.0
  %1124 = vmatpush2.msra.mxu0 0.0
  %1125 = vmatprep.subr.mxu0 0.0
  %1126 = vmatpush2.msra.mxu0 0.0
  %1127 = vmatprep.subr.mxu0 0.0
  %1128 = vmatpush2.msra.mxu0 0.0
  %1129 = vmatprep.subr.mxu0 0.0
  %1130 = vmatpush2.msra.mxu0 0.0
  %1131 = vmatprep.subr.mxu0 0.0
  %1132 = vmatpush2.msra.mxu0 0.0
  %1133 = vmatprep.subr.mxu0 0.0
  %1134 = vmatpush2.msra.mxu0 0.0
  %1135 = vmatprep.mubr.f32.mxu0 0.0
  %1136 = vmatmul.mubr.f32.gmra.mxu0 %v1024
  %v1137 = vpop.f32.mrf.mxu0
  %v1138 = vadd.f32 0.0, %v1137
  %v1139 = vpop.f32.mrf.mxu0
  %1140 = vmatprep.mubr.f32.mxu0 0.0
  %1141 = vmatmul.mubr.f32.gmra.mxu0 %v1027
  %v1142 = vpop.f32.mrf.mxu0
  %v1143 = vadd.f32 0.0, %v1142
  %v1144 = vpop.f32.mrf.mxu0
  %1145 = vmatprep.mubr.f32.mxu0 0.0
  %1146 = vmatmul.mubr.f32.gmra.mxu0 %v1030
  %v1147 = vpop.f32.mrf.mxu0
  %v1148 = vadd.f32 0.0, %v1147
  %v1149 = vpop.f32.mrf.mxu0
  %1150 = vmatprep.mubr.f32.mxu0 0.0
  %1151 = vmatmul.mubr.f32.gmra.mxu0 %v1033
  %v1152 = vpop.f32.mrf.mxu0
  %v1153 = vadd.f32 0.0, %v1152
  %v1154 = vpop.f32.mrf.mxu0
  %1155 = vmatprep.mubr.f32.mxu0 0.0
  %1156 = vmatmul.mubr.f32.gmra.mxu0 %v1036
  %v1157 = vpop.f32.mrf.mxu0
  %v1158 = vadd.f32 0.0, %v1157
  %v1159 = vpop.f32.mrf.mxu0
  %1160 = vmatprep.mubr.f32.mxu0 0.0
  %1161 = vmatmul.mubr.f32.gmra.mxu0 %v1039
  %v1162 = vpop.f32.mrf.mxu0
  %v1163 = vadd.f32 0.0, %v1162
  %v1164 = vpop.f32.mrf.mxu0
  %1165 = vmatprep.mubr.f32.mxu0 0.0
  %1166 = vmatmul.mubr.f32.gmra.mxu0 %v1042
  %v1167 = vpop.f32.mrf.mxu0
  %v1168 = vadd.f32 0.0, %v1167
  %v1169 = vpop.f32.mrf.mxu0
  %1170 = vmatprep.mubr.f32.mxu0 0.0
  %1171 = vmatmul.mubr.f32.gmra.mxu0 %v1045
  %v1172 = vpop.f32.mrf.mxu0
  %v1173 = vadd.f32 0.0, %v1172
  %v1174 = vpop.f32.mrf.mxu0
  %1175 = vmatprep.mubr.f32.mxu0 0.0
  %1176 = vmatmul.mubr.f32.gmra.mxu0 %v1048
  %v1177 = vpop.f32.mrf.mxu0
  %v1178 = vadd.f32 0.0, %v1177
  %v1179 = vpop.f32.mrf.mxu0
  %1180 = vmatprep.mubr.f32.mxu0 0.0
  %1181 = vmatmul.mubr.f32.gmra.mxu0 %v1051
  %v1182 = vpop.f32.mrf.mxu0
  %v1183 = vadd.f32 0.0, %v1182
  %v1184 = vpop.f32.mrf.mxu0
  %1185 = vmatprep.mubr.f32.mxu0 0.0
  %1186 = vmatmul.mubr.f32.gmra.mxu0 %v1054
  %v1187 = vpop.f32.mrf.mxu0
  %v1188 = vadd.f32 0.0, %v1187
  %v1189 = vpop.f32.mrf.mxu0
  %1190 = vmatprep.mubr.f32.mxu0 0.0
  %1191 = vmatmul.mubr.f32.gmra.mxu0 %v1057
  %v1192 = vpop.f32.mrf.mxu0
  %v1193 = vadd.f32 0.0, %v1192
  %v1194 = vpop.f32.mrf.mxu0
  %1195 = vmatprep.mubr.f32.mxu0 0.0
  %1196 = vmatmul.mubr.f32.gmra.mxu0 %v1060
  %v1197 = vpop.f32.mrf.mxu0
  %v1198 = vadd.f32 0.0, %v1197
  %v1199 = vpop.f32.mrf.mxu0
  %1200 = vmatprep.mubr.f32.mxu0 0.0
  %1201 = vmatmul.mubr.f32.gmra.mxu0 %v1063
  %v1202 = vpop.f32.mrf.mxu0
  %v1203 = vadd.f32 0.0, %v1202
  %v1204 = vpop.f32.mrf.mxu0
  %1205 = vmatprep.mubr.f32.mxu0 0.0
  %1206 = vmatmul.mubr.f32.gmra.mxu0 %v1066
  %v1207 = vpop.f32.mrf.mxu0
  %v1208 = vadd.f32 0.0, %v1207
  %v1209 = vpop.f32.mrf.mxu0
  %1210 = vmatprep.mubr.f32.mxu0 0.0
  %1211 = vmatmul.mubr.f32.gmra.mxu0 %v1069
  %v1212 = vpop.f32.mrf.mxu0
  %v1213 = vadd.f32 0.0, %v1212
  %v1214 = vpop.f32.mrf.mxu0
  %1215 = vdwg.mxu0
  %s1216 = scalar_lea.vmem %s3, 384
  %1217 = vst.msk [vmem:[%s1216] sm:$0xff] %vm232, %v1138
  %1218 = vst.msk [vmem:[%s1216 + $0x8] sm:$0xff] %vm232, %v1143
  %1219 = vst.msk [vmem:[%s1216 + $0x10] sm:$0xff] %vm232, %v1148
  %1220 = vst.msk [vmem:[%s1216 + $0x18] sm:$0xff] %vm232, %v1153
  %1221 = vst.msk [vmem:[%s1216 + $0x20] sm:$0xff] %vm232, %v1158
  %1222 = vst.msk [vmem:[%s1216 + $0x28] sm:$0xff] %vm232, %v1163
  %1223 = vst.msk [vmem:[%s1216 + $0x30] sm:$0xff] %vm232, %v1168
  %1224 = vst.msk [vmem:[%s1216 + $0x38] sm:$0xff] %vm232, %v1173
  %1225 = vst.msk [vmem:[%s1216 + $0x40] sm:$0xff] %vm232, %v1178
  %1226 = vst.msk [vmem:[%s1216 + $0x48] sm:$0xff] %vm232, %v1183
  %1227 = vst.msk [vmem:[%s1216 + $0x50] sm:$0xff] %vm232, %v1188
  %1228 = vst.msk [vmem:[%s1216 + $0x58] sm:$0xff] %vm232, %v1193
  %1229 = vst.msk [vmem:[%s1216 + $0x60] sm:$0xff] %vm232, %v1198
  %1230 = vst.msk [vmem:[%s1216 + $0x68] sm:$0xff] %vm232, %v1203
  %1231 = vst.msk [vmem:[%s1216 + $0x70] sm:$0xff] %vm232, %v1208
  %1232 = vst.msk [vmem:[%s1216 + $0x78] sm:$0xff] %vm232, %v1213
  %v1233 = vsel %vm232, %v1138, 0.0
  %v1234 = vsel %vm232, %v1143, 0.0
  %v1235 = vadd.f32 %v1233, %v1234
  %v1236 = vsel %vm232, %v1148, 0.0
  %v1237 = vadd.f32 %v1235, %v1236
  %v1238 = vsel %vm232, %v1153, 0.0
  %v1239 = vadd.f32 %v1237, %v1238
  %v1240 = vsel %vm232, %v1158, 0.0
  %v1241 = vadd.f32 %v1239, %v1240
  %v1242 = vsel %vm232, %v1163, 0.0
  %v1243 = vadd.f32 %v1241, %v1242
  %v1244 = vsel %vm232, %v1168, 0.0
  %v1245 = vadd.f32 %v1243, %v1244
  %v1246 = vsel %vm232, %v1173, 0.0
  %v1247 = vadd.f32 %v1245, %v1246
  %v1248 = vsel %vm232, %v1178, 0.0
  %v1249 = vadd.f32 %v1247, %v1248
  %v1250 = vsel %vm232, %v1183, 0.0
  %v1251 = vadd.f32 %v1249, %v1250
  %v1252 = vsel %vm232, %v1188, 0.0
  %v1253 = vadd.f32 %v1251, %v1252
  %v1254 = vsel %vm232, %v1193, 0.0
  %v1255 = vadd.f32 %v1253, %v1254
  %v1256 = vsel %vm232, %v1198, 0.0
  %v1257 = vadd.f32 %v1255, %v1256
  %v1258 = vsel %vm232, %v1203, 0.0
  %v1259 = vadd.f32 %v1257, %v1258
  %v1260 = vsel %vm232, %v1208, 0.0
  %v1261 = vadd.f32 %v1259, %v1260
  %v1262 = vsel %vm232, %v1213, 0.0
  %v1263 = vadd.f32 %v1261, %v1262
  %v1264 = vrot.slane %v1263, 4
  %v1265 = vadd.f32 %v1263, %v1264
  %v1266 = vrot.slane %v1265, 2
  %v1267 = vadd.f32 %v1265, %v1266
  %v1268 = vrot.slane %v1267, 1
  %v1269 = vadd.f32 %v1267, %v1268
  %v1270 = vadd.f32 %v942, %v1269
  %v1271 = vmul.f32 %v1138, %v1138
  %v1272 = vmul.f32 %v1143, %v1143
  %v1273 = vmul.f32 %v1148, %v1148
  %v1274 = vmul.f32 %v1153, %v1153
  %v1275 = vmul.f32 %v1158, %v1158
  %v1276 = vmul.f32 %v1163, %v1163
  %v1277 = vmul.f32 %v1168, %v1168
  %v1278 = vmul.f32 %v1173, %v1173
  %v1279 = vmul.f32 %v1178, %v1178
  %v1280 = vmul.f32 %v1183, %v1183
  %v1281 = vmul.f32 %v1188, %v1188
  %v1282 = vmul.f32 %v1193, %v1193
  %v1283 = vmul.f32 %v1198, %v1198
  %v1284 = vmul.f32 %v1203, %v1203
  %v1285 = vmul.f32 %v1208, %v1208
  %v1286 = vmul.f32 %v1213, %v1213
  %v1287 = vsel %vm232, %v1271, 0.0
  %v1288 = vsel %vm232, %v1272, 0.0
  %v1289 = vadd.f32 %v1287, %v1288
  %v1290 = vsel %vm232, %v1273, 0.0
  %v1291 = vadd.f32 %v1289, %v1290
  %v1292 = vsel %vm232, %v1274, 0.0
  %v1293 = vadd.f32 %v1291, %v1292
  %v1294 = vsel %vm232, %v1275, 0.0
  %v1295 = vadd.f32 %v1293, %v1294
  %v1296 = vsel %vm232, %v1276, 0.0
  %v1297 = vadd.f32 %v1295, %v1296
  %v1298 = vsel %vm232, %v1277, 0.0
  %v1299 = vadd.f32 %v1297, %v1298
  %v1300 = vsel %vm232, %v1278, 0.0
  %v1301 = vadd.f32 %v1299, %v1300
  %v1302 = vsel %vm232, %v1279, 0.0
  %v1303 = vadd.f32 %v1301, %v1302
  %v1304 = vsel %vm232, %v1280, 0.0
  %v1305 = vadd.f32 %v1303, %v1304
  %v1306 = vsel %vm232, %v1281, 0.0
  %v1307 = vadd.f32 %v1305, %v1306
  %v1308 = vsel %vm232, %v1282, 0.0
  %v1309 = vadd.f32 %v1307, %v1308
  %v1310 = vsel %vm232, %v1283, 0.0
  %v1311 = vadd.f32 %v1309, %v1310
  %v1312 = vsel %vm232, %v1284, 0.0
  %v1313 = vadd.f32 %v1311, %v1312
  %v1314 = vsel %vm232, %v1285, 0.0
  %v1315 = vadd.f32 %v1313, %v1314
  %v1316 = vsel %vm232, %v1286, 0.0
  %v1317 = vadd.f32 %v1315, %v1316
  %v1318 = vrot.slane %v1317, 4
  %v1319 = vadd.f32 %v1317, %v1318
  %v1320 = vrot.slane %v1319, 2
  %v1321 = vadd.f32 %v1319, %v1320
  %v1322 = vrot.slane %v1321, 1
  %v1323 = vadd.f32 %v1321, %v1322
  %v1324 = vadd.f32 %v996, %v1323
  %v1325 = vmul.f32 %v1270, 0.001953125
  %v1326 = vmul.f32 %v1324, 0.001953125
  %v1327 = vmul.f32 %v1325, %v1325
  %v1328 = vsub.f32 %v1326, %v1327
  %v1329 = vmax.f32 %v1328, 0.0
  %v1330 = vld [vmem:[%s2] sm:$0x1]
  %v1331 = vadd.f32 %v1329, 1e-05
  %v1332 = vrsqrt.pop %v1331
  %v1333 = vmul.f32 %v1330, %v1332
  %v1334 = vld [vmem:[%s2 + $0x1] sm:$0x1]
  %v1335 = vmul.f32 %v1325, %v1333
  %v1336 = vsub.f32 %v1334, %v1335
  %v1337 = vld [vmem:[%s3] sm:$0xff]
  %v1338 = vld [vmem:[%s3 + $0x8] sm:$0xff]
  %v1339 = vld [vmem:[%s3 + $0x10] sm:$0xff]
  %v1340 = vld [vmem:[%s3 + $0x18] sm:$0xff]
  %v1341 = vld [vmem:[%s3 + $0x20] sm:$0xff]
  %v1342 = vld [vmem:[%s3 + $0x28] sm:$0xff]
  %v1343 = vld [vmem:[%s3 + $0x30] sm:$0xff]
  %v1344 = vld [vmem:[%s3 + $0x38] sm:$0xff]
  %v1345 = vld [vmem:[%s3 + $0x40] sm:$0xff]
  %v1346 = vld [vmem:[%s3 + $0x48] sm:$0xff]
  %v1347 = vld [vmem:[%s3 + $0x50] sm:$0xff]
  %v1348 = vld [vmem:[%s3 + $0x58] sm:$0xff]
  %v1349 = vld [vmem:[%s3 + $0x60] sm:$0xff]
  %v1350 = vld [vmem:[%s3 + $0x68] sm:$0xff]
  %v1351 = vld [vmem:[%s3 + $0x70] sm:$0xff]
  %v1352 = vld [vmem:[%s3 + $0x78] sm:$0xff]
  %v1353 = vlaneseq
  %v1354 = vshrl.u32 %v1353, 7
  %v1355 = vsub.s32 0, %v1354
  %v1356 = vrot.slane %v1333, %v1355
  %v1357 = vmul.f32 %v1337, %v1356
  %v1358 = vmul.f32 %v1338, %v1356
  %v1359 = vmul.f32 %v1339, %v1356
  %v1360 = vmul.f32 %v1340, %v1356
  %v1361 = vmul.f32 %v1341, %v1356
  %v1362 = vmul.f32 %v1342, %v1356
  %v1363 = vmul.f32 %v1343, %v1356
  %v1364 = vmul.f32 %v1344, %v1356
  %v1365 = vmul.f32 %v1345, %v1356
  %v1366 = vmul.f32 %v1346, %v1356
  %v1367 = vmul.f32 %v1347, %v1356
  %v1368 = vmul.f32 %v1348, %v1356
  %v1369 = vmul.f32 %v1349, %v1356
  %v1370 = vmul.f32 %v1350, %v1356
  %v1371 = vmul.f32 %v1351, %v1356
  %v1372 = vmul.f32 %v1352, %v1356
  %v1373 = vlaneseq
  %v1374 = vshrl.u32 %v1373, 7
  %v1375 = vsub.s32 0, %v1374
  %v1376 = vrot.slane %v1336, %v1375
  %v1377 = vadd.f32 %v1357, %v1376
  %v1378 = vadd.f32 %v1358, %v1376
  %v1379 = vadd.f32 %v1359, %v1376
  %v1380 = vadd.f32 %v1360, %v1376
  %v1381 = vadd.f32 %v1361, %v1376
  %v1382 = vadd.f32 %v1362, %v1376
  %v1383 = vadd.f32 %v1363, %v1376
  %v1384 = vadd.f32 %v1364, %v1376
  %v1385 = vadd.f32 %v1365, %v1376
  %v1386 = vadd.f32 %v1366, %v1376
  %v1387 = vadd.f32 %v1367, %v1376
  %v1388 = vadd.f32 %v1368, %v1376
  %v1389 = vadd.f32 %v1369, %v1376
  %v1390 = vadd.f32 %v1370, %v1376
  %v1391 = vadd.f32 %v1371, %v1376
  %v1392 = vadd.f32 %v1372, %v1376
  %v1393 = vmax.f32 %v1377, 0.0
  %v1394 = vmax.f32 %v1378, 0.0
  %v1395 = vmax.f32 %v1379, 0.0
  %v1396 = vmax.f32 %v1380, 0.0
  %v1397 = vmax.f32 %v1381, 0.0
  %v1398 = vmax.f32 %v1382, 0.0
  %v1399 = vmax.f32 %v1383, 0.0
  %v1400 = vmax.f32 %v1384, 0.0
  %v1401 = vmax.f32 %v1385, 0.0
  %v1402 = vmax.f32 %v1386, 0.0
  %v1403 = vmax.f32 %v1387, 0.0
  %v1404 = vmax.f32 %v1388, 0.0
  %v1405 = vmax.f32 %v1389, 0.0
  %v1406 = vmax.f32 %v1390, 0.0
  %v1407 = vmax.f32 %v1391, 0.0
  %v1408 = vmax.f32 %v1392, 0.0
  %1409 = vst.msk [vmem:[%s3] sm:$0xff] %vm232, %v1393
  %1410 = vst.msk [vmem:[%s3 + $0x8] sm:$0xff] %vm232, %v1394
  %1411 = vst.msk [vmem:[%s3 + $0x10] sm:$0xff] %vm232, %v1395
  %1412 = vst.msk [vmem:[%s3 + $0x18] sm:$0xff] %vm232, %v1396
  %1413 = vst.msk [vmem:[%s3 + $0x20] sm:$0xff] %vm232, %v1397
  %1414 = vst.msk [vmem:[%s3 + $0x28] sm:$0xff] %vm232, %v1398
  %1415 = vst.msk [vmem:[%s3 + $0x30] sm:$0xff] %vm232, %v1399
  %1416 = vst.msk [vmem:[%s3 + $0x38] sm:$0xff] %vm232, %v1400
  %1417 = vst.msk [vmem:[%s3 + $0x40] sm:$0xff] %vm232, %v1401
  %1418 = vst.msk [vmem:[%s3 + $0x48] sm:$0xff] %vm232, %v1402
  %1419 = vst.msk [vmem:[%s3 + $0x50] sm:$0xff] %vm232, %v1403
  %1420 = vst.msk [vmem:[%s3 + $0x58] sm:$0xff] %vm232, %v1404
  %1421 = vst.msk [vmem:[%s3 + $0x60] sm:$0xff] %vm232, %v1405
  %1422 = vst.msk [vmem:[%s3 + $0x68] sm:$0xff] %vm232, %v1406
  %1423 = vst.msk [vmem:[%s3 + $0x70] sm:$0xff] %vm232, %v1407
  %1424 = vst.msk [vmem:[%s3 + $0x78] sm:$0xff] %vm232, %v1408
  %v1425 = vld [vmem:[%s560] sm:$0xff]
  %v1426 = vld [vmem:[%s560 + $0x8] sm:$0xff]
  %v1427 = vld [vmem:[%s560 + $0x10] sm:$0xff]
  %v1428 = vld [vmem:[%s560 + $0x18] sm:$0xff]
  %v1429 = vld [vmem:[%s560 + $0x20] sm:$0xff]
  %v1430 = vld [vmem:[%s560 + $0x28] sm:$0xff]
  %v1431 = vld [vmem:[%s560 + $0x30] sm:$0xff]
  %v1432 = vld [vmem:[%s560 + $0x38] sm:$0xff]
  %v1433 = vld [vmem:[%s560 + $0x40] sm:$0xff]
  %v1434 = vld [vmem:[%s560 + $0x48] sm:$0xff]
  %v1435 = vld [vmem:[%s560 + $0x50] sm:$0xff]
  %v1436 = vld [vmem:[%s560 + $0x58] sm:$0xff]
  %v1437 = vld [vmem:[%s560 + $0x60] sm:$0xff]
  %v1438 = vld [vmem:[%s560 + $0x68] sm:$0xff]
  %v1439 = vld [vmem:[%s560 + $0x70] sm:$0xff]
  %v1440 = vld [vmem:[%s560 + $0x78] sm:$0xff]
  %v1441 = vmul.f32 %v1425, %v1356
  %v1442 = vmul.f32 %v1426, %v1356
  %v1443 = vmul.f32 %v1427, %v1356
  %v1444 = vmul.f32 %v1428, %v1356
  %v1445 = vmul.f32 %v1429, %v1356
  %v1446 = vmul.f32 %v1430, %v1356
  %v1447 = vmul.f32 %v1431, %v1356
  %v1448 = vmul.f32 %v1432, %v1356
  %v1449 = vmul.f32 %v1433, %v1356
  %v1450 = vmul.f32 %v1434, %v1356
  %v1451 = vmul.f32 %v1435, %v1356
  %v1452 = vmul.f32 %v1436, %v1356
  %v1453 = vmul.f32 %v1437, %v1356
  %v1454 = vmul.f32 %v1438, %v1356
  %v1455 = vmul.f32 %v1439, %v1356
  %v1456 = vmul.f32 %v1440, %v1356
  %v1457 = vadd.f32 %v1441, %v1376
  %v1458 = vadd.f32 %v1442, %v1376
  %v1459 = vadd.f32 %v1443, %v1376
  %v1460 = vadd.f32 %v1444, %v1376
  %v1461 = vadd.f32 %v1445, %v1376
  %v1462 = vadd.f32 %v1446, %v1376
  %v1463 = vadd.f32 %v1447, %v1376
  %v1464 = vadd.f32 %v1448, %v1376
  %v1465 = vadd.f32 %v1449, %v1376
  %v1466 = vadd.f32 %v1450, %v1376
  %v1467 = vadd.f32 %v1451, %v1376
  %v1468 = vadd.f32 %v1452, %v1376
  %v1469 = vadd.f32 %v1453, %v1376
  %v1470 = vadd.f32 %v1454, %v1376
  %v1471 = vadd.f32 %v1455, %v1376
  %v1472 = vadd.f32 %v1456, %v1376
  %v1473 = vmax.f32 %v1457, 0.0
  %v1474 = vmax.f32 %v1458, 0.0
  %v1475 = vmax.f32 %v1459, 0.0
  %v1476 = vmax.f32 %v1460, 0.0
  %v1477 = vmax.f32 %v1461, 0.0
  %v1478 = vmax.f32 %v1462, 0.0
  %v1479 = vmax.f32 %v1463, 0.0
  %v1480 = vmax.f32 %v1464, 0.0
  %v1481 = vmax.f32 %v1465, 0.0
  %v1482 = vmax.f32 %v1466, 0.0
  %v1483 = vmax.f32 %v1467, 0.0
  %v1484 = vmax.f32 %v1468, 0.0
  %v1485 = vmax.f32 %v1469, 0.0
  %v1486 = vmax.f32 %v1470, 0.0
  %v1487 = vmax.f32 %v1471, 0.0
  %v1488 = vmax.f32 %v1472, 0.0
  %1489 = vst.msk [vmem:[%s560] sm:$0xff] %vm232, %v1473
  %1490 = vst.msk [vmem:[%s560 + $0x8] sm:$0xff] %vm232, %v1474
  %1491 = vst.msk [vmem:[%s560 + $0x10] sm:$0xff] %vm232, %v1475
  %1492 = vst.msk [vmem:[%s560 + $0x18] sm:$0xff] %vm232, %v1476
  %1493 = vst.msk [vmem:[%s560 + $0x20] sm:$0xff] %vm232, %v1477
  %1494 = vst.msk [vmem:[%s560 + $0x28] sm:$0xff] %vm232, %v1478
  %1495 = vst.msk [vmem:[%s560 + $0x30] sm:$0xff] %vm232, %v1479
  %1496 = vst.msk [vmem:[%s560 + $0x38] sm:$0xff] %vm232, %v1480
  %1497 = vst.msk [vmem:[%s560 + $0x40] sm:$0xff] %vm232, %v1481
  %1498 = vst.msk [vmem:[%s560 + $0x48] sm:$0xff] %vm232, %v1482
  %1499 = vst.msk [vmem:[%s560 + $0x50] sm:$0xff] %vm232, %v1483
  %1500 = vst.msk [vmem:[%s560 + $0x58] sm:$0xff] %vm232, %v1484
  %1501 = vst.msk [vmem:[%s560 + $0x60] sm:$0xff] %vm232, %v1485
  %1502 = vst.msk [vmem:[%s560 + $0x68] sm:$0xff] %vm232, %v1486
  %1503 = vst.msk [vmem:[%s560 + $0x70] sm:$0xff] %vm232, %v1487
  %1504 = vst.msk [vmem:[%s560 + $0x78] sm:$0xff] %vm232, %v1488
  %v1505 = vld [vmem:[%s888] sm:$0xff]
  %v1506 = vld [vmem:[%s888 + $0x8] sm:$0xff]
  %v1507 = vld [vmem:[%s888 + $0x10] sm:$0xff]
  %v1508 = vld [vmem:[%s888 + $0x18] sm:$0xff]
  %v1509 = vld [vmem:[%s888 + $0x20] sm:$0xff]
  %v1510 = vld [vmem:[%s888 + $0x28] sm:$0xff]
  %v1511 = vld [vmem:[%s888 + $0x30] sm:$0xff]
  %v1512 = vld [vmem:[%s888 + $0x38] sm:$0xff]
  %v1513 = vld [vmem:[%s888 + $0x40] sm:$0xff]
  %v1514 = vld [vmem:[%s888 + $0x48] sm:$0xff]
  %v1515 = vld [vmem:[%s888 + $0x50] sm:$0xff]
  %v1516 = vld [vmem:[%s888 + $0x58] sm:$0xff]
  %v1517 = vld [vmem:[%s888 + $0x60] sm:$0xff]
  %v1518 = vld [vmem:[%s888 + $0x68] sm:$0xff]
  %v1519 = vld [vmem:[%s888 + $0x70] sm:$0xff]
  %v1520 = vld [vmem:[%s888 + $0x78] sm:$0xff]
  %v1521 = vmul.f32 %v1505, %v1356
  %v1522 = vmul.f32 %v1506, %v1356
  %v1523 = vmul.f32 %v1507, %v1356
  %v1524 = vmul.f32 %v1508, %v1356
  %v1525 = vmul.f32 %v1509, %v1356
  %v1526 = vmul.f32 %v1510, %v1356
  %v1527 = vmul.f32 %v1511, %v1356
  %v1528 = vmul.f32 %v1512, %v1356
  %v1529 = vmul.f32 %v1513, %v1356
  %v1530 = vmul.f32 %v1514, %v1356
  %v1531 = vmul.f32 %v1515, %v1356
  %v1532 = vmul.f32 %v1516, %v1356
  %v1533 = vmul.f32 %v1517, %v1356
  %v1534 = vmul.f32 %v1518, %v1356
  %v1535 = vmul.f32 %v1519, %v1356
  %v1536 = vmul.f32 %v1520, %v1356
  %v1537 = vadd.f32 %v1521, %v1376
  %v1538 = vadd.f32 %v1522, %v1376
  %v1539 = vadd.f32 %v1523, %v1376
  %v1540 = vadd.f32 %v1524, %v1376
  %v1541 = vadd.f32 %v1525, %v1376
  %v1542 = vadd.f32 %v1526, %v1376
  %v1543 = vadd.f32 %v1527, %v1376
  %v1544 = vadd.f32 %v1528, %v1376
  %v1545 = vadd.f32 %v1529, %v1376
  %v1546 = vadd.f32 %v1530, %v1376
  %v1547 = vadd.f32 %v1531, %v1376
  %v1548 = vadd.f32 %v1532, %v1376
  %v1549 = vadd.f32 %v1533, %v1376
  %v1550 = vadd.f32 %v1534, %v1376
  %v1551 = vadd.f32 %v1535, %v1376
  %v1552 = vadd.f32 %v1536, %v1376
  %v1553 = vmax.f32 %v1537, 0.0
  %v1554 = vmax.f32 %v1538, 0.0
  %v1555 = vmax.f32 %v1539, 0.0
  %v1556 = vmax.f32 %v1540, 0.0
  %v1557 = vmax.f32 %v1541, 0.0
  %v1558 = vmax.f32 %v1542, 0.0
  %v1559 = vmax.f32 %v1543, 0.0
  %v1560 = vmax.f32 %v1544, 0.0
  %v1561 = vmax.f32 %v1545, 0.0
  %v1562 = vmax.f32 %v1546, 0.0
  %v1563 = vmax.f32 %v1547, 0.0
  %v1564 = vmax.f32 %v1548, 0.0
  %v1565 = vmax.f32 %v1549, 0.0
  %v1566 = vmax.f32 %v1550, 0.0
  %v1567 = vmax.f32 %v1551, 0.0
  %v1568 = vmax.f32 %v1552, 0.0
  %1569 = vst.msk [vmem:[%s888] sm:$0xff] %vm232, %v1553
  %1570 = vst.msk [vmem:[%s888 + $0x8] sm:$0xff] %vm232, %v1554
  %1571 = vst.msk [vmem:[%s888 + $0x10] sm:$0xff] %vm232, %v1555
  %1572 = vst.msk [vmem:[%s888 + $0x18] sm:$0xff] %vm232, %v1556
  %1573 = vst.msk [vmem:[%s888 + $0x20] sm:$0xff] %vm232, %v1557
  %1574 = vst.msk [vmem:[%s888 + $0x28] sm:$0xff] %vm232, %v1558
  %1575 = vst.msk [vmem:[%s888 + $0x30] sm:$0xff] %vm232, %v1559
  %1576 = vst.msk [vmem:[%s888 + $0x38] sm:$0xff] %vm232, %v1560
  %1577 = vst.msk [vmem:[%s888 + $0x40] sm:$0xff] %vm232, %v1561
  %1578 = vst.msk [vmem:[%s888 + $0x48] sm:$0xff] %vm232, %v1562
  %1579 = vst.msk [vmem:[%s888 + $0x50] sm:$0xff] %vm232, %v1563
  %1580 = vst.msk [vmem:[%s888 + $0x58] sm:$0xff] %vm232, %v1564
  %1581 = vst.msk [vmem:[%s888 + $0x60] sm:$0xff] %vm232, %v1565
  %1582 = vst.msk [vmem:[%s888 + $0x68] sm:$0xff] %vm232, %v1566
  %1583 = vst.msk [vmem:[%s888 + $0x70] sm:$0xff] %vm232, %v1567
  %1584 = vst.msk [vmem:[%s888 + $0x78] sm:$0xff] %vm232, %v1568
  %v1585 = vld [vmem:[%s1216] sm:$0xff]
  %v1586 = vld [vmem:[%s1216 + $0x8] sm:$0xff]
  %v1587 = vld [vmem:[%s1216 + $0x10] sm:$0xff]
  %v1588 = vld [vmem:[%s1216 + $0x18] sm:$0xff]
  %v1589 = vld [vmem:[%s1216 + $0x20] sm:$0xff]
  %v1590 = vld [vmem:[%s1216 + $0x28] sm:$0xff]
  %v1591 = vld [vmem:[%s1216 + $0x30] sm:$0xff]
  %v1592 = vld [vmem:[%s1216 + $0x38] sm:$0xff]
  %v1593 = vld [vmem:[%s1216 + $0x40] sm:$0xff]
  %v1594 = vld [vmem:[%s1216 + $0x48] sm:$0xff]
  %v1595 = vld [vmem:[%s1216 + $0x50] sm:$0xff]
  %v1596 = vld [vmem:[%s1216 + $0x58] sm:$0xff]
  %v1597 = vld [vmem:[%s1216 + $0x60] sm:$0xff]
  %v1598 = vld [vmem:[%s1216 + $0x68] sm:$0xff]
  %v1599 = vld [vmem:[%s1216 + $0x70] sm:$0xff]
  %v1600 = vld [vmem:[%s1216 + $0x78] sm:$0xff]
  %v1601 = vmul.f32 %v1585, %v1356
  %v1602 = vmul.f32 %v1586, %v1356
  %v1603 = vmul.f32 %v1587, %v1356
  %v1604 = vmul.f32 %v1588, %v1356
  %v1605 = vmul.f32 %v1589, %v1356
  %v1606 = vmul.f32 %v1590, %v1356
  %v1607 = vmul.f32 %v1591, %v1356
  %v1608 = vmul.f32 %v1592, %v1356
  %v1609 = vmul.f32 %v1593, %v1356
  %v1610 = vmul.f32 %v1594, %v1356
  %v1611 = vmul.f32 %v1595, %v1356
  %v1612 = vmul.f32 %v1596, %v1356
  %v1613 = vmul.f32 %v1597, %v1356
  %v1614 = vmul.f32 %v1598, %v1356
  %v1615 = vmul.f32 %v1599, %v1356
  %v1616 = vmul.f32 %v1600, %v1356
  %v1617 = vadd.f32 %v1601, %v1376
  %v1618 = vadd.f32 %v1602, %v1376
  %v1619 = vadd.f32 %v1603, %v1376
  %v1620 = vadd.f32 %v1604, %v1376
  %v1621 = vadd.f32 %v1605, %v1376
  %v1622 = vadd.f32 %v1606, %v1376
  %v1623 = vadd.f32 %v1607, %v1376
  %v1624 = vadd.f32 %v1608, %v1376
  %v1625 = vadd.f32 %v1609, %v1376
  %v1626 = vadd.f32 %v1610, %v1376
  %v1627 = vadd.f32 %v1611, %v1376
  %v1628 = vadd.f32 %v1612, %v1376
  %v1629 = vadd.f32 %v1613, %v1376
  %v1630 = vadd.f32 %v1614, %v1376
  %v1631 = vadd.f32 %v1615, %v1376
  %v1632 = vadd.f32 %v1616, %v1376
  %v1633 = vmax.f32 %v1617, 0.0
  %v1634 = vmax.f32 %v1618, 0.0
  %v1635 = vmax.f32 %v1619, 0.0
  %v1636 = vmax.f32 %v1620, 0.0
  %v1637 = vmax.f32 %v1621, 0.0
  %v1638 = vmax.f32 %v1622, 0.0
  %v1639 = vmax.f32 %v1623, 0.0
  %v1640 = vmax.f32 %v1624, 0.0
  %v1641 = vmax.f32 %v1625, 0.0
  %v1642 = vmax.f32 %v1626, 0.0
  %v1643 = vmax.f32 %v1627, 0.0
  %v1644 = vmax.f32 %v1628, 0.0
  %v1645 = vmax.f32 %v1629, 0.0
  %v1646 = vmax.f32 %v1630, 0.0
  %v1647 = vmax.f32 %v1631, 0.0
  %v1648 = vmax.f32 %v1632, 0.0
  %1649 = vst.msk [vmem:[%s1216] sm:$0xff] %vm232, %v1633
  %1650 = vst.msk [vmem:[%s1216 + $0x8] sm:$0xff] %vm232, %v1634
  %1651 = vst.msk [vmem:[%s1216 + $0x10] sm:$0xff] %vm232, %v1635
  %1652 = vst.msk [vmem:[%s1216 + $0x18] sm:$0xff] %vm232, %v1636
  %1653 = vst.msk [vmem:[%s1216 + $0x20] sm:$0xff] %vm232, %v1637
  %1654 = vst.msk [vmem:[%s1216 + $0x28] sm:$0xff] %vm232, %v1638
  %1655 = vst.msk [vmem:[%s1216 + $0x30] sm:$0xff] %vm232, %v1639
  %1656 = vst.msk [vmem:[%s1216 + $0x38] sm:$0xff] %vm232, %v1640
  %1657 = vst.msk [vmem:[%s1216 + $0x40] sm:$0xff] %vm232, %v1641
  %1658 = vst.msk [vmem:[%s1216 + $0x48] sm:$0xff] %vm232, %v1642
  %1659 = vst.msk [vmem:[%s1216 + $0x50] sm:$0xff] %vm232, %v1643
  %1660 = vst.msk [vmem:[%s1216 + $0x58] sm:$0xff] %vm232, %v1644
  %1661 = vst.msk [vmem:[%s1216 + $0x60] sm:$0xff] %vm232, %v1645
  %1662 = vst.msk [vmem:[%s1216 + $0x68] sm:$0xff] %vm232, %v1646
  %1663 = vst.msk [vmem:[%s1216 + $0x70] sm:$0xff] %vm232, %v1647
  %1664 = vst.msk [vmem:[%s1216 + $0x78] sm:$0xff] %vm232, %v1648
  // Predicated region
  $region14: #{decoder_forward_pallas.8} parent=0 // pred_check
    _
  $region15: #{decoder_forward_pallas.8} parent=0 // pred_check_branch
    %1666 = sbr.rel (0) target = $region17
  $region16: #{decoder_forward_pallas.8} parent=0 // pred_region
    _
  $region17: #{decoder_forward_pallas.8} parent=0 // pred_fallthru
    _
  // Predicated region
  $region18: #{decoder_forward_pallas.8} parent=0 // pred_check
    _
  $region19: #{decoder_forward_pallas.8} parent=0 // pred_check_branch
    %1668 = sbr.rel (0) target = $region21
  $region20: #{decoder_forward_pallas.8} parent=0 // pred_region
    _
  $region21: #{decoder_forward_pallas.8} parent=0 // pred_fallthru
    _

</llo_original>
